<compile_context>
chip_gen: v6e
topology: v6e:2x2x1
jax: 0.10.0
libtpu: 0.0.40
codegen_flags: <defaults>
</compile_context>

<pallas_src>
import jax
import jax.numpy as jnp
from jax.experimental import pallas as pl
from jax.experimental.pallas import tpu as pltpu

# ------------------------- model dimensions -------------------------
B = 2            # batch
S = 8            # sequence length
BS = B * S
VOCAB = 64       # text_encoder.vocab_size
EMBED_DIM = 32   # embed_dim
TASK_DIM = 16    # task_dim
NUM_TASKS = 3
D = EMBED_DIM + TASK_DIM          # transformer model dim = 48
FFN = 4 * D                       # ffn_dim = 192
H = 4                             # attention heads
DH = D // H                       # head dim = 12

_F32 = jnp.float32
_BF16 = jnp.bfloat16


# ------------------------- fused kernel -----------------------------
def _add_layernorm(x, y, g, b):
    z = x + y
    mean = jnp.mean(z, axis=-1, keepdims=True)
    zc = z - mean
    var = jnp.mean(zc * zc, axis=-1, keepdims=True)
    return zc * jax.lax.rsqrt(var + 1e-5) * g + b


def _attention(q, k, v, key_bias):
    """q/k/v: [B*S, D] f32; key_bias: [B, S] f32 (0 valid / -1e9 padded)."""
    scale = 1.0 / (DH ** 0.5)
    heads = []
    for h in range(H):
        sl = slice(h * DH, (h + 1) * DH)
        qh = q[:, sl].reshape(B, S, DH)
        kh = k[:, sl].reshape(B, S, DH)
        vh = v[:, sl].reshape(B, S, DH)
        s = jnp.einsum("bqd,bkd->bqk", qh.astype(_BF16), kh.astype(_BF16),
                       preferred_element_type=_F32) * scale
        s = s + key_bias[:, None, :]
        m = jnp.max(s, axis=-1, keepdims=True)
        p = jnp.exp(s - m)
        denom = jnp.sum(p, axis=-1, keepdims=True)
        p = p * pl.reciprocal(denom, approx=True)
        oh = jnp.einsum("bqk,bkd->bqd", p.astype(_BF16), vh.astype(_BF16),
                        preferred_element_type=_F32)
        heads.append(oh.reshape(BS, DH))
    return jnp.concatenate(heads, axis=-1)                      # [B*S, D]


def _tf_layer(x, key_bias, refs):
    """Post-LN transformer encoder layer, fully in-VMEM/vregs."""
    (wqkv, bqkv, wo, bo, ln1g, ln1b, w1, b1, w2, b2, ln2g, ln2b) = refs
    qkv = jnp.dot(x.astype(_BF16), wqkv[...],
                  preferred_element_type=_F32) + bqkv[...]      # [B*S, 3D]
    q = qkv[:, 0 * D:1 * D]
    k = qkv[:, 1 * D:2 * D]
    v = qkv[:, 2 * D:3 * D]
    attn = _attention(q, k, v, key_bias)
    attn = jnp.dot(attn.astype(_BF16), wo[...],
                   preferred_element_type=_F32) + bo[...]
    x = _add_layernorm(x, attn, ln1g[...], ln1b[...])
    h = jnp.dot(x.astype(_BF16), w1[...],
                preferred_element_type=_F32) + b1[...]
    h = jnp.maximum(h, 0.0)
    ffn = jnp.dot(h.astype(_BF16), w2[...],
                  preferred_element_type=_F32) + b2[...]
    x = _add_layernorm(x, ffn, ln2g[...], ln2b[...])
    return x


def _semcom_kernel(*refs):
    # scalar prefetch (SMEM): task_id (drives the index_maps, unused in body)
    _tid_ref = refs[0]
    ids_ref, mask_ref, noise_ref = refs[1:4]
    tok_emb_ref, enc_w_ref, enc_b_ref, task_emb_ref = refs[4:8]
    enc_refs = refs[8:20]
    dec_refs = refs[20:32]
    head_w_ref, head_b_ref = refs[32:34]
    enc_out_ref, dec_out_ref, logits_ref = refs[34:37]

    # ---- text encoder: one-hot embedding lookup on the MXU + projection ----
    ids = ids_ref[...]                                              # [B*S, 1] i32
    iota = jax.lax.broadcasted_iota(jnp.int32, (BS, VOCAB), 1)
    onehot = jnp.where(iota == ids, 1.0, 0.0).astype(_BF16)         # [B*S, V]
    emb = jnp.dot(onehot, tok_emb_ref[...],
                  preferred_element_type=_F32)                      # [B*S, E]
    text_feat = jnp.dot(emb.astype(_BF16), enc_w_ref[...],
                        preferred_element_type=_F32) + enc_b_ref[...]

    # ---- task prompt: row selected by index_map, broadcast over sequence ----
    task_feat = jnp.broadcast_to(task_emb_ref[0], (BS, TASK_DIM))   # [B*S, T]
    x = jnp.concatenate([text_feat, task_feat], axis=-1)            # [B*S, D]

    # key-padding bias from attention mask
    key_bias = (mask_ref[...] - 1.0) * 1e9                          # [B, S]

    # ---- encoder transformer ----
    enc = _tf_layer(x, key_bias, enc_refs)
    enc_out_ref[...] = enc

    # ---- AWGN channel (fading='none'), per-sample signal power ----
    row_pow = jnp.sum(enc * enc, axis=-1, keepdims=True)            # [B*S, 1]
    samp_pow = jnp.sum(row_pow.reshape(B, S, 1), axis=1,
                       keepdims=True) / float(S * D)                # [B, 1, 1]
    sigma = jnp.sqrt(samp_pow)
    rx = enc.reshape(B, S, D) + sigma * noise_ref[...].reshape(B, S, D)
    rx = rx.reshape(BS, D)

    # ---- decoder transformer ----
    dec = _tf_layer(rx, key_bias, dec_refs)
    dec_out_ref[...] = dec

    # ---- per-task output head (weights selected via scalar prefetch) ----
    logits = jnp.dot(dec.astype(_BF16), head_w_ref[0],
                     preferred_element_type=_F32) + head_b_ref[0]
    logits_ref[...] = logits


# ------------------------- parameter init ---------------------------
def init_params(key):
    ks = iter(jax.random.split(key, 32))

    def w(shape, scale=0.02, dtype=_BF16):
        return (scale * jax.random.normal(next(ks), shape, _F32)).astype(dtype)

    def zrow(n):
        return jnp.zeros((1, n), _F32)

    def tf_layer():
        return dict(
            wqkv=w((D, 3 * D)), bqkv=zrow(3 * D),
            wo=w((D, D)), bo=zrow(D),
            ln1_g=jnp.ones((1, D), _F32), ln1_b=zrow(D),
            w1=w((D, FFN)), b1=zrow(FFN),
            w2=w((FFN, D)), b2=zrow(D),
            ln2_g=jnp.ones((1, D), _F32), ln2_b=zrow(D),
        )

    return dict(
        tok_emb=w((VOCAB, EMBED_DIM), 0.1),                     # BERTTextEncoder (synthetic)
        enc_w=w((EMBED_DIM, EMBED_DIM)), enc_b=zrow(EMBED_DIM),
        task_emb=w((NUM_TASKS, 1, TASK_DIM), 0.1, _F32),        # TaskPrompt
        enc_tf=tf_layer(),                                      # encoder_transformer
        dec_tf=tf_layer(),                                      # decoder_transformer
        head_w=w((NUM_TASKS, D, VOCAB)),                        # MultiTaskHead
        head_b=jnp.zeros((NUM_TASKS, 1, VOCAB), _F32),
    )


def _layer_args(p):
    return (p["wqkv"], p["bqkv"], p["wo"], p["bo"], p["ln1_g"], p["ln1_b"],
            p["w1"], p["b1"], p["w2"], p["b2"], p["ln2_g"], p["ln2_b"])


# ------------------------- forward wrapper --------------------------
def semcom_forward(params, input_ids, attn_mask, task_id, snr_db, noise_key):
    """Mirrors Transformer_SemCom.forward; task_id / snr are runtime values."""
    Bb, Ss = input_ids.shape
    assert (Bb, Ss) == (B, S)
    input_lengths = attn_mask.sum(axis=1)

    snr_lin = 10.0 ** (jnp.asarray(snr_db, _F32) / 10.0)
    # Standard normal noise, pre-divided by sqrt(SNR); per-sample signal power
    # scaling happens inside the kernel.
    noise = jax.random.normal(noise_key, (BS, D), _F32) / jnp.sqrt(snr_lin)

    tid = jnp.asarray(task_id, jnp.int32).reshape(1)
    ids2d = input_ids.reshape(BS, 1).astype(jnp.int32)
    maskf = attn_mask.astype(_F32)

    def full(shape):
        return pl.BlockSpec(shape, lambda i, t: (0,) * len(shape))

    def layer_specs():
        return [full((D, 3 * D)), full((1, 3 * D)), full((D, D)), full((1, D)),
                full((1, D)), full((1, D)),
                full((D, FFN)), full((1, FFN)), full((FFN, D)), full((1, D)),
                full((1, D)), full((1, D))]

    in_specs = (
        [full((BS, 1)), full((B, S)), full((BS, D)),
         full((VOCAB, EMBED_DIM)), full((EMBED_DIM, EMBED_DIM)), full((1, EMBED_DIM)),
         pl.BlockSpec((1, 1, TASK_DIM), lambda i, t: (t[0], 0, 0))]
        + layer_specs() + layer_specs()
        + [pl.BlockSpec((1, D, VOCAB), lambda i, t: (t[0], 0, 0)),
           pl.BlockSpec((1, 1, VOCAB), lambda i, t: (t[0], 0, 0))]
    )
    out_specs = [full((BS, D)), full((BS, D)), full((BS, VOCAB))]

    enc_flat, dec_flat, logits_flat = pl.pallas_call(
        _semcom_kernel,
        out_shape=(jax.ShapeDtypeStruct((BS, D), _F32),
                   jax.ShapeDtypeStruct((BS, D), _F32),
                   jax.ShapeDtypeStruct((BS, VOCAB), _F32)),
        grid_spec=pltpu.PrefetchScalarGridSpec(
            num_scalar_prefetch=1,
            grid=(1,),
            in_specs=in_specs,
            out_specs=out_specs),
        compiler_params=pltpu.CompilerParams(
            dimension_semantics=("arbitrary",)),
    )(tid, ids2d, maskf, noise,
      params["tok_emb"], params["enc_w"], params["enc_b"], params["task_emb"],
      *_layer_args(params["enc_tf"]), *_layer_args(params["dec_tf"]),
      params["head_w"], params["head_b"])

    logits = logits_flat.reshape(B, S, VOCAB)
    semantic_encoded = enc_flat.reshape(B, S, D)
    semantic_decoded = dec_flat.reshape(B, S, D)
    return logits, input_ids, input_lengths, semantic_encoded, semantic_decoded


# ------------------------------ main --------------------------------
if __name__ == "__main__":
    key = jax.random.PRNGKey(0)
    k_ids, k_noise = jax.random.split(key)

    params = init_params(jax.random.PRNGKey(42))

    input_ids = jax.random.randint(k_ids, (B, S), 0, VOCAB, dtype=jnp.int32)
    attn_mask = jnp.ones((B, S), dtype=jnp.int32)
    task_id = 1          # runtime value (scalar-prefetch selected in-kernel)
    snr_db = 15.0

    fwd = jax.jit(semcom_forward)
    out = fwd(params, input_ids, attn_mask, task_id, snr_db, k_noise)
    out = jax.block_until_ready(out)

    logits, ids, lengths, enc, dec = out
    assert logits.shape == (B, S, VOCAB)
    assert enc.shape == (B, S, D) and dec.shape == (B, S, D)
    assert lengths.shape == (B,)
    assert jnp.all(jnp.isfinite(logits))
    assert jnp.all(jnp.isfinite(enc)) and jnp.all(jnp.isfinite(dec))
    print("KERNEL_OK")
</pallas_src>

<mosaic_0001>
module attributes {stable_mosaic.version = 11 : i64} {
  func.func @_semcom_kernel(%arg0: i32, %arg1: memref<1xi32, #tpu.memory_space<smem>>, %arg2: memref<16x1xi32, #tpu.memory_space<vmem>>, %arg3: memref<2x8xf32, #tpu.memory_space<vmem>>, %arg4: memref<16x48xf32, #tpu.memory_space<vmem>>, %arg5: memref<64x32xbf16, #tpu.memory_space<vmem>>, %arg6: memref<32x32xbf16, #tpu.memory_space<vmem>>, %arg7: memref<1x32xf32, #tpu.memory_space<vmem>>, %arg8: memref<1x1x16xf32, #tpu.memory_space<vmem>>, %arg9: memref<48x144xbf16, #tpu.memory_space<vmem>>, %arg10: memref<1x144xf32, #tpu.memory_space<vmem>>, %arg11: memref<48x48xbf16, #tpu.memory_space<vmem>>, %arg12: memref<1x48xf32, #tpu.memory_space<vmem>>, %arg13: memref<1x48xf32, #tpu.memory_space<vmem>>, %arg14: memref<1x48xf32, #tpu.memory_space<vmem>>, %arg15: memref<48x192xbf16, #tpu.memory_space<vmem>>, %arg16: memref<1x192xf32, #tpu.memory_space<vmem>>, %arg17: memref<192x48xbf16, #tpu.memory_space<vmem>>, %arg18: memref<1x48xf32, #tpu.memory_space<vmem>>, %arg19: memref<1x48xf32, #tpu.memory_space<vmem>>, %arg20: memref<1x48xf32, #tpu.memory_space<vmem>>, %arg21: memref<48x144xbf16, #tpu.memory_space<vmem>>, %arg22: memref<1x144xf32, #tpu.memory_space<vmem>>, %arg23: memref<48x48xbf16, #tpu.memory_space<vmem>>, %arg24: memref<1x48xf32, #tpu.memory_space<vmem>>, %arg25: memref<1x48xf32, #tpu.memory_space<vmem>>, %arg26: memref<1x48xf32, #tpu.memory_space<vmem>>, %arg27: memref<48x192xbf16, #tpu.memory_space<vmem>>, %arg28: memref<1x192xf32, #tpu.memory_space<vmem>>, %arg29: memref<192x48xbf16, #tpu.memory_space<vmem>>, %arg30: memref<1x48xf32, #tpu.memory_space<vmem>>, %arg31: memref<1x48xf32, #tpu.memory_space<vmem>>, %arg32: memref<1x48xf32, #tpu.memory_space<vmem>>, %arg33: memref<1x48x64xbf16, #tpu.memory_space<vmem>>, %arg34: memref<1x1x64xf32, #tpu.memory_space<vmem>>, %arg35: memref<16x48xf32, #tpu.memory_space<vmem>>, %arg36: memref<16x48xf32, #tpu.memory_space<vmem>>, %arg37: memref<16x64xf32, #tpu.memory_space<vmem>>) attributes {dimension_semantics = [#tpu.dimension_semantics<arbitrary>], iteration_bounds = array<i64: 1>, scalar_prefetch = 1 : i64, scratch_operands = 0 : i64, tpu.core_type = #tpu.core_type<tc>, window_params = [{pipeline_mode = #tpu.pipeline_mode<synchronous>, transform_indices = @transform_0, window_bounds = array<i64: 16, 1>}, {pipeline_mode = #tpu.pipeline_mode<synchronous>, transform_indices = @transform_1, window_bounds = array<i64: 2, 8>}, {pipeline_mode = #tpu.pipeline_mode<synchronous>, transform_indices = @transform_2, window_bounds = array<i64: 16, 48>}, {pipeline_mode = #tpu.pipeline_mode<synchronous>, transform_indices = @transform_3, window_bounds = array<i64: 64, 32>}, {pipeline_mode = #tpu.pipeline_mode<synchronous>, transform_indices = @transform_4, window_bounds = array<i64: 32, 32>}, {pipeline_mode = #tpu.pipeline_mode<synchronous>, transform_indices = @transform_5, window_bounds = array<i64: 1, 32>}, {transform_indices = @transform_6, window_bounds = array<i64: 1, 1, 16>}, {pipeline_mode = #tpu.pipeline_mode<synchronous>, transform_indices = @transform_7, window_bounds = array<i64: 48, 144>}, {pipeline_mode = #tpu.pipeline_mode<synchronous>, transform_indices = @transform_8, window_bounds = array<i64: 1, 144>}, {pipeline_mode = #tpu.pipeline_mode<synchronous>, transform_indices = @transform_9, window_bounds = array<i64: 48, 48>}, {pipeline_mode = #tpu.pipeline_mode<synchronous>, transform_indices = @transform_10, window_bounds = array<i64: 1, 48>}, {pipeline_mode = #tpu.pipeline_mode<synchronous>, transform_indices = @transform_11, window_bounds = array<i64: 1, 48>}, {pipeline_mode = #tpu.pipeline_mode<synchronous>, transform_indices = @transform_12, window_bounds = array<i64: 1, 48>}, {pipeline_mode = #tpu.pipeline_mode<synchronous>, transform_indices = @transform_13, window_bounds = array<i64: 48, 192>}, {pipeline_mode = #tpu.pipeline_mode<synchronous>, transform_indices = @transform_14, window_bounds = array<i64: 1, 192>}, {pipeline_mode = #tpu.pipeline_mode<synchronous>, transform_indices = @transform_15, window_bounds = array<i64: 192, 48>}, {pipeline_mode = #tpu.pipeline_mode<synchronous>, transform_indices = @transform_16, window_bounds = array<i64: 1, 48>}, {pipeline_mode = #tpu.pipeline_mode<synchronous>, transform_indices = @transform_17, window_bounds = array<i64: 1, 48>}, {pipeline_mode = #tpu.pipeline_mode<synchronous>, transform_indices = @transform_18, window_bounds = array<i64: 1, 48>}, {pipeline_mode = #tpu.pipeline_mode<synchronous>, transform_indices = @transform_19, window_bounds = array<i64: 48, 144>}, {pipeline_mode = #tpu.pipeline_mode<synchronous>, transform_indices = @transform_20, window_bounds = array<i64: 1, 144>}, {pipeline_mode = #tpu.pipeline_mode<synchronous>, transform_indices = @transform_21, window_bounds = array<i64: 48, 48>}, {pipeline_mode = #tpu.pipeline_mode<synchronous>, transform_indices = @transform_22, window_bounds = array<i64: 1, 48>}, {pipeline_mode = #tpu.pipeline_mode<synchronous>, transform_indices = @transform_23, window_bounds = array<i64: 1, 48>}, {pipeline_mode = #tpu.pipeline_mode<synchronous>, transform_indices = @transform_24, window_bounds = array<i64: 1, 48>}, {pipeline_mode = #tpu.pipeline_mode<synchronous>, transform_indices = @transform_25, window_bounds = array<i64: 48, 192>}, {pipeline_mode = #tpu.pipeline_mode<synchronous>, transform_indices = @transform_26, window_bounds = array<i64: 1, 192>}, {pipeline_mode = #tpu.pipeline_mode<synchronous>, transform_indices = @transform_27, window_bounds = array<i64: 192, 48>}, {pipeline_mode = #tpu.pipeline_mode<synchronous>, transform_indices = @transform_28, window_bounds = array<i64: 1, 48>}, {pipeline_mode = #tpu.pipeline_mode<synchronous>, transform_indices = @transform_29, window_bounds = array<i64: 1, 48>}, {pipeline_mode = #tpu.pipeline_mode<synchronous>, transform_indices = @transform_30, window_bounds = array<i64: 1, 48>}, {transform_indices = @transform_31, window_bounds = array<i64: 1, 48, 64>}, {transform_indices = @transform_32, window_bounds = array<i64: 1, 1, 64>}, {pipeline_mode = #tpu.pipeline_mode<synchronous>, transform_indices = @transform_33, window_bounds = array<i64: 16, 48>}, {pipeline_mode = #tpu.pipeline_mode<synchronous>, transform_indices = @transform_34, window_bounds = array<i64: 16, 48>}, {pipeline_mode = #tpu.pipeline_mode<synchronous>, transform_indices = @transform_35, window_bounds = array<i64: 16, 64>}]} {
    %c0 = arith.constant 0 : index
    %c0_0 = arith.constant 0 : index
    %0 = vector.load %arg2[%c0, %c0_0] : memref<16x1xi32, #tpu.memory_space<vmem>>, vector<16x1xi32>
    %1 = tpu.iota {dimensions = array<i32: 1>} : vector<16x64xi32>
    %2 = vector.broadcast %0 : vector<16x1xi32> to vector<16x64xi32>
    %3 = arith.cmpi eq, %1, %2 : vector<16x64xi32>
    %cst = arith.constant 1.000000e+00 : f32
    %cst_1 = arith.constant 0.000000e+00 : f32
    %4 = vector.broadcast %cst : f32 to vector<16x64xf32>
    %5 = vector.broadcast %cst_1 : f32 to vector<16x64xf32>
    %6 = arith.select %3, %4, %5 : vector<16x64xi1>, vector<16x64xf32>
    %7 = arith.truncf %6 : vector<16x64xf32> to vector<16x64xbf16>
    %c0_2 = arith.constant 0 : index
    %c0_3 = arith.constant 0 : index
    %8 = vector.load %arg5[%c0_2, %c0_3] : memref<64x32xbf16, #tpu.memory_space<vmem>>, vector<64x32xbf16>
    %cst_4 = arith.constant dense<0.000000e+00> : vector<16x32xf32>
    %9 = tpu.matmul %7, %8, %cst_4 {dimension_numbers = #tpu.dot_dimension_numbers<[1], [0], [0], [1], [0, 0, 1, 1], [], []>} : vector<16x64xbf16>, vector<64x32xbf16>, vector<16x32xf32> -> vector<16x32xf32>
    %10 = arith.truncf %9 : vector<16x32xf32> to vector<16x32xbf16>
    %c0_5 = arith.constant 0 : index
    %c0_6 = arith.constant 0 : index
    %11 = vector.load %arg6[%c0_5, %c0_6] : memref<32x32xbf16, #tpu.memory_space<vmem>>, vector<32x32xbf16>
    %cst_7 = arith.constant dense<0.000000e+00> : vector<16x32xf32>
    %12 = tpu.matmul %10, %11, %cst_7 {dimension_numbers = #tpu.dot_dimension_numbers<[1], [0], [0], [1], [0, 0, 1, 1], [], []>} : vector<16x32xbf16>, vector<32x32xbf16>, vector<16x32xf32> -> vector<16x32xf32>
    %c0_8 = arith.constant 0 : index
    %c0_9 = arith.constant 0 : index
    %13 = vector.load %arg7[%c0_8, %c0_9] : memref<1x32xf32, #tpu.memory_space<vmem>>, vector<1x32xf32>
    %14 = vector.broadcast %13 : vector<1x32xf32> to vector<16x32xf32>
    %15 = arith.addf %12, %14 : vector<16x32xf32>
    %c0_10 = arith.constant 0 : index
    %c0_11 = arith.constant 0 : index
    %c0_12 = arith.constant 0 : index
    %16 = vector.load %arg8[%c0_10, %c0_11, %c0_12] : memref<1x1x16xf32, #tpu.memory_space<vmem>>, vector<1x1x16xf32>
    %17 = vector.shape_cast %16 : vector<1x1x16xf32> to vector<1x16xf32>
    %18 = vector.shape_cast %17 : vector<1x16xf32> to vector<1x16xf32>
    %19 = vector.broadcast %18 : vector<1x16xf32> to vector<16x16xf32>
    %20 = tpu.concatenate %15, %19 in 1 : vector<16x32xf32>, vector<16x16xf32> -> vector<16x48xf32>
    %c0_13 = arith.constant 0 : index
    %c0_14 = arith.constant 0 : index
    %21 = vector.load %arg3[%c0_13, %c0_14] : memref<2x8xf32, #tpu.memory_space<vmem>>, vector<2x8xf32>
    %cst_15 = arith.constant 1.000000e+00 : f32
    %22 = vector.broadcast %cst_15 : f32 to vector<2x8xf32>
    %23 = arith.subf %21, %22 : vector<2x8xf32>
    %cst_16 = arith.constant 1.000000e+09 : f32
    %24 = vector.broadcast %cst_16 : f32 to vector<2x8xf32>
    %25 = arith.mulf %23, %24 : vector<2x8xf32>
    %26 = arith.truncf %20 : vector<16x48xf32> to vector<16x48xbf16>
    %c0_17 = arith.constant 0 : index
    %c0_18 = arith.constant 0 : index
    %27 = vector.load %arg9[%c0_17, %c0_18] : memref<48x144xbf16, #tpu.memory_space<vmem>>, vector<48x144xbf16>
    %cst_19 = arith.constant dense<0.000000e+00> : vector<16x144xf32>
    %28 = tpu.matmul %26, %27, %cst_19 {dimension_numbers = #tpu.dot_dimension_numbers<[1], [0], [0], [1], [0, 0, 1, 1], [], []>} : vector<16x48xbf16>, vector<48x144xbf16>, vector<16x144xf32> -> vector<16x144xf32>
    %c0_20 = arith.constant 0 : index
    %c0_21 = arith.constant 0 : index
    %29 = vector.load %arg10[%c0_20, %c0_21] : memref<1x144xf32, #tpu.memory_space<vmem>>, vector<1x144xf32>
    %30 = vector.broadcast %29 : vector<1x144xf32> to vector<16x144xf32>
    %31 = arith.addf %28, %30 : vector<16x144xf32>
    %32 = vector.extract_strided_slice %31 {offsets = [0, 0], sizes = [16, 48], strides = [1, 1]} : vector<16x144xf32> to vector<16x48xf32>
    %33 = vector.extract_strided_slice %31 {offsets = [0, 48], sizes = [16, 48], strides = [1, 1]} : vector<16x144xf32> to vector<16x48xf32>
    %34 = vector.extract_strided_slice %31 {offsets = [0, 96], sizes = [16, 48], strides = [1, 1]} : vector<16x144xf32> to vector<16x48xf32>
    %35 = vector.extract_strided_slice %32 {offsets = [0, 0], sizes = [16, 12], strides = [1, 1]} : vector<16x48xf32> to vector<16x12xf32>
    %36 = vector.shape_cast %35 : vector<16x12xf32> to vector<2x8x12xf32>
    %37 = vector.extract_strided_slice %33 {offsets = [0, 0], sizes = [16, 12], strides = [1, 1]} : vector<16x48xf32> to vector<16x12xf32>
    %38 = vector.shape_cast %37 : vector<16x12xf32> to vector<2x8x12xf32>
    %39 = vector.extract_strided_slice %34 {offsets = [0, 0], sizes = [16, 12], strides = [1, 1]} : vector<16x48xf32> to vector<16x12xf32>
    %40 = vector.shape_cast %39 : vector<16x12xf32> to vector<2x8x12xf32>
    %41 = arith.truncf %36 : vector<2x8x12xf32> to vector<2x8x12xbf16>
    %42 = arith.truncf %38 : vector<2x8x12xf32> to vector<2x8x12xbf16>
    "tpu.trace_start"() <{level = 10 : i32, message = "bqd,bkd->bqk"}> : () -> ()
    %cst_22 = arith.constant dense<0.000000e+00> : vector<2x8x8xf32>
    %43 = tpu.matmul %41, %42, %cst_22 {dimension_numbers = #tpu.dot_dimension_numbers<[2], [2], [1], [1], [0, 0, 0, 1, 1, 1], [0], [0]>} : vector<2x8x12xbf16>, vector<2x8x12xbf16>, vector<2x8x8xf32> -> vector<2x8x8xf32>
    "tpu.trace_stop"() : () -> ()
    %cst_23 = arith.constant 0.288675129 : f32
    %44 = vector.broadcast %cst_23 : f32 to vector<2x8x8xf32>
    %45 = arith.mulf %43, %44 : vector<2x8x8xf32>
    %46 = vector.shape_cast %25 : vector<2x8xf32> to vector<2x1x8xf32>
    %47 = vector.broadcast %46 : vector<2x1x8xf32> to vector<2x8x8xf32>
    %48 = arith.addf %45, %47 : vector<2x8x8xf32>
    %cst_24 = arith.constant dense<0xFF800000> : vector<2x8xf32>
    %49 = vector.multi_reduction <maximumf>, %48, %cst_24 [2] : vector<2x8x8xf32> to vector<2x8xf32>
    %50 = vector.shape_cast %49 : vector<2x8xf32> to vector<2x8x1xf32>
    %51 = vector.broadcast %50 : vector<2x8x1xf32> to vector<2x8x8xf32>
    %52 = arith.subf %48, %51 : vector<2x8x8xf32>
    %53 = math.exp %52 : vector<2x8x8xf32>
    %cst_25 = arith.constant dense<0.000000e+00> : vector<2x8xf32>
    %54 = vector.multi_reduction <add>, %53, %cst_25 [2] : vector<2x8x8xf32> to vector<2x8xf32>
    %55 = vector.shape_cast %54 : vector<2x8xf32> to vector<2x8x1xf32>
    %56 = tpu.reciprocal %55 {approx = true} : vector<2x8x1xf32> -> vector<2x8x1xf32>
    %57 = vector.broadcast %56 : vector<2x8x1xf32> to vector<2x8x8xf32>
    %58 = arith.mulf %53, %57 : vector<2x8x8xf32>
    %59 = arith.truncf %58 : vector<2x8x8xf32> to vector<2x8x8xbf16>
    %60 = arith.truncf %40 : vector<2x8x12xf32> to vector<2x8x12xbf16>
    "tpu.trace_start"() <{level = 10 : i32, message = "bqk,bkd->bqd"}> : () -> ()
    %cst_26 = arith.constant dense<0.000000e+00> : vector<2x8x12xf32>
    %61 = tpu.matmul %59, %60, %cst_26 {dimension_numbers = #tpu.dot_dimension_numbers<[2], [1], [1], [2], [0, 0, 0, 1, 1, 2], [0], [0]>} : vector<2x8x8xbf16>, vector<2x8x12xbf16>, vector<2x8x12xf32> -> vector<2x8x12xf32>
    "tpu.trace_stop"() : () -> ()
    %62 = vector.shape_cast %61 : vector<2x8x12xf32> to vector<16x12xf32>
    %63 = vector.extract_strided_slice %32 {offsets = [0, 12], sizes = [16, 12], strides = [1, 1]} : vector<16x48xf32> to vector<16x12xf32>
    %64 = vector.shape_cast %63 : vector<16x12xf32> to vector<2x8x12xf32>
    %65 = vector.extract_strided_slice %33 {offsets = [0, 12], sizes = [16, 12], strides = [1, 1]} : vector<16x48xf32> to vector<16x12xf32>
    %66 = vector.shape_cast %65 : vector<16x12xf32> to vector<2x8x12xf32>
    %67 = vector.extract_strided_slice %34 {offsets = [0, 12], sizes = [16, 12], strides = [1, 1]} : vector<16x48xf32> to vector<16x12xf32>
    %68 = vector.shape_cast %67 : vector<16x12xf32> to vector<2x8x12xf32>
    %69 = arith.truncf %64 : vector<2x8x12xf32> to vector<2x8x12xbf16>
    %70 = arith.truncf %66 : vector<2x8x12xf32> to vector<2x8x12xbf16>
    "tpu.trace_start"() <{level = 10 : i32, message = "bqd,bkd->bqk"}> : () -> ()
    %cst_27 = arith.constant dense<0.000000e+00> : vector<2x8x8xf32>
    %71 = tpu.matmul %69, %70, %cst_27 {dimension_numbers = #tpu.dot_dimension_numbers<[2], [2], [1], [1], [0, 0, 0, 1, 1, 1], [0], [0]>} : vector<2x8x12xbf16>, vector<2x8x12xbf16>, vector<2x8x8xf32> -> vector<2x8x8xf32>
    "tpu.trace_stop"() : () -> ()
    %cst_28 = arith.constant 0.288675129 : f32
    %72 = vector.broadcast %cst_28 : f32 to vector<2x8x8xf32>
    %73 = arith.mulf %71, %72 : vector<2x8x8xf32>
    %74 = vector.shape_cast %25 : vector<2x8xf32> to vector<2x1x8xf32>
    %75 = vector.broadcast %74 : vector<2x1x8xf32> to vector<2x8x8xf32>
    %76 = arith.addf %73, %75 : vector<2x8x8xf32>
    %cst_29 = arith.constant dense<0xFF800000> : vector<2x8xf32>
    %77 = vector.multi_reduction <maximumf>, %76, %cst_29 [2] : vector<2x8x8xf32> to vector<2x8xf32>
    %78 = vector.shape_cast %77 : vector<2x8xf32> to vector<2x8x1xf32>
    %79 = vector.broadcast %78 : vector<2x8x1xf32> to vector<2x8x8xf32>
    %80 = arith.subf %76, %79 : vector<2x8x8xf32>
    %81 = math.exp %80 : vector<2x8x8xf32>
    %cst_30 = arith.constant dense<0.000000e+00> : vector<2x8xf32>
    %82 = vector.multi_reduction <add>, %81, %cst_30 [2] : vector<2x8x8xf32> to vector<2x8xf32>
    %83 = vector.shape_cast %82 : vector<2x8xf32> to vector<2x8x1xf32>
    %84 = tpu.reciprocal %83 {approx = true} : vector<2x8x1xf32> -> vector<2x8x1xf32>
    %85 = vector.broadcast %84 : vector<2x8x1xf32> to vector<2x8x8xf32>
    %86 = arith.mulf %81, %85 : vector<2x8x8xf32>
    %87 = arith.truncf %86 : vector<2x8x8xf32> to vector<2x8x8xbf16>
    %88 = arith.truncf %68 : vector<2x8x12xf32> to vector<2x8x12xbf16>
    "tpu.trace_start"() <{level = 10 : i32, message = "bqk,bkd->bqd"}> : () -> ()
    %cst_31 = arith.constant dense<0.000000e+00> : vector<2x8x12xf32>
    %89 = tpu.matmul %87, %88, %cst_31 {dimension_numbers = #tpu.dot_dimension_numbers<[2], [1], [1], [2], [0, 0, 0, 1, 1, 2], [0], [0]>} : vector<2x8x8xbf16>, vector<2x8x12xbf16>, vector<2x8x12xf32> -> vector<2x8x12xf32>
    "tpu.trace_stop"() : () -> ()
    %90 = vector.shape_cast %89 : vector<2x8x12xf32> to vector<16x12xf32>
    %91 = vector.extract_strided_slice %32 {offsets = [0, 24], sizes = [16, 12], strides = [1, 1]} : vector<16x48xf32> to vector<16x12xf32>
    %92 = vector.shape_cast %91 : vector<16x12xf32> to vector<2x8x12xf32>
    %93 = vector.extract_strided_slice %33 {offsets = [0, 24], sizes = [16, 12], strides = [1, 1]} : vector<16x48xf32> to vector<16x12xf32>
    %94 = vector.shape_cast %93 : vector<16x12xf32> to vector<2x8x12xf32>
    %95 = vector.extract_strided_slice %34 {offsets = [0, 24], sizes = [16, 12], strides = [1, 1]} : vector<16x48xf32> to vector<16x12xf32>
    %96 = vector.shape_cast %95 : vector<16x12xf32> to vector<2x8x12xf32>
    %97 = arith.truncf %92 : vector<2x8x12xf32> to vector<2x8x12xbf16>
    %98 = arith.truncf %94 : vector<2x8x12xf32> to vector<2x8x12xbf16>
    "tpu.trace_start"() <{level = 10 : i32, message = "bqd,bkd->bqk"}> : () -> ()
    %cst_32 = arith.constant dense<0.000000e+00> : vector<2x8x8xf32>
    %99 = tpu.matmul %97, %98, %cst_32 {dimension_numbers = #tpu.dot_dimension_numbers<[2], [2], [1], [1], [0, 0, 0, 1, 1, 1], [0], [0]>} : vector<2x8x12xbf16>, vector<2x8x12xbf16>, vector<2x8x8xf32> -> vector<2x8x8xf32>
    "tpu.trace_stop"() : () -> ()
    %cst_33 = arith.constant 0.288675129 : f32
    %100 = vector.broadcast %cst_33 : f32 to vector<2x8x8xf32>
    %101 = arith.mulf %99, %100 : vector<2x8x8xf32>
    %102 = vector.shape_cast %25 : vector<2x8xf32> to vector<2x1x8xf32>
    %103 = vector.broadcast %102 : vector<2x1x8xf32> to vector<2x8x8xf32>
    %104 = arith.addf %101, %103 : vector<2x8x8xf32>
    %cst_34 = arith.constant dense<0xFF800000> : vector<2x8xf32>
    %105 = vector.multi_reduction <maximumf>, %104, %cst_34 [2] : vector<2x8x8xf32> to vector<2x8xf32>
    %106 = vector.shape_cast %105 : vector<2x8xf32> to vector<2x8x1xf32>
    %107 = vector.broadcast %106 : vector<2x8x1xf32> to vector<2x8x8xf32>
    %108 = arith.subf %104, %107 : vector<2x8x8xf32>
    %109 = math.exp %108 : vector<2x8x8xf32>
    %cst_35 = arith.constant dense<0.000000e+00> : vector<2x8xf32>
    %110 = vector.multi_reduction <add>, %109, %cst_35 [2] : vector<2x8x8xf32> to vector<2x8xf32>
    %111 = vector.shape_cast %110 : vector<2x8xf32> to vector<2x8x1xf32>
    %112 = tpu.reciprocal %111 {approx = true} : vector<2x8x1xf32> -> vector<2x8x1xf32>
    %113 = vector.broadcast %112 : vector<2x8x1xf32> to vector<2x8x8xf32>
    %114 = arith.mulf %109, %113 : vector<2x8x8xf32>
    %115 = arith.truncf %114 : vector<2x8x8xf32> to vector<2x8x8xbf16>
    %116 = arith.truncf %96 : vector<2x8x12xf32> to vector<2x8x12xbf16>
    "tpu.trace_start"() <{level = 10 : i32, message = "bqk,bkd->bqd"}> : () -> ()
    %cst_36 = arith.constant dense<0.000000e+00> : vector<2x8x12xf32>
    %117 = tpu.matmul %115, %116, %cst_36 {dimension_numbers = #tpu.dot_dimension_numbers<[2], [1], [1], [2], [0, 0, 0, 1, 1, 2], [0], [0]>} : vector<2x8x8xbf16>, vector<2x8x12xbf16>, vector<2x8x12xf32> -> vector<2x8x12xf32>
    "tpu.trace_stop"() : () -> ()
    %118 = vector.shape_cast %117 : vector<2x8x12xf32> to vector<16x12xf32>
    %119 = vector.extract_strided_slice %32 {offsets = [0, 36], sizes = [16, 12], strides = [1, 1]} : vector<16x48xf32> to vector<16x12xf32>
    %120 = vector.shape_cast %119 : vector<16x12xf32> to vector<2x8x12xf32>
    %121 = vector.extract_strided_slice %33 {offsets = [0, 36], sizes = [16, 12], strides = [1, 1]} : vector<16x48xf32> to vector<16x12xf32>
    %122 = vector.shape_cast %121 : vector<16x12xf32> to vector<2x8x12xf32>
    %123 = vector.extract_strided_slice %34 {offsets = [0, 36], sizes = [16, 12], strides = [1, 1]} : vector<16x48xf32> to vector<16x12xf32>
    %124 = vector.shape_cast %123 : vector<16x12xf32> to vector<2x8x12xf32>
    %125 = arith.truncf %120 : vector<2x8x12xf32> to vector<2x8x12xbf16>
    %126 = arith.truncf %122 : vector<2x8x12xf32> to vector<2x8x12xbf16>
    "tpu.trace_start"() <{level = 10 : i32, message = "bqd,bkd->bqk"}> : () -> ()
    %cst_37 = arith.constant dense<0.000000e+00> : vector<2x8x8xf32>
    %127 = tpu.matmul %125, %126, %cst_37 {dimension_numbers = #tpu.dot_dimension_numbers<[2], [2], [1], [1], [0, 0, 0, 1, 1, 1], [0], [0]>} : vector<2x8x12xbf16>, vector<2x8x12xbf16>, vector<2x8x8xf32> -> vector<2x8x8xf32>
    "tpu.trace_stop"() : () -> ()
    %cst_38 = arith.constant 0.288675129 : f32
    %128 = vector.broadcast %cst_38 : f32 to vector<2x8x8xf32>
    %129 = arith.mulf %127, %128 : vector<2x8x8xf32>
    %130 = vector.shape_cast %25 : vector<2x8xf32> to vector<2x1x8xf32>
    %131 = vector.broadcast %130 : vector<2x1x8xf32> to vector<2x8x8xf32>
    %132 = arith.addf %129, %131 : vector<2x8x8xf32>
    %cst_39 = arith.constant dense<0xFF800000> : vector<2x8xf32>
    %133 = vector.multi_reduction <maximumf>, %132, %cst_39 [2] : vector<2x8x8xf32> to vector<2x8xf32>
    %134 = vector.shape_cast %133 : vector<2x8xf32> to vector<2x8x1xf32>
    %135 = vector.broadcast %134 : vector<2x8x1xf32> to vector<2x8x8xf32>
    %136 = arith.subf %132, %135 : vector<2x8x8xf32>
    %137 = math.exp %136 : vector<2x8x8xf32>
    %cst_40 = arith.constant dense<0.000000e+00> : vector<2x8xf32>
    %138 = vector.multi_reduction <add>, %137, %cst_40 [2] : vector<2x8x8xf32> to vector<2x8xf32>
    %139 = vector.shape_cast %138 : vector<2x8xf32> to vector<2x8x1xf32>
    %140 = tpu.reciprocal %139 {approx = true} : vector<2x8x1xf32> -> vector<2x8x1xf32>
    %141 = vector.broadcast %140 : vector<2x8x1xf32> to vector<2x8x8xf32>
    %142 = arith.mulf %137, %141 : vector<2x8x8xf32>
    %143 = arith.truncf %142 : vector<2x8x8xf32> to vector<2x8x8xbf16>
    %144 = arith.truncf %124 : vector<2x8x12xf32> to vector<2x8x12xbf16>
    "tpu.trace_start"() <{level = 10 : i32, message = "bqk,bkd->bqd"}> : () -> ()
    %cst_41 = arith.constant dense<0.000000e+00> : vector<2x8x12xf32>
    %145 = tpu.matmul %143, %144, %cst_41 {dimension_numbers = #tpu.dot_dimension_numbers<[2], [1], [1], [2], [0, 0, 0, 1, 1, 2], [0], [0]>} : vector<2x8x8xbf16>, vector<2x8x12xbf16>, vector<2x8x12xf32> -> vector<2x8x12xf32>
    "tpu.trace_stop"() : () -> ()
    %146 = vector.shape_cast %145 : vector<2x8x12xf32> to vector<16x12xf32>
    %147 = tpu.concatenate %62, %90, %118, %146 in 1 : vector<16x12xf32>, vector<16x12xf32>, vector<16x12xf32>, vector<16x12xf32> -> vector<16x48xf32>
    %148 = arith.truncf %147 : vector<16x48xf32> to vector<16x48xbf16>
    %c0_42 = arith.constant 0 : index
    %c0_43 = arith.constant 0 : index
    %149 = vector.load %arg11[%c0_42, %c0_43] : memref<48x48xbf16, #tpu.memory_space<vmem>>, vector<48x48xbf16>
    %cst_44 = arith.constant dense<0.000000e+00> : vector<16x48xf32>
    %150 = tpu.matmul %148, %149, %cst_44 {dimension_numbers = #tpu.dot_dimension_numbers<[1], [0], [0], [1], [0, 0, 1, 1], [], []>} : vector<16x48xbf16>, vector<48x48xbf16>, vector<16x48xf32> -> vector<16x48xf32>
    %c0_45 = arith.constant 0 : index
    %c0_46 = arith.constant 0 : index
    %151 = vector.load %arg12[%c0_45, %c0_46] : memref<1x48xf32, #tpu.memory_space<vmem>>, vector<1x48xf32>
    %152 = vector.broadcast %151 : vector<1x48xf32> to vector<16x48xf32>
    %153 = arith.addf %150, %152 : vector<16x48xf32>
    %c0_47 = arith.constant 0 : index
    %c0_48 = arith.constant 0 : index
    %154 = vector.load %arg13[%c0_47, %c0_48] : memref<1x48xf32, #tpu.memory_space<vmem>>, vector<1x48xf32>
    %c0_49 = arith.constant 0 : index
    %c0_50 = arith.constant 0 : index
    %155 = vector.load %arg14[%c0_49, %c0_50] : memref<1x48xf32, #tpu.memory_space<vmem>>, vector<1x48xf32>
    %156 = arith.addf %20, %153 : vector<16x48xf32>
    %cst_51 = arith.constant dense<0.000000e+00> : vector<16xf32>
    %157 = vector.multi_reduction <add>, %156, %cst_51 [1] : vector<16x48xf32> to vector<16xf32>
    %158 = vector.shape_cast %157 : vector<16xf32> to vector<16x1xf32>
    %cst_52 = arith.constant 4.800000e+01 : f32
    %159 = vector.broadcast %cst_52 : f32 to vector<16x1xf32>
    %160 = arith.divf %158, %159 : vector<16x1xf32>
    %161 = vector.broadcast %160 : vector<16x1xf32> to vector<16x48xf32>
    %162 = arith.subf %156, %161 : vector<16x48xf32>
    %163 = arith.mulf %162, %162 : vector<16x48xf32>
    %cst_53 = arith.constant dense<0.000000e+00> : vector<16xf32>
    %164 = vector.multi_reduction <add>, %163, %cst_53 [1] : vector<16x48xf32> to vector<16xf32>
    %165 = vector.shape_cast %164 : vector<16xf32> to vector<16x1xf32>
    %cst_54 = arith.constant 4.800000e+01 : f32
    %166 = vector.broadcast %cst_54 : f32 to vector<16x1xf32>
    %167 = arith.divf %165, %166 : vector<16x1xf32>
    %cst_55 = arith.constant 9.99999974E-6 : f32
    %168 = vector.broadcast %cst_55 : f32 to vector<16x1xf32>
    %169 = arith.addf %167, %168 : vector<16x1xf32>
    %170 = math.rsqrt %169 : vector<16x1xf32>
    %171 = vector.broadcast %170 : vector<16x1xf32> to vector<16x48xf32>
    %172 = arith.mulf %162, %171 : vector<16x48xf32>
    %173 = vector.broadcast %154 : vector<1x48xf32> to vector<16x48xf32>
    %174 = arith.mulf %172, %173 : vector<16x48xf32>
    %175 = vector.broadcast %155 : vector<1x48xf32> to vector<16x48xf32>
    %176 = arith.addf %174, %175 : vector<16x48xf32>
    %177 = arith.truncf %176 : vector<16x48xf32> to vector<16x48xbf16>
    %c0_56 = arith.constant 0 : index
    %c0_57 = arith.constant 0 : index
    %178 = vector.load %arg15[%c0_56, %c0_57] : memref<48x192xbf16, #tpu.memory_space<vmem>>, vector<48x192xbf16>
    %cst_58 = arith.constant dense<0.000000e+00> : vector<16x192xf32>
    %179 = tpu.matmul %177, %178, %cst_58 {dimension_numbers = #tpu.dot_dimension_numbers<[1], [0], [0], [1], [0, 0, 1, 1], [], []>} : vector<16x48xbf16>, vector<48x192xbf16>, vector<16x192xf32> -> vector<16x192xf32>
    %c0_59 = arith.constant 0 : index
    %c0_60 = arith.constant 0 : index
    %180 = vector.load %arg16[%c0_59, %c0_60] : memref<1x192xf32, #tpu.memory_space<vmem>>, vector<1x192xf32>
    %181 = vector.broadcast %180 : vector<1x192xf32> to vector<16x192xf32>
    %182 = arith.addf %179, %181 : vector<16x192xf32>
    %cst_61 = arith.constant 0.000000e+00 : f32
    %183 = vector.broadcast %cst_61 : f32 to vector<16x192xf32>
    %184 = arith.maximumf %182, %183 : vector<16x192xf32>
    %185 = arith.truncf %184 : vector<16x192xf32> to vector<16x192xbf16>
    %c0_62 = arith.constant 0 : index
    %c0_63 = arith.constant 0 : index
    %186 = vector.load %arg17[%c0_62, %c0_63] : memref<192x48xbf16, #tpu.memory_space<vmem>>, vector<192x48xbf16>
    %cst_64 = arith.constant dense<0.000000e+00> : vector<16x48xf32>
    %187 = tpu.matmul %185, %186, %cst_64 {dimension_numbers = #tpu.dot_dimension_numbers<[1], [0], [0], [1], [0, 0, 1, 1], [], []>} : vector<16x192xbf16>, vector<192x48xbf16>, vector<16x48xf32> -> vector<16x48xf32>
    %c0_65 = arith.constant 0 : index
    %c0_66 = arith.constant 0 : index
    %188 = vector.load %arg18[%c0_65, %c0_66] : memref<1x48xf32, #tpu.memory_space<vmem>>, vector<1x48xf32>
    %189 = vector.broadcast %188 : vector<1x48xf32> to vector<16x48xf32>
    %190 = arith.addf %187, %189 : vector<16x48xf32>
    %c0_67 = arith.constant 0 : index
    %c0_68 = arith.constant 0 : index
    %191 = vector.load %arg19[%c0_67, %c0_68] : memref<1x48xf32, #tpu.memory_space<vmem>>, vector<1x48xf32>
    %c0_69 = arith.constant 0 : index
    %c0_70 = arith.constant 0 : index
    %192 = vector.load %arg20[%c0_69, %c0_70] : memref<1x48xf32, #tpu.memory_space<vmem>>, vector<1x48xf32>
    %193 = arith.addf %176, %190 : vector<16x48xf32>
    %cst_71 = arith.constant dense<0.000000e+00> : vector<16xf32>
    %194 = vector.multi_reduction <add>, %193, %cst_71 [1] : vector<16x48xf32> to vector<16xf32>
    %195 = vector.shape_cast %194 : vector<16xf32> to vector<16x1xf32>
    %cst_72 = arith.constant 4.800000e+01 : f32
    %196 = vector.broadcast %cst_72 : f32 to vector<16x1xf32>
    %197 = arith.divf %195, %196 : vector<16x1xf32>
    %198 = vector.broadcast %197 : vector<16x1xf32> to vector<16x48xf32>
    %199 = arith.subf %193, %198 : vector<16x48xf32>
    %200 = arith.mulf %199, %199 : vector<16x48xf32>
    %cst_73 = arith.constant dense<0.000000e+00> : vector<16xf32>
    %201 = vector.multi_reduction <add>, %200, %cst_73 [1] : vector<16x48xf32> to vector<16xf32>
    %202 = vector.shape_cast %201 : vector<16xf32> to vector<16x1xf32>
    %cst_74 = arith.constant 4.800000e+01 : f32
    %203 = vector.broadcast %cst_74 : f32 to vector<16x1xf32>
    %204 = arith.divf %202, %203 : vector<16x1xf32>
    %cst_75 = arith.constant 9.99999974E-6 : f32
    %205 = vector.broadcast %cst_75 : f32 to vector<16x1xf32>
    %206 = arith.addf %204, %205 : vector<16x1xf32>
    %207 = math.rsqrt %206 : vector<16x1xf32>
    %208 = vector.broadcast %207 : vector<16x1xf32> to vector<16x48xf32>
    %209 = arith.mulf %199, %208 : vector<16x48xf32>
    %210 = vector.broadcast %191 : vector<1x48xf32> to vector<16x48xf32>
    %211 = arith.mulf %209, %210 : vector<16x48xf32>
    %212 = vector.broadcast %192 : vector<1x48xf32> to vector<16x48xf32>
    %213 = arith.addf %211, %212 : vector<16x48xf32>
    %c0_76 = arith.constant 0 : index
    %c0_77 = arith.constant 0 : index
    %214 = vector.load %arg35[%c0_76, %c0_77] : memref<16x48xf32, #tpu.memory_space<vmem>>, vector<16x48xf32>
    tpu.vector_store %arg35[%c0_76, %c0_77], %213 {strides = array<i32>} : memref<16x48xf32, #tpu.memory_space<vmem>>, vector<16x48xf32>,
    %215 = arith.mulf %213, %213 : vector<16x48xf32>
    %cst_78 = arith.constant dense<0.000000e+00> : vector<16xf32>
    %216 = vector.multi_reduction <add>, %215, %cst_78 [1] : vector<16x48xf32> to vector<16xf32>
    %217 = vector.shape_cast %216 : vector<16xf32> to vector<16x1xf32>
    %218 = vector.shape_cast %217 : vector<16x1xf32> to vector<2x8x1xf32>
    %cst_79 = arith.constant dense<0.000000e+00> : vector<2x1xf32>
    %219 = vector.multi_reduction <add>, %218, %cst_79 [1] : vector<2x8x1xf32> to vector<2x1xf32>
    %220 = vector.shape_cast %219 : vector<2x1xf32> to vector<2x1x1xf32>
    %cst_80 = arith.constant 3.840000e+02 : f32
    %221 = vector.broadcast %cst_80 : f32 to vector<2x1x1xf32>
    %222 = arith.divf %220, %221 : vector<2x1x1xf32>
    %223 = math.sqrt %222 : vector<2x1x1xf32>
    %224 = vector.shape_cast %213 : vector<16x48xf32> to vector<2x8x48xf32>
    %c0_81 = arith.constant 0 : index
    %c0_82 = arith.constant 0 : index
    %225 = vector.load %arg4[%c0_81, %c0_82] : memref<16x48xf32, #tpu.memory_space<vmem>>, vector<16x48xf32>
    %226 = vector.shape_cast %225 : vector<16x48xf32> to vector<2x8x48xf32>
    %227 = vector.broadcast %223 : vector<2x1x1xf32> to vector<2x8x48xf32>
    %228 = arith.mulf %227, %226 : vector<2x8x48xf32>
    %229 = arith.addf %224, %228 : vector<2x8x48xf32>
    %230 = vector.shape_cast %229 : vector<2x8x48xf32> to vector<16x48xf32>
    %231 = arith.truncf %230 : vector<16x48xf32> to vector<16x48xbf16>
    %c0_83 = arith.constant 0 : index
    %c0_84 = arith.constant 0 : index
    %232 = vector.load %arg21[%c0_83, %c0_84] : memref<48x144xbf16, #tpu.memory_space<vmem>>, vector<48x144xbf16>
    %cst_85 = arith.constant dense<0.000000e+00> : vector<16x144xf32>
    %233 = tpu.matmul %231, %232, %cst_85 {dimension_numbers = #tpu.dot_dimension_numbers<[1], [0], [0], [1], [0, 0, 1, 1], [], []>} : vector<16x48xbf16>, vector<48x144xbf16>, vector<16x144xf32> -> vector<16x144xf32>
    %c0_86 = arith.constant 0 : index
    %c0_87 = arith.constant 0 : index
    %234 = vector.load %arg22[%c0_86, %c0_87] : memref<1x144xf32, #tpu.memory_space<vmem>>, vector<1x144xf32>
    %235 = vector.broadcast %234 : vector<1x144xf32> to vector<16x144xf32>
    %236 = arith.addf %233, %235 : vector<16x144xf32>
    %237 = vector.extract_strided_slice %236 {offsets = [0, 0], sizes = [16, 48], strides = [1, 1]} : vector<16x144xf32> to vector<16x48xf32>
    %238 = vector.extract_strided_slice %236 {offsets = [0, 48], sizes = [16, 48], strides = [1, 1]} : vector<16x144xf32> to vector<16x48xf32>
    %239 = vector.extract_strided_slice %236 {offsets = [0, 96], sizes = [16, 48], strides = [1, 1]} : vector<16x144xf32> to vector<16x48xf32>
    %240 = vector.extract_strided_slice %237 {offsets = [0, 0], sizes = [16, 12], strides = [1, 1]} : vector<16x48xf32> to vector<16x12xf32>
    %241 = vector.shape_cast %240 : vector<16x12xf32> to vector<2x8x12xf32>
    %242 = vector.extract_strided_slice %238 {offsets = [0, 0], sizes = [16, 12], strides = [1, 1]} : vector<16x48xf32> to vector<16x12xf32>
    %243 = vector.shape_cast %242 : vector<16x12xf32> to vector<2x8x12xf32>
    %244 = vector.extract_strided_slice %239 {offsets = [0, 0], sizes = [16, 12], strides = [1, 1]} : vector<16x48xf32> to vector<16x12xf32>
    %245 = vector.shape_cast %244 : vector<16x12xf32> to vector<2x8x12xf32>
    %246 = arith.truncf %241 : vector<2x8x12xf32> to vector<2x8x12xbf16>
    %247 = arith.truncf %243 : vector<2x8x12xf32> to vector<2x8x12xbf16>
    "tpu.trace_start"() <{level = 10 : i32, message = "bqd,bkd->bqk"}> : () -> ()
    %cst_88 = arith.constant dense<0.000000e+00> : vector<2x8x8xf32>
    %248 = tpu.matmul %246, %247, %cst_88 {dimension_numbers = #tpu.dot_dimension_numbers<[2], [2], [1], [1], [0, 0, 0, 1, 1, 1], [0], [0]>} : vector<2x8x12xbf16>, vector<2x8x12xbf16>, vector<2x8x8xf32> -> vector<2x8x8xf32>
    "tpu.trace_stop"() : () -> ()
    %cst_89 = arith.constant 0.288675129 : f32
    %249 = vector.broadcast %cst_89 : f32 to vector<2x8x8xf32>
    %250 = arith.mulf %248, %249 : vector<2x8x8xf32>
    %251 = vector.shape_cast %25 : vector<2x8xf32> to vector<2x1x8xf32>
    %252 = vector.broadcast %251 : vector<2x1x8xf32> to vector<2x8x8xf32>
    %253 = arith.addf %250, %252 : vector<2x8x8xf32>
    %cst_90 = arith.constant dense<0xFF800000> : vector<2x8xf32>
    %254 = vector.multi_reduction <maximumf>, %253, %cst_90 [2] : vector<2x8x8xf32> to vector<2x8xf32>
    %255 = vector.shape_cast %254 : vector<2x8xf32> to vector<2x8x1xf32>
    %256 = vector.broadcast %255 : vector<2x8x1xf32> to vector<2x8x8xf32>
    %257 = arith.subf %253, %256 : vector<2x8x8xf32>
    %258 = math.exp %257 : vector<2x8x8xf32>
    %cst_91 = arith.constant dense<0.000000e+00> : vector<2x8xf32>
    %259 = vector.multi_reduction <add>, %258, %cst_91 [2] : vector<2x8x8xf32> to vector<2x8xf32>
    %260 = vector.shape_cast %259 : vector<2x8xf32> to vector<2x8x1xf32>
    %261 = tpu.reciprocal %260 {approx = true} : vector<2x8x1xf32> -> vector<2x8x1xf32>
    %262 = vector.broadcast %261 : vector<2x8x1xf32> to vector<2x8x8xf32>
    %263 = arith.mulf %258, %262 : vector<2x8x8xf32>
    %264 = arith.truncf %263 : vector<2x8x8xf32> to vector<2x8x8xbf16>
    %265 = arith.truncf %245 : vector<2x8x12xf32> to vector<2x8x12xbf16>
    "tpu.trace_start"() <{level = 10 : i32, message = "bqk,bkd->bqd"}> : () -> ()
    %cst_92 = arith.constant dense<0.000000e+00> : vector<2x8x12xf32>
    %266 = tpu.matmul %264, %265, %cst_92 {dimension_numbers = #tpu.dot_dimension_numbers<[2], [1], [1], [2], [0, 0, 0, 1, 1, 2], [0], [0]>} : vector<2x8x8xbf16>, vector<2x8x12xbf16>, vector<2x8x12xf32> -> vector<2x8x12xf32>
    "tpu.trace_stop"() : () -> ()
    %267 = vector.shape_cast %266 : vector<2x8x12xf32> to vector<16x12xf32>
    %268 = vector.extract_strided_slice %237 {offsets = [0, 12], sizes = [16, 12], strides = [1, 1]} : vector<16x48xf32> to vector<16x12xf32>
    %269 = vector.shape_cast %268 : vector<16x12xf32> to vector<2x8x12xf32>
    %270 = vector.extract_strided_slice %238 {offsets = [0, 12], sizes = [16, 12], strides = [1, 1]} : vector<16x48xf32> to vector<16x12xf32>
    %271 = vector.shape_cast %270 : vector<16x12xf32> to vector<2x8x12xf32>
    %272 = vector.extract_strided_slice %239 {offsets = [0, 12], sizes = [16, 12], strides = [1, 1]} : vector<16x48xf32> to vector<16x12xf32>
    %273 = vector.shape_cast %272 : vector<16x12xf32> to vector<2x8x12xf32>
    %274 = arith.truncf %269 : vector<2x8x12xf32> to vector<2x8x12xbf16>
    %275 = arith.truncf %271 : vector<2x8x12xf32> to vector<2x8x12xbf16>
    "tpu.trace_start"() <{level = 10 : i32, message = "bqd,bkd->bqk"}> : () -> ()
    %cst_93 = arith.constant dense<0.000000e+00> : vector<2x8x8xf32>
    %276 = tpu.matmul %274, %275, %cst_93 {dimension_numbers = #tpu.dot_dimension_numbers<[2], [2], [1], [1], [0, 0, 0, 1, 1, 1], [0], [0]>} : vector<2x8x12xbf16>, vector<2x8x12xbf16>, vector<2x8x8xf32> -> vector<2x8x8xf32>
    "tpu.trace_stop"() : () -> ()
    %cst_94 = arith.constant 0.288675129 : f32
    %277 = vector.broadcast %cst_94 : f32 to vector<2x8x8xf32>
    %278 = arith.mulf %276, %277 : vector<2x8x8xf32>
    %279 = vector.shape_cast %25 : vector<2x8xf32> to vector<2x1x8xf32>
    %280 = vector.broadcast %279 : vector<2x1x8xf32> to vector<2x8x8xf32>
    %281 = arith.addf %278, %280 : vector<2x8x8xf32>
    %cst_95 = arith.constant dense<0xFF800000> : vector<2x8xf32>
    %282 = vector.multi_reduction <maximumf>, %281, %cst_95 [2] : vector<2x8x8xf32> to vector<2x8xf32>
    %283 = vector.shape_cast %282 : vector<2x8xf32> to vector<2x8x1xf32>
    %284 = vector.broadcast %283 : vector<2x8x1xf32> to vector<2x8x8xf32>
    %285 = arith.subf %281, %284 : vector<2x8x8xf32>
    %286 = math.exp %285 : vector<2x8x8xf32>
    %cst_96 = arith.constant dense<0.000000e+00> : vector<2x8xf32>
    %287 = vector.multi_reduction <add>, %286, %cst_96 [2] : vector<2x8x8xf32> to vector<2x8xf32>
    %288 = vector.shape_cast %287 : vector<2x8xf32> to vector<2x8x1xf32>
    %289 = tpu.reciprocal %288 {approx = true} : vector<2x8x1xf32> -> vector<2x8x1xf32>
    %290 = vector.broadcast %289 : vector<2x8x1xf32> to vector<2x8x8xf32>
    %291 = arith.mulf %286, %290 : vector<2x8x8xf32>
    %292 = arith.truncf %291 : vector<2x8x8xf32> to vector<2x8x8xbf16>
    %293 = arith.truncf %273 : vector<2x8x12xf32> to vector<2x8x12xbf16>
    "tpu.trace_start"() <{level = 10 : i32, message = "bqk,bkd->bqd"}> : () -> ()
    %cst_97 = arith.constant dense<0.000000e+00> : vector<2x8x12xf32>
    %294 = tpu.matmul %292, %293, %cst_97 {dimension_numbers = #tpu.dot_dimension_numbers<[2], [1], [1], [2], [0, 0, 0, 1, 1, 2], [0], [0]>} : vector<2x8x8xbf16>, vector<2x8x12xbf16>, vector<2x8x12xf32> -> vector<2x8x12xf32>
    "tpu.trace_stop"() : () -> ()
    %295 = vector.shape_cast %294 : vector<2x8x12xf32> to vector<16x12xf32>
    %296 = vector.extract_strided_slice %237 {offsets = [0, 24], sizes = [16, 12], strides = [1, 1]} : vector<16x48xf32> to vector<16x12xf32>
    %297 = vector.shape_cast %296 : vector<16x12xf32> to vector<2x8x12xf32>
    %298 = vector.extract_strided_slice %238 {offsets = [0, 24], sizes = [16, 12], strides = [1, 1]} : vector<16x48xf32> to vector<16x12xf32>
    %299 = vector.shape_cast %298 : vector<16x12xf32> to vector<2x8x12xf32>
    %300 = vector.extract_strided_slice %239 {offsets = [0, 24], sizes = [16, 12], strides = [1, 1]} : vector<16x48xf32> to vector<16x12xf32>
    %301 = vector.shape_cast %300 : vector<16x12xf32> to vector<2x8x12xf32>
    %302 = arith.truncf %297 : vector<2x8x12xf32> to vector<2x8x12xbf16>
    %303 = arith.truncf %299 : vector<2x8x12xf32> to vector<2x8x12xbf16>
    "tpu.trace_start"() <{level = 10 : i32, message = "bqd,bkd->bqk"}> : () -> ()
    %cst_98 = arith.constant dense<0.000000e+00> : vector<2x8x8xf32>
    %304 = tpu.matmul %302, %303, %cst_98 {dimension_numbers = #tpu.dot_dimension_numbers<[2], [2], [1], [1], [0, 0, 0, 1, 1, 1], [0], [0]>} : vector<2x8x12xbf16>, vector<2x8x12xbf16>, vector<2x8x8xf32> -> vector<2x8x8xf32>
    "tpu.trace_stop"() : () -> ()
    %cst_99 = arith.constant 0.288675129 : f32
    %305 = vector.broadcast %cst_99 : f32 to vector<2x8x8xf32>
    %306 = arith.mulf %304, %305 : vector<2x8x8xf32>
    %307 = vector.shape_cast %25 : vector<2x8xf32> to vector<2x1x8xf32>
    %308 = vector.broadcast %307 : vector<2x1x8xf32> to vector<2x8x8xf32>
    %309 = arith.addf %306, %308 : vector<2x8x8xf32>
    %cst_100 = arith.constant dense<0xFF800000> : vector<2x8xf32>
    %310 = vector.multi_reduction <maximumf>, %309, %cst_100 [2] : vector<2x8x8xf32> to vector<2x8xf32>
    %311 = vector.shape_cast %310 : vector<2x8xf32> to vector<2x8x1xf32>
    %312 = vector.broadcast %311 : vector<2x8x1xf32> to vector<2x8x8xf32>
    %313 = arith.subf %309, %312 : vector<2x8x8xf32>
    %314 = math.exp %313 : vector<2x8x8xf32>
    %cst_101 = arith.constant dense<0.000000e+00> : vector<2x8xf32>
    %315 = vector.multi_reduction <add>, %314, %cst_101 [2] : vector<2x8x8xf32> to vector<2x8xf32>
    %316 = vector.shape_cast %315 : vector<2x8xf32> to vector<2x8x1xf32>
    %317 = tpu.reciprocal %316 {approx = true} : vector<2x8x1xf32> -> vector<2x8x1xf32>
    %318 = vector.broadcast %317 : vector<2x8x1xf32> to vector<2x8x8xf32>
    %319 = arith.mulf %314, %318 : vector<2x8x8xf32>
    %320 = arith.truncf %319 : vector<2x8x8xf32> to vector<2x8x8xbf16>
    %321 = arith.truncf %301 : vector<2x8x12xf32> to vector<2x8x12xbf16>
    "tpu.trace_start"() <{level = 10 : i32, message = "bqk,bkd->bqd"}> : () -> ()
    %cst_102 = arith.constant dense<0.000000e+00> : vector<2x8x12xf32>
    %322 = tpu.matmul %320, %321, %cst_102 {dimension_numbers = #tpu.dot_dimension_numbers<[2], [1], [1], [2], [0, 0, 0, 1, 1, 2], [0], [0]>} : vector<2x8x8xbf16>, vector<2x8x12xbf16>, vector<2x8x12xf32> -> vector<2x8x12xf32>
    "tpu.trace_stop"() : () -> ()
    %323 = vector.shape_cast %322 : vector<2x8x12xf32> to vector<16x12xf32>
    %324 = vector.extract_strided_slice %237 {offsets = [0, 36], sizes = [16, 12], strides = [1, 1]} : vector<16x48xf32> to vector<16x12xf32>
    %325 = vector.shape_cast %324 : vector<16x12xf32> to vector<2x8x12xf32>
    %326 = vector.extract_strided_slice %238 {offsets = [0, 36], sizes = [16, 12], strides = [1, 1]} : vector<16x48xf32> to vector<16x12xf32>
    %327 = vector.shape_cast %326 : vector<16x12xf32> to vector<2x8x12xf32>
    %328 = vector.extract_strided_slice %239 {offsets = [0, 36], sizes = [16, 12], strides = [1, 1]} : vector<16x48xf32> to vector<16x12xf32>
    %329 = vector.shape_cast %328 : vector<16x12xf32> to vector<2x8x12xf32>
    %330 = arith.truncf %325 : vector<2x8x12xf32> to vector<2x8x12xbf16>
    %331 = arith.truncf %327 : vector<2x8x12xf32> to vector<2x8x12xbf16>
    "tpu.trace_start"() <{level = 10 : i32, message = "bqd,bkd->bqk"}> : () -> ()
    %cst_103 = arith.constant dense<0.000000e+00> : vector<2x8x8xf32>
    %332 = tpu.matmul %330, %331, %cst_103 {dimension_numbers = #tpu.dot_dimension_numbers<[2], [2], [1], [1], [0, 0, 0, 1, 1, 1], [0], [0]>} : vector<2x8x12xbf16>, vector<2x8x12xbf16>, vector<2x8x8xf32> -> vector<2x8x8xf32>
    "tpu.trace_stop"() : () -> ()
    %cst_104 = arith.constant 0.288675129 : f32
    %333 = vector.broadcast %cst_104 : f32 to vector<2x8x8xf32>
    %334 = arith.mulf %332, %333 : vector<2x8x8xf32>
    %335 = vector.shape_cast %25 : vector<2x8xf32> to vector<2x1x8xf32>
    %336 = vector.broadcast %335 : vector<2x1x8xf32> to vector<2x8x8xf32>
    %337 = arith.addf %334, %336 : vector<2x8x8xf32>
    %cst_105 = arith.constant dense<0xFF800000> : vector<2x8xf32>
    %338 = vector.multi_reduction <maximumf>, %337, %cst_105 [2] : vector<2x8x8xf32> to vector<2x8xf32>
    %339 = vector.shape_cast %338 : vector<2x8xf32> to vector<2x8x1xf32>
    %340 = vector.broadcast %339 : vector<2x8x1xf32> to vector<2x8x8xf32>
    %341 = arith.subf %337, %340 : vector<2x8x8xf32>
    %342 = math.exp %341 : vector<2x8x8xf32>
    %cst_106 = arith.constant dense<0.000000e+00> : vector<2x8xf32>
    %343 = vector.multi_reduction <add>, %342, %cst_106 [2] : vector<2x8x8xf32> to vector<2x8xf32>
    %344 = vector.shape_cast %343 : vector<2x8xf32> to vector<2x8x1xf32>
    %345 = tpu.reciprocal %344 {approx = true} : vector<2x8x1xf32> -> vector<2x8x1xf32>
    %346 = vector.broadcast %345 : vector<2x8x1xf32> to vector<2x8x8xf32>
    %347 = arith.mulf %342, %346 : vector<2x8x8xf32>
    %348 = arith.truncf %347 : vector<2x8x8xf32> to vector<2x8x8xbf16>
    %349 = arith.truncf %329 : vector<2x8x12xf32> to vector<2x8x12xbf16>
    "tpu.trace_start"() <{level = 10 : i32, message = "bqk,bkd->bqd"}> : () -> ()
    %cst_107 = arith.constant dense<0.000000e+00> : vector<2x8x12xf32>
    %350 = tpu.matmul %348, %349, %cst_107 {dimension_numbers = #tpu.dot_dimension_numbers<[2], [1], [1], [2], [0, 0, 0, 1, 1, 2], [0], [0]>} : vector<2x8x8xbf16>, vector<2x8x12xbf16>, vector<2x8x12xf32> -> vector<2x8x12xf32>
    "tpu.trace_stop"() : () -> ()
    %351 = vector.shape_cast %350 : vector<2x8x12xf32> to vector<16x12xf32>
    %352 = tpu.concatenate %267, %295, %323, %351 in 1 : vector<16x12xf32>, vector<16x12xf32>, vector<16x12xf32>, vector<16x12xf32> -> vector<16x48xf32>
    %353 = arith.truncf %352 : vector<16x48xf32> to vector<16x48xbf16>
    %c0_108 = arith.constant 0 : index
    %c0_109 = arith.constant 0 : index
    %354 = vector.load %arg23[%c0_108, %c0_109] : memref<48x48xbf16, #tpu.memory_space<vmem>>, vector<48x48xbf16>
    %cst_110 = arith.constant dense<0.000000e+00> : vector<16x48xf32>
    %355 = tpu.matmul %353, %354, %cst_110 {dimension_numbers = #tpu.dot_dimension_numbers<[1], [0], [0], [1], [0, 0, 1, 1], [], []>} : vector<16x48xbf16>, vector<48x48xbf16>, vector<16x48xf32> -> vector<16x48xf32>
    %c0_111 = arith.constant 0 : index
    %c0_112 = arith.constant 0 : index
    %356 = vector.load %arg24[%c0_111, %c0_112] : memref<1x48xf32, #tpu.memory_space<vmem>>, vector<1x48xf32>
    %357 = vector.broadcast %356 : vector<1x48xf32> to vector<16x48xf32>
    %358 = arith.addf %355, %357 : vector<16x48xf32>
    %c0_113 = arith.constant 0 : index
    %c0_114 = arith.constant 0 : index
    %359 = vector.load %arg25[%c0_113, %c0_114] : memref<1x48xf32, #tpu.memory_space<vmem>>, vector<1x48xf32>
    %c0_115 = arith.constant 0 : index
    %c0_116 = arith.constant 0 : index
    %360 = vector.load %arg26[%c0_115, %c0_116] : memref<1x48xf32, #tpu.memory_space<vmem>>, vector<1x48xf32>
    %361 = arith.addf %230, %358 : vector<16x48xf32>
    %cst_117 = arith.constant dense<0.000000e+00> : vector<16xf32>
    %362 = vector.multi_reduction <add>, %361, %cst_117 [1] : vector<16x48xf32> to vector<16xf32>
    %363 = vector.shape_cast %362 : vector<16xf32> to vector<16x1xf32>
    %cst_118 = arith.constant 4.800000e+01 : f32
    %364 = vector.broadcast %cst_118 : f32 to vector<16x1xf32>
    %365 = arith.divf %363, %364 : vector<16x1xf32>
    %366 = vector.broadcast %365 : vector<16x1xf32> to vector<16x48xf32>
    %367 = arith.subf %361, %366 : vector<16x48xf32>
    %368 = arith.mulf %367, %367 : vector<16x48xf32>
    %cst_119 = arith.constant dense<0.000000e+00> : vector<16xf32>
    %369 = vector.multi_reduction <add>, %368, %cst_119 [1] : vector<16x48xf32> to vector<16xf32>
    %370 = vector.shape_cast %369 : vector<16xf32> to vector<16x1xf32>
    %cst_120 = arith.constant 4.800000e+01 : f32
    %371 = vector.broadcast %cst_120 : f32 to vector<16x1xf32>
    %372 = arith.divf %370, %371 : vector<16x1xf32>
    %cst_121 = arith.constant 9.99999974E-6 : f32
    %373 = vector.broadcast %cst_121 : f32 to vector<16x1xf32>
    %374 = arith.addf %372, %373 : vector<16x1xf32>
    %375 = math.rsqrt %374 : vector<16x1xf32>
    %376 = vector.broadcast %375 : vector<16x1xf32> to vector<16x48xf32>
    %377 = arith.mulf %367, %376 : vector<16x48xf32>
    %378 = vector.broadcast %359 : vector<1x48xf32> to vector<16x48xf32>
    %379 = arith.mulf %377, %378 : vector<16x48xf32>
    %380 = vector.broadcast %360 : vector<1x48xf32> to vector<16x48xf32>
    %381 = arith.addf %379, %380 : vector<16x48xf32>
    %382 = arith.truncf %381 : vector<16x48xf32> to vector<16x48xbf16>
    %c0_122 = arith.constant 0 : index
    %c0_123 = arith.constant 0 : index
    %383 = vector.load %arg27[%c0_122, %c0_123] : memref<48x192xbf16, #tpu.memory_space<vmem>>, vector<48x192xbf16>
    %cst_124 = arith.constant dense<0.000000e+00> : vector<16x192xf32>
    %384 = tpu.matmul %382, %383, %cst_124 {dimension_numbers = #tpu.dot_dimension_numbers<[1], [0], [0], [1], [0, 0, 1, 1], [], []>} : vector<16x48xbf16>, vector<48x192xbf16>, vector<16x192xf32> -> vector<16x192xf32>
    %c0_125 = arith.constant 0 : index
    %c0_126 = arith.constant 0 : index
    %385 = vector.load %arg28[%c0_125, %c0_126] : memref<1x192xf32, #tpu.memory_space<vmem>>, vector<1x192xf32>
    %386 = vector.broadcast %385 : vector<1x192xf32> to vector<16x192xf32>
    %387 = arith.addf %384, %386 : vector<16x192xf32>
    %cst_127 = arith.constant 0.000000e+00 : f32
    %388 = vector.broadcast %cst_127 : f32 to vector<16x192xf32>
    %389 = arith.maximumf %387, %388 : vector<16x192xf32>
    %390 = arith.truncf %389 : vector<16x192xf32> to vector<16x192xbf16>
    %c0_128 = arith.constant 0 : index
    %c0_129 = arith.constant 0 : index
    %391 = vector.load %arg29[%c0_128, %c0_129] : memref<192x48xbf16, #tpu.memory_space<vmem>>, vector<192x48xbf16>
    %cst_130 = arith.constant dense<0.000000e+00> : vector<16x48xf32>
    %392 = tpu.matmul %390, %391, %cst_130 {dimension_numbers = #tpu.dot_dimension_numbers<[1], [0], [0], [1], [0, 0, 1, 1], [], []>} : vector<16x192xbf16>, vector<192x48xbf16>, vector<16x48xf32> -> vector<16x48xf32>
    %c0_131 = arith.constant 0 : index
    %c0_132 = arith.constant 0 : index
    %393 = vector.load %arg30[%c0_131, %c0_132] : memref<1x48xf32, #tpu.memory_space<vmem>>, vector<1x48xf32>
    %394 = vector.broadcast %393 : vector<1x48xf32> to vector<16x48xf32>
    %395 = arith.addf %392, %394 : vector<16x48xf32>
    %c0_133 = arith.constant 0 : index
    %c0_134 = arith.constant 0 : index
    %396 = vector.load %arg31[%c0_133, %c0_134] : memref<1x48xf32, #tpu.memory_space<vmem>>, vector<1x48xf32>
    %c0_135 = arith.constant 0 : index
    %c0_136 = arith.constant 0 : index
    %397 = vector.load %arg32[%c0_135, %c0_136] : memref<1x48xf32, #tpu.memory_space<vmem>>, vector<1x48xf32>
    %398 = arith.addf %381, %395 : vector<16x48xf32>
    %cst_137 = arith.constant dense<0.000000e+00> : vector<16xf32>
    %399 = vector.multi_reduction <add>, %398, %cst_137 [1] : vector<16x48xf32> to vector<16xf32>
    %400 = vector.shape_cast %399 : vector<16xf32> to vector<16x1xf32>
    %cst_138 = arith.constant 4.800000e+01 : f32
    %401 = vector.broadcast %cst_138 : f32 to vector<16x1xf32>
    %402 = arith.divf %400, %401 : vector<16x1xf32>
    %403 = vector.broadcast %402 : vector<16x1xf32> to vector<16x48xf32>
    %404 = arith.subf %398, %403 : vector<16x48xf32>
    %405 = arith.mulf %404, %404 : vector<16x48xf32>
    %cst_139 = arith.constant dense<0.000000e+00> : vector<16xf32>
    %406 = vector.multi_reduction <add>, %405, %cst_139 [1] : vector<16x48xf32> to vector<16xf32>
    %407 = vector.shape_cast %406 : vector<16xf32> to vector<16x1xf32>
    %cst_140 = arith.constant 4.800000e+01 : f32
    %408 = vector.broadcast %cst_140 : f32 to vector<16x1xf32>
    %409 = arith.divf %407, %408 : vector<16x1xf32>
    %cst_141 = arith.constant 9.99999974E-6 : f32
    %410 = vector.broadcast %cst_141 : f32 to vector<16x1xf32>
    %411 = arith.addf %409, %410 : vector<16x1xf32>
    %412 = math.rsqrt %411 : vector<16x1xf32>
    %413 = vector.broadcast %412 : vector<16x1xf32> to vector<16x48xf32>
    %414 = arith.mulf %404, %413 : vector<16x48xf32>
    %415 = vector.broadcast %396 : vector<1x48xf32> to vector<16x48xf32>
    %416 = arith.mulf %414, %415 : vector<16x48xf32>
    %417 = vector.broadcast %397 : vector<1x48xf32> to vector<16x48xf32>
    %418 = arith.addf %416, %417 : vector<16x48xf32>
    %c0_142 = arith.constant 0 : index
    %c0_143 = arith.constant 0 : index
    %419 = vector.load %arg36[%c0_142, %c0_143] : memref<16x48xf32, #tpu.memory_space<vmem>>, vector<16x48xf32>
    tpu.vector_store %arg36[%c0_142, %c0_143], %418 {strides = array<i32>} : memref<16x48xf32, #tpu.memory_space<vmem>>, vector<16x48xf32>,
    %420 = arith.truncf %418 : vector<16x48xf32> to vector<16x48xbf16>
    %c0_144 = arith.constant 0 : index
    %c0_145 = arith.constant 0 : index
    %c0_146 = arith.constant 0 : index
    %421 = vector.load %arg33[%c0_144, %c0_145, %c0_146] : memref<1x48x64xbf16, #tpu.memory_space<vmem>>, vector<1x48x64xbf16>
    %422 = vector.shape_cast %421 : vector<1x48x64xbf16> to vector<48x64xbf16>
    %cst_147 = arith.constant dense<0.000000e+00> : vector<16x64xf32>
    %423 = tpu.matmul %420, %422, %cst_147 {dimension_numbers = #tpu.dot_dimension_numbers<[1], [0], [0], [1], [0, 0, 1, 1], [], []>} : vector<16x48xbf16>, vector<48x64xbf16>, vector<16x64xf32> -> vector<16x64xf32>
    %c0_148 = arith.constant 0 : index
    %c0_149 = arith.constant 0 : index
    %c0_150 = arith.constant 0 : index
    %424 = vector.load %arg34[%c0_148, %c0_149, %c0_150] : memref<1x1x64xf32, #tpu.memory_space<vmem>>, vector<1x1x64xf32>
    %425 = vector.shape_cast %424 : vector<1x1x64xf32> to vector<1x64xf32>
    %426 = vector.broadcast %425 : vector<1x64xf32> to vector<16x64xf32>
    %427 = arith.addf %423, %426 : vector<16x64xf32>
    %c0_151 = arith.constant 0 : index
    %c0_152 = arith.constant 0 : index
    %428 = vector.load %arg37[%c0_151, %c0_152] : memref<16x64xf32, #tpu.memory_space<vmem>>, vector<16x64xf32>
    tpu.vector_store %arg37[%c0_151, %c0_152], %427 {strides = array<i32>} : memref<16x64xf32, #tpu.memory_space<vmem>>, vector<16x64xf32>,
    return
  }
  func.func @transform_0(%arg0: i32, %arg1: memref<1xi32, #tpu.memory_space<smem>>) -> (i32, i32) {
    %c0_i32 = arith.constant 0 : i32
    %c0_i32_0 = arith.constant 0 : i32
    %c0_i32_1 = arith.constant 0 : i32
    return %c0_i32, %c0_i32_0 : i32, i32
  }
  func.func @transform_1(%arg0: i32, %arg1: memref<1xi32, #tpu.memory_space<smem>>) -> (i32, i32) {
    %c0_i32 = arith.constant 0 : i32
    %c0_i32_0 = arith.constant 0 : i32
    %c0_i32_1 = arith.constant 0 : i32
    return %c0_i32, %c0_i32_0 : i32, i32
  }
  func.func @transform_2(%arg0: i32, %arg1: memref<1xi32, #tpu.memory_space<smem>>) -> (i32, i32) {
    %c0_i32 = arith.constant 0 : i32
    %c0_i32_0 = arith.constant 0 : i32
    %c0_i32_1 = arith.constant 0 : i32
    return %c0_i32, %c0_i32_0 : i32, i32
  }
  func.func @transform_3(%arg0: i32, %arg1: memref<1xi32, #tpu.memory_space<smem>>) -> (i32, i32) {
    %c0_i32 = arith.constant 0 : i32
    %c0_i32_0 = arith.constant 0 : i32
    %c0_i32_1 = arith.constant 0 : i32
    return %c0_i32, %c0_i32_0 : i32, i32
  }
  func.func @transform_4(%arg0: i32, %arg1: memref<1xi32, #tpu.memory_space<smem>>) -> (i32, i32) {
    %c0_i32 = arith.constant 0 : i32
    %c0_i32_0 = arith.constant 0 : i32
    %c0_i32_1 = arith.constant 0 : i32
    return %c0_i32, %c0_i32_0 : i32, i32
  }
  func.func @transform_5(%arg0: i32, %arg1: memref<1xi32, #tpu.memory_space<smem>>) -> (i32, i32) {
    %c0_i32 = arith.constant 0 : i32
    %c0_i32_0 = arith.constant 0 : i32
    %c0_i32_1 = arith.constant 0 : i32
    return %c0_i32, %c0_i32_0 : i32, i32
  }
  func.func @transform_6(%arg0: i32, %arg1: memref<1xi32, #tpu.memory_space<smem>>) -> (i32, i32, i32) {
    %c0 = arith.constant 0 : index
    %0 = memref.load %arg1[%c0] : memref<1xi32, #tpu.memory_space<smem>>
    %c0_i32 = arith.constant 0 : i32
    %c0_i32_0 = arith.constant 0 : i32
    %c0_i32_1 = arith.constant 0 : i32
    return %0, %c0_i32, %c0_i32_0 : i32, i32, i32
  }
  func.func @transform_7(%arg0: i32, %arg1: memref<1xi32, #tpu.memory_space<smem>>) -> (i32, i32) {
    %c0_i32 = arith.constant 0 : i32
    %c0_i32_0 = arith.constant 0 : i32
    %c0_i32_1 = arith.constant 0 : i32
    return %c0_i32, %c0_i32_0 : i32, i32
  }
  func.func @transform_8(%arg0: i32, %arg1: memref<1xi32, #tpu.memory_space<smem>>) -> (i32, i32) {
    %c0_i32 = arith.constant 0 : i32
    %c0_i32_0 = arith.constant 0 : i32
    %c0_i32_1 = arith.constant 0 : i32
    return %c0_i32, %c0_i32_0 : i32, i32
  }
  func.func @transform_9(%arg0: i32, %arg1: memref<1xi32, #tpu.memory_space<smem>>) -> (i32, i32) {
    %c0_i32 = arith.constant 0 : i32
    %c0_i32_0 = arith.constant 0 : i32
    %c0_i32_1 = arith.constant 0 : i32
    return %c0_i32, %c0_i32_0 : i32, i32
  }
  func.func @transform_10(%arg0: i32, %arg1: memref<1xi32, #tpu.memory_space<smem>>) -> (i32, i32) {
    %c0_i32 = arith.constant 0 : i32
    %c0_i32_0 = arith.constant 0 : i32
    %c0_i32_1 = arith.constant 0 : i32
    return %c0_i32, %c0_i32_0 : i32, i32
  }
  func.func @transform_11(%arg0: i32, %arg1: memref<1xi32, #tpu.memory_space<smem>>) -> (i32, i32) {
    %c0_i32 = arith.constant 0 : i32
    %c0_i32_0 = arith.constant 0 : i32
    %c0_i32_1 = arith.constant 0 : i32
    return %c0_i32, %c0_i32_0 : i32, i32
  }
  func.func @transform_12(%arg0: i32, %arg1: memref<1xi32, #tpu.memory_space<smem>>) -> (i32, i32) {
    %c0_i32 = arith.constant 0 : i32
    %c0_i32_0 = arith.constant 0 : i32
    %c0_i32_1 = arith.constant 0 : i32
    return %c0_i32, %c0_i32_0 : i32, i32
  }
  func.func @transform_13(%arg0: i32, %arg1: memref<1xi32, #tpu.memory_space<smem>>) -> (i32, i32) {
    %c0_i32 = arith.constant 0 : i32
    %c0_i32_0 = arith.constant 0 : i32
    %c0_i32_1 = arith.constant 0 : i32
    return %c0_i32, %c0_i32_0 : i32, i32
  }
  func.func @transform_14(%arg0: i32, %arg1: memref<1xi32, #tpu.memory_space<smem>>) -> (i32, i32) {
    %c0_i32 = arith.constant 0 : i32
    %c0_i32_0 = arith.constant 0 : i32
    %c0_i32_1 = arith.constant 0 : i32
    return %c0_i32, %c0_i32_0 : i32, i32
  }
  func.func @transform_15(%arg0: i32, %arg1: memref<1xi32, #tpu.memory_space<smem>>) -> (i32, i32) {
    %c0_i32 = arith.constant 0 : i32
    %c0_i32_0 = arith.constant 0 : i32
    %c0_i32_1 = arith.constant 0 : i32
    return %c0_i32, %c0_i32_0 : i32, i32
  }
  func.func @transform_16(%arg0: i32, %arg1: memref<1xi32, #tpu.memory_space<smem>>) -> (i32, i32) {
    %c0_i32 = arith.constant 0 : i32
    %c0_i32_0 = arith.constant 0 : i32
    %c0_i32_1 = arith.constant 0 : i32
    return %c0_i32, %c0_i32_0 : i32, i32
  }
  func.func @transform_17(%arg0: i32, %arg1: memref<1xi32, #tpu.memory_space<smem>>) -> (i32, i32) {
    %c0_i32 = arith.constant 0 : i32
    %c0_i32_0 = arith.constant 0 : i32
    %c0_i32_1 = arith.constant 0 : i32
    return %c0_i32, %c0_i32_0 : i32, i32
  }
  func.func @transform_18(%arg0: i32, %arg1: memref<1xi32, #tpu.memory_space<smem>>) -> (i32, i32) {
    %c0_i32 = arith.constant 0 : i32
    %c0_i32_0 = arith.constant 0 : i32
    %c0_i32_1 = arith.constant 0 : i32
    return %c0_i32, %c0_i32_0 : i32, i32
  }
  func.func @transform_19(%arg0: i32, %arg1: memref<1xi32, #tpu.memory_space<smem>>) -> (i32, i32) {
    %c0_i32 = arith.constant 0 : i32
    %c0_i32_0 = arith.constant 0 : i32
    %c0_i32_1 = arith.constant 0 : i32
    return %c0_i32, %c0_i32_0 : i32, i32
  }
  func.func @transform_20(%arg0: i32, %arg1: memref<1xi32, #tpu.memory_space<smem>>) -> (i32, i32) {
    %c0_i32 = arith.constant 0 : i32
    %c0_i32_0 = arith.constant 0 : i32
    %c0_i32_1 = arith.constant 0 : i32
    return %c0_i32, %c0_i32_0 : i32, i32
  }
  func.func @transform_21(%arg0: i32, %arg1: memref<1xi32, #tpu.memory_space<smem>>) -> (i32, i32) {
    %c0_i32 = arith.constant 0 : i32
    %c0_i32_0 = arith.constant 0 : i32
    %c0_i32_1 = arith.constant 0 : i32
    return %c0_i32, %c0_i32_0 : i32, i32
  }
  func.func @transform_22(%arg0: i32, %arg1: memref<1xi32, #tpu.memory_space<smem>>) -> (i32, i32) {
    %c0_i32 = arith.constant 0 : i32
    %c0_i32_0 = arith.constant 0 : i32
    %c0_i32_1 = arith.constant 0 : i32
    return %c0_i32, %c0_i32_0 : i32, i32
  }
  func.func @transform_23(%arg0: i32, %arg1: memref<1xi32, #tpu.memory_space<smem>>) -> (i32, i32) {
    %c0_i32 = arith.constant 0 : i32
    %c0_i32_0 = arith.constant 0 : i32
    %c0_i32_1 = arith.constant 0 : i32
    return %c0_i32, %c0_i32_0 : i32, i32
  }
  func.func @transform_24(%arg0: i32, %arg1: memref<1xi32, #tpu.memory_space<smem>>) -> (i32, i32) {
    %c0_i32 = arith.constant 0 : i32
    %c0_i32_0 = arith.constant 0 : i32
    %c0_i32_1 = arith.constant 0 : i32
    return %c0_i32, %c0_i32_0 : i32, i32
  }
  func.func @transform_25(%arg0: i32, %arg1: memref<1xi32, #tpu.memory_space<smem>>) -> (i32, i32) {
    %c0_i32 = arith.constant 0 : i32
    %c0_i32_0 = arith.constant 0 : i32
    %c0_i32_1 = arith.constant 0 : i32
    return %c0_i32, %c0_i32_0 : i32, i32
  }
  func.func @transform_26(%arg0: i32, %arg1: memref<1xi32, #tpu.memory_space<smem>>) -> (i32, i32) {
    %c0_i32 = arith.constant 0 : i32
    %c0_i32_0 = arith.constant 0 : i32
    %c0_i32_1 = arith.constant 0 : i32
    return %c0_i32, %c0_i32_0 : i32, i32
  }
  func.func @transform_27(%arg0: i32, %arg1: memref<1xi32, #tpu.memory_space<smem>>) -> (i32, i32) {
    %c0_i32 = arith.constant 0 : i32
    %c0_i32_0 = arith.constant 0 : i32
    %c0_i32_1 = arith.constant 0 : i32
    return %c0_i32, %c0_i32_0 : i32, i32
  }
  func.func @transform_28(%arg0: i32, %arg1: memref<1xi32, #tpu.memory_space<smem>>) -> (i32, i32) {
    %c0_i32 = arith.constant 0 : i32
    %c0_i32_0 = arith.constant 0 : i32
    %c0_i32_1 = arith.constant 0 : i32
    return %c0_i32, %c0_i32_0 : i32, i32
  }
  func.func @transform_29(%arg0: i32, %arg1: memref<1xi32, #tpu.memory_space<smem>>) -> (i32, i32) {
    %c0_i32 = arith.constant 0 : i32
    %c0_i32_0 = arith.constant 0 : i32
    %c0_i32_1 = arith.constant 0 : i32
    return %c0_i32, %c0_i32_0 : i32, i32
  }
  func.func @transform_30(%arg0: i32, %arg1: memref<1xi32, #tpu.memory_space<smem>>) -> (i32, i32) {
    %c0_i32 = arith.constant 0 : i32
    %c0_i32_0 = arith.constant 0 : i32
    %c0_i32_1 = arith.constant 0 : i32
    return %c0_i32, %c0_i32_0 : i32, i32
  }
  func.func @transform_31(%arg0: i32, %arg1: memref<1xi32, #tpu.memory_space<smem>>) -> (i32, i32, i32) {
    %c0 = arith.constant 0 : index
    %0 = memref.load %arg1[%c0] : memref<1xi32, #tpu.memory_space<smem>>
    %c0_i32 = arith.constant 0 : i32
    %c0_i32_0 = arith.constant 0 : i32
    %c0_i32_1 = arith.constant 0 : i32
    return %0, %c0_i32, %c0_i32_0 : i32, i32, i32
  }
  func.func @transform_32(%arg0: i32, %arg1: memref<1xi32, #tpu.memory_space<smem>>) -> (i32, i32, i32) {
    %c0 = arith.constant 0 : index
    %0 = memref.load %arg1[%c0] : memref<1xi32, #tpu.memory_space<smem>>
    %c0_i32 = arith.constant 0 : i32
    %c0_i32_0 = arith.constant 0 : i32
    %c0_i32_1 = arith.constant 0 : i32
    return %0, %c0_i32, %c0_i32_0 : i32, i32, i32
  }
  func.func @transform_33(%arg0: i32, %arg1: memref<1xi32, #tpu.memory_space<smem>>) -> (i32, i32) {
    %c0_i32 = arith.constant 0 : i32
    %c0_i32_0 = arith.constant 0 : i32
    %c0_i32_1 = arith.constant 0 : i32
    return %c0_i32, %c0_i32_0 : i32, i32
  }
  func.func @transform_34(%arg0: i32, %arg1: memref<1xi32, #tpu.memory_space<smem>>) -> (i32, i32) {
    %c0_i32 = arith.constant 0 : i32
    %c0_i32_0 = arith.constant 0 : i32
    %c0_i32_1 = arith.constant 0 : i32
    return %c0_i32, %c0_i32_0 : i32, i32
  }
  func.func @transform_35(%arg0: i32, %arg1: memref<1xi32, #tpu.memory_space<smem>>) -> (i32, i32) {
    %c0_i32 = arith.constant 0 : i32
    %c0_i32_0 = arith.constant 0 : i32
    %c0_i32_1 = arith.constant 0 : i32
    return %c0_i32, %c0_i32_0 : i32, i32
  }
}

</mosaic_0001>

<llo_original>
// kernel: semcom_forward.1
$region0: #{semcom_forward.1}
  #allocation0 [shape = 'u32[]', space=smem, size = 0x4, offset = 0x4, fixed_abs, tag = 'smem constant byte address 0x4 - core index']
  #allocation1 [shape = 'u32[144,128]{1,0:T(1,128)}', space=vmem, size = 0x12000, scoped, tag = 'internal scratch']
  #allocation2 [shape = 's32[1]{0}', space=sflag, size = 0x4, scoped, tag = 'scoped memory for semcom_forward.1']
  #allocation3 [shape = 's32[1]{0:T(128)S(6)}', space=smem, size = 0x200, scoped, tag = 'prefetched SMEM operand 0']
  %s0 = inlined_call_operand.smem [shape: u32[37], index: -1, kind: input, shape index: {}]
  %s1 = sld [smem:[%s0]]
  %s2 = scalar_lea.smem %s0, 1
  %s3 = sld [smem:[%s2]]
  %s4 = scalar_lea.smem %s0, 2
  %s5 = sld [smem:[%s4]]
  %s6 = scalar_lea.smem %s0, 3
  %s7 = sld [smem:[%s6]]
  %s8 = scalar_lea.smem %s0, 4
  %s9 = sld [smem:[%s8]]
  %s10 = scalar_lea.smem %s0, 5
  %s11 = sld [smem:[%s10]]
  %s12 = scalar_lea.smem %s0, 6
  %s13 = sld [smem:[%s12]]
  %s14 = scalar_lea.smem %s0, 7
  %s15 = sld [smem:[%s14]]
  %s16 = scalar_lea.smem %s0, 8
  %s17 = sld [smem:[%s16]]
  %s18 = scalar_lea.smem %s0, 9
  %s19 = sld [smem:[%s18]]
  %s20 = scalar_lea.smem %s0, 10
  %s21 = sld [smem:[%s20]]
  %s22 = scalar_lea.smem %s0, 11
  %s23 = sld [smem:[%s22]]
  %s24 = scalar_lea.smem %s0, 12
  %s25 = sld [smem:[%s24]]
  %s26 = scalar_lea.smem %s0, 13
  %s27 = sld [smem:[%s26]]
  %s28 = scalar_lea.smem %s0, 14
  %s29 = sld [smem:[%s28]]
  %s30 = scalar_lea.smem %s0, 15
  %s31 = sld [smem:[%s30]]
  %s32 = scalar_lea.smem %s0, 16
  %s33 = sld [smem:[%s32]]
  %s34 = scalar_lea.smem %s0, 17
  %s35 = sld [smem:[%s34]]
  %s36 = scalar_lea.smem %s0, 18
  %s37 = sld [smem:[%s36]]
  %s38 = scalar_lea.smem %s0, 19
  %s39 = sld [smem:[%s38]]
  %s40 = scalar_lea.smem %s0, 20
  %s41 = sld [smem:[%s40]]
  %s42 = scalar_lea.smem %s0, 21
  %s43 = sld [smem:[%s42]]
  %s44 = scalar_lea.smem %s0, 22
  %s45 = sld [smem:[%s44]]
  %s46 = scalar_lea.smem %s0, 23
  %s47 = sld [smem:[%s46]]
  %s48 = scalar_lea.smem %s0, 24
  %s49 = sld [smem:[%s48]]
  %s50 = scalar_lea.smem %s0, 25
  %s51 = sld [smem:[%s50]]
  %s52 = scalar_lea.smem %s0, 26
  %s53 = sld [smem:[%s52]]
  %s54 = scalar_lea.smem %s0, 27
  %s55 = sld [smem:[%s54]]
  %s56 = scalar_lea.smem %s0, 28
  %s57 = sld [smem:[%s56]]
  %s58 = scalar_lea.smem %s0, 29
  %s59 = sld [smem:[%s58]]
  %s60 = scalar_lea.smem %s0, 30
  %s61 = sld [smem:[%s60]]
  %s62 = scalar_lea.smem %s0, 31
  %s63 = sld [smem:[%s62]]
  %s64 = scalar_lea.smem %s0, 32
  %s65 = sld [smem:[%s64]]
  %s66 = scalar_lea.smem %s0, 33
  %s67 = sld [smem:[%s66]]
  %s68 = scalar_lea.smem %s0, 34
  %s69 = sld [smem:[%s68]]
  %s70 = scalar_lea.smem %s0, 35
  %s71 = sld [smem:[%s70]]
  %s72 = scalar_lea.smem %s0, 36
  %s73 = sld [smem:[%s72]]
  %74 = xla_tuple %s69, %s71, %s73
  %s75 = sld [smem:[#allocation0]]
  $region198: #{semcom_forward.1} parent=0
    _
  %s77 = ssub.s32 1, %s75
  %s78 = scalar_select 0, %s77, %s75
  %79 = sst [smem:[#allocation3]] %s1
  $region1: #{semcom_forward.1} parent=0
    #allocation4 [shape = 'u8[512]{0}', space=vmem, size = 0x400, scoped, tag = 'input window, operand 6, single buffered']
    #allocation5 [shape = 's32[1]{0}', space=sflag, size = 0x4, scoped, tag = 'scoped memory for semcom_forward.1']
    #allocation6 [shape = 's32[1]{0}', space=sflag, size = 0x4, scoped, tag = 'scoped memory for semcom_forward.1']
    #allocation7 [shape = 'u8[512]{0}', space=vmem, size = 0x400, scoped, tag = 'input window, operand 11, single buffered']
    #allocation8 [shape = 's32[1]{0}', space=sflag, size = 0x4, scoped, tag = 'scoped memory for semcom_forward.1']
    #allocation9 [shape = 'u8[512]{0}', space=vmem, size = 0x400, scoped, tag = 'input window, operand 12, single buffered']
    #allocation10 [shape = 'u8[512]{0}', space=vmem, size = 0x400, scoped, tag = 'input window, operand 13, single buffered']
    #allocation11 [shape = 's32[1]{0}', space=sflag, size = 0x4, scoped, tag = 'scoped memory for semcom_forward.1']
    #allocation12 [shape = 'u8[1024]{0}', space=vmem, size = 0x400, scoped, tag = 'input window, operand 15, single buffered']
    #allocation13 [shape = 'u8[512]{0}', space=vmem, size = 0x400, scoped, tag = 'input window, operand 17, single buffered']
    #allocation14 [shape = 's32[1]{0}', space=sflag, size = 0x4, scoped, tag = 'scoped memory for semcom_forward.1']
    #allocation15 [shape = 'u8[512]{0}', space=vmem, size = 0x400, scoped, tag = 'input window, operand 18, single buffered']
    #allocation16 [shape = 'u8[512]{0}', space=vmem, size = 0x400, scoped, tag = 'input window, operand 19, single buffered']
    #allocation17 [shape = 's32[1]{0}', space=sflag, size = 0x4, scoped, tag = 'scoped memory for semcom_forward.1']
    #allocation18 [shape = 'u8[512]{0}', space=vmem, size = 0x400, scoped, tag = 'input window, operand 30, single buffered']
    #allocation19 [shape = 'u8[512]{0}', space=vmem, size = 0x400, scoped, tag = 'input window, operand 31, single buffered']
    #allocation20 [shape = 's32[1]{0}', space=sflag, size = 0x4, scoped, tag = 'scoped memory for semcom_forward.1']
    #allocation21 [shape = 'u8[8192]{0}', space=vmem, size = 0x2000, scoped, tag = 'output window, operand 0, single buffered']
    #allocation22 [shape = 'u8[8192]{0}', space=vmem, size = 0x2000, scoped, tag = 'output window, operand 1, single buffered']
    #allocation23 [shape = 's32[1]{0}', space=sflag, size = 0x4, scoped, tag = 'scoped memory for semcom_forward.1']
    #allocation24 [shape = 'u8[8192]{0}', space=vmem, size = 0x2000, scoped, tag = 'output window, operand 2, single buffered']
    %80 = vsyncpa [#allocation5], 0
    %81 = vsyncpa [#allocation8], 0
    %82 = vsyncpa [#allocation11], 0
    %83 = vsyncpa [#allocation14], 0
    %84 = vsyncpa [#allocation17], 0
    %85 = vsyncpa [#allocation20], 0
    %86 = vsyncpa [#allocation6], 0
    %87 = vsyncpa [#allocation23], 0
    // Predicated region
    $region2: #{semcom_forward.1} parent=1 // pred_check
      _
    $region3: #{semcom_forward.1} parent=1 // pred_check_branch
      %89 = sbr.rel (0) target = $region5
    $region4: #{semcom_forward.1} parent=1 // pred_region
      _
    $region5: #{semcom_forward.1} parent=1 // pred_fallthru
      _
    // Predicated region
    $region6: #{semcom_forward.1} parent=1 // pred_check
      _
    $region7: #{semcom_forward.1} parent=1 // pred_check_branch
      %91 = sbr.rel (0) target = $region9
    $region8: #{semcom_forward.1} parent=1 // pred_region
      _
    $region9: #{semcom_forward.1} parent=1 // pred_fallthru
      _
    // Predicated region
    $region10: #{semcom_forward.1} parent=1 // pred_check
      _
    $region11: #{semcom_forward.1} parent=1 // pred_check_branch
      %93 = sbr.rel (0) target = $region13
    $region12: #{semcom_forward.1} parent=1 // pred_region
      _
    $region13: #{semcom_forward.1} parent=1 // pred_fallthru
      _
    // Predicated region
    $region14: #{semcom_forward.1} parent=1 // pred_check
      _
    $region15: #{semcom_forward.1} parent=1 // pred_check_branch
      %95 = sbr.rel (0) target = $region17
    $region16: #{semcom_forward.1} parent=1 // pred_region
      _
    $region17: #{semcom_forward.1} parent=1 // pred_fallthru
      _
    // Predicated region
    $region18: #{semcom_forward.1} parent=1 // pred_check
      _
    $region19: #{semcom_forward.1} parent=1 // pred_check_branch
      %97 = sbr.rel (0) target = $region21
    $region20: #{semcom_forward.1} parent=1 // pred_region
      _
    $region21: #{semcom_forward.1} parent=1 // pred_fallthru
      _
    // Predicated region
    $region22: #{semcom_forward.1} parent=1 // pred_check
      _
    $region23: #{semcom_forward.1} parent=1 // pred_check_branch
      %99 = sbr.rel (0) target = $region25
    $region24: #{semcom_forward.1} parent=1 // pred_region
      %s101 = ssub.s32 16, 16
      %102 = vsyncadd [#allocation5], %s101
      %s104 = sshll.u32 [#allocation4], 4
      %s105 = int_to_ptr.vmem [resolvable:$true] %s104
      %107 = dma.hbm_to_vmem [thread:$0]  %s13, 16, %s105, [#allocation5]
    $region25: #{semcom_forward.1} parent=1 // pred_fallthru
      _
    // Predicated region
    $region26: #{semcom_forward.1} parent=1 // pred_check
      _
    $region27: #{semcom_forward.1} parent=1 // pred_check_branch
      %109 = sbr.rel (0) target = $region29
    $region28: #{semcom_forward.1} parent=1 // pred_region
      %s110 = sld [smem:[#allocation3]]
      %p111 = scmp.lt.s32.totalorder %s110, 2
      %s112 = scalar_select %p111, %s110, 2
      %s113 = scalar_lea.vmem %s15, %s112
      %s114 = sld [smem:[#allocation3]]
    $region29: #{semcom_forward.1} parent=1 // pred_fallthru
      _
    // Predicated region
    $region30: #{semcom_forward.1} parent=1 // pred_check
      _
    $region31: #{semcom_forward.1} parent=1 // pred_check_branch
      %116 = sbr.rel (0) target = $region33
    $region32: #{semcom_forward.1} parent=1 // pred_region
      _
    $region33: #{semcom_forward.1} parent=1 // pred_fallthru
      _
    // Predicated region
    $region34: #{semcom_forward.1} parent=1 // pred_check
      _
    $region35: #{semcom_forward.1} parent=1 // pred_check_branch
      %118 = sbr.rel (0) target = $region37
    $region36: #{semcom_forward.1} parent=1 // pred_region
      _
    $region37: #{semcom_forward.1} parent=1 // pred_fallthru
      _
    // Predicated region
    $region38: #{semcom_forward.1} parent=1 // pred_check
      _
    $region39: #{semcom_forward.1} parent=1 // pred_check_branch
      %120 = sbr.rel (0) target = $region41
    $region40: #{semcom_forward.1} parent=1 // pred_region
      _
    $region41: #{semcom_forward.1} parent=1 // pred_fallthru
      _
    // Predicated region
    $region42: #{semcom_forward.1} parent=1 // pred_check
      _
    $region43: #{semcom_forward.1} parent=1 // pred_check_branch
      %122 = sbr.rel (0) target = $region45
    $region44: #{semcom_forward.1} parent=1 // pred_region
      %s124 = ssub.s32 16, 16
      %125 = vsyncadd [#allocation8], %s124
      %s127 = sshll.u32 [#allocation7], 4
      %s128 = int_to_ptr.vmem [resolvable:$true] %s127
      %130 = dma.hbm_to_vmem [thread:$0]  %s23, 16, %s128, [#allocation8]
    $region45: #{semcom_forward.1} parent=1 // pred_fallthru
      _
    // Predicated region
    $region46: #{semcom_forward.1} parent=1 // pred_check
      _
    $region47: #{semcom_forward.1} parent=1 // pred_check_branch
      %132 = sbr.rel (0) target = $region49
    $region48: #{semcom_forward.1} parent=1 // pred_region
      %s134 = ssub.s32 16, 16
      %135 = vsyncadd [#allocation8], %s134
      %s137 = sshll.u32 [#allocation9], 4
      %s138 = int_to_ptr.vmem [resolvable:$true] %s137
      %140 = dma.hbm_to_vmem [thread:$0]  %s25, 16, %s138, [#allocation8]
    $region49: #{semcom_forward.1} parent=1 // pred_fallthru
      _
    // Predicated region
    $region50: #{semcom_forward.1} parent=1 // pred_check
      _
    $region51: #{semcom_forward.1} parent=1 // pred_check_branch
      %142 = sbr.rel (0) target = $region53
    $region52: #{semcom_forward.1} parent=1 // pred_region
      %s144 = ssub.s32 16, 16
      %145 = vsyncadd [#allocation11], %s144
      %s147 = sshll.u32 [#allocation10], 4
      %s148 = int_to_ptr.vmem [resolvable:$true] %s147
      %150 = dma.hbm_to_vmem [thread:$0]  %s27, 16, %s148, [#allocation11]
    $region53: #{semcom_forward.1} parent=1 // pred_fallthru
      _
    // Predicated region
    $region54: #{semcom_forward.1} parent=1 // pred_check
      _
    $region55: #{semcom_forward.1} parent=1 // pred_check_branch
      %152 = sbr.rel (0) target = $region57
    $region56: #{semcom_forward.1} parent=1 // pred_region
      _
    $region57: #{semcom_forward.1} parent=1 // pred_fallthru
      _
    // Predicated region
    $region58: #{semcom_forward.1} parent=1 // pred_check
      _
    $region59: #{semcom_forward.1} parent=1 // pred_check_branch
      %154 = sbr.rel (0) target = $region61
    $region60: #{semcom_forward.1} parent=1 // pred_region
      %s156 = ssub.s32 32, 32
      %157 = vsyncadd [#allocation11], %s156
      %s159 = sshll.u32 [#allocation12], 4
      %s160 = int_to_ptr.vmem [resolvable:$true] %s159
      %162 = dma.hbm_to_vmem [thread:$0]  %s31, 32, %s160, [#allocation11]
    $region61: #{semcom_forward.1} parent=1 // pred_fallthru
      _
    // Predicated region
    $region62: #{semcom_forward.1} parent=1 // pred_check
      _
    $region63: #{semcom_forward.1} parent=1 // pred_check_branch
      %164 = sbr.rel (0) target = $region65
    $region64: #{semcom_forward.1} parent=1 // pred_region
      _
    $region65: #{semcom_forward.1} parent=1 // pred_fallthru
      _
    // Predicated region
    $region66: #{semcom_forward.1} parent=1 // pred_check
      _
    $region67: #{semcom_forward.1} parent=1 // pred_check_branch
      %166 = sbr.rel (0) target = $region69
    $region68: #{semcom_forward.1} parent=1 // pred_region
      %s168 = ssub.s32 16, 16
      %169 = vsyncadd [#allocation14], %s168
      %s171 = sshll.u32 [#allocation13], 4
      %s172 = int_to_ptr.vmem [resolvable:$true] %s171
      %174 = dma.hbm_to_vmem [thread:$0]  %s35, 16, %s172, [#allocation14]
    $region69: #{semcom_forward.1} parent=1 // pred_fallthru
      _
    // Predicated region
    $region70: #{semcom_forward.1} parent=1 // pred_check
      _
    $region71: #{semcom_forward.1} parent=1 // pred_check_branch
      %176 = sbr.rel (0) target = $region73
    $region72: #{semcom_forward.1} parent=1 // pred_region
      %s178 = ssub.s32 16, 16
      %179 = vsyncadd [#allocation14], %s178
      %s181 = sshll.u32 [#allocation15], 4
      %s182 = int_to_ptr.vmem [resolvable:$true] %s181
      %184 = dma.hbm_to_vmem [thread:$0]  %s37, 16, %s182, [#allocation14]
    $region73: #{semcom_forward.1} parent=1 // pred_fallthru
      _
    // Predicated region
    $region74: #{semcom_forward.1} parent=1 // pred_check
      _
    $region75: #{semcom_forward.1} parent=1 // pred_check_branch
      %186 = sbr.rel (0) target = $region77
    $region76: #{semcom_forward.1} parent=1 // pred_region
      %s188 = ssub.s32 16, 16
      %189 = vsyncadd [#allocation17], %s188
      %s191 = sshll.u32 [#allocation16], 4
      %s192 = int_to_ptr.vmem [resolvable:$true] %s191
      %194 = dma.hbm_to_vmem [thread:$0]  %s39, 16, %s192, [#allocation17]
    $region77: #{semcom_forward.1} parent=1 // pred_fallthru
      _
    // Predicated region
    $region78: #{semcom_forward.1} parent=1 // pred_check
      _
    $region79: #{semcom_forward.1} parent=1 // pred_check_branch
      %196 = sbr.rel (0) target = $region81
    $region80: #{semcom_forward.1} parent=1 // pred_region
      _
    $region81: #{semcom_forward.1} parent=1 // pred_fallthru
      _
    // Predicated region
    $region82: #{semcom_forward.1} parent=1 // pred_check
      _
    $region83: #{semcom_forward.1} parent=1 // pred_check_branch
      %198 = sbr.rel (0) target = $region85
    $region84: #{semcom_forward.1} parent=1 // pred_region
      _
    $region85: #{semcom_forward.1} parent=1 // pred_fallthru
      _
    // Predicated region
    $region86: #{semcom_forward.1} parent=1 // pred_check
      _
    $region87: #{semcom_forward.1} parent=1 // pred_check_branch
      %200 = sbr.rel (0) target = $region89
    $region88: #{semcom_forward.1} parent=1 // pred_region
      _
    $region89: #{semcom_forward.1} parent=1 // pred_fallthru
      _
    // Predicated region
    $region90: #{semcom_forward.1} parent=1 // pred_check
      _
    $region91: #{semcom_forward.1} parent=1 // pred_check_branch
      %202 = sbr.rel (0) target = $region93
    $region92: #{semcom_forward.1} parent=1 // pred_region
      _
    $region93: #{semcom_forward.1} parent=1 // pred_fallthru
      _
    // Predicated region
    $region94: #{semcom_forward.1} parent=1 // pred_check
      _
    $region95: #{semcom_forward.1} parent=1 // pred_check_branch
      %204 = sbr.rel (0) target = $region97
    $region96: #{semcom_forward.1} parent=1 // pred_region
      _
    $region97: #{semcom_forward.1} parent=1 // pred_fallthru
      _
    // Predicated region
    $region98: #{semcom_forward.1} parent=1 // pred_check
      _
    $region99: #{semcom_forward.1} parent=1 // pred_check_branch
      %206 = sbr.rel (0) target = $region101
    $region100: #{semcom_forward.1} parent=1 // pred_region
      _
    $region101: #{semcom_forward.1} parent=1 // pred_fallthru
      _
    // Predicated region
    $region102: #{semcom_forward.1} parent=1 // pred_check
      _
    $region103: #{semcom_forward.1} parent=1 // pred_check_branch
      %208 = sbr.rel (0) target = $region105
    $region104: #{semcom_forward.1} parent=1 // pred_region
      _
    $region105: #{semcom_forward.1} parent=1 // pred_fallthru
      _
    // Predicated region
    $region106: #{semcom_forward.1} parent=1 // pred_check
      _
    $region107: #{semcom_forward.1} parent=1 // pred_check_branch
      %210 = sbr.rel (0) target = $region109
    $region108: #{semcom_forward.1} parent=1 // pred_region
      _
    $region109: #{semcom_forward.1} parent=1 // pred_fallthru
      _
    // Predicated region
    $region110: #{semcom_forward.1} parent=1 // pred_check
      _
    $region111: #{semcom_forward.1} parent=1 // pred_check_branch
      %212 = sbr.rel (0) target = $region113
    $region112: #{semcom_forward.1} parent=1 // pred_region
      _
    $region113: #{semcom_forward.1} parent=1 // pred_fallthru
      _
    // Predicated region
    $region114: #{semcom_forward.1} parent=1 // pred_check
      _
    $region115: #{semcom_forward.1} parent=1 // pred_check_branch
      %214 = sbr.rel (0) target = $region117
    $region116: #{semcom_forward.1} parent=1 // pred_region
      _
    $region117: #{semcom_forward.1} parent=1 // pred_fallthru
      _
    // Predicated region
    $region118: #{semcom_forward.1} parent=1 // pred_check
      _
    $region119: #{semcom_forward.1} parent=1 // pred_check_branch
      %216 = sbr.rel (0) target = $region121
    $region120: #{semcom_forward.1} parent=1 // pred_region
      %s218 = ssub.s32 16, 16
      %219 = vsyncadd [#allocation17], %s218
      %s221 = sshll.u32 [#allocation18], 4
      %s222 = int_to_ptr.vmem [resolvable:$true] %s221
      %224 = dma.hbm_to_vmem [thread:$0]  %s61, 16, %s222, [#allocation17]
    $region121: #{semcom_forward.1} parent=1 // pred_fallthru
      _
    // Predicated region
    $region122: #{semcom_forward.1} parent=1 // pred_check
      _
    $region123: #{semcom_forward.1} parent=1 // pred_check_branch
      %226 = sbr.rel (0) target = $region125
    $region124: #{semcom_forward.1} parent=1 // pred_region
      %s228 = ssub.s32 16, 16
      %229 = vsyncadd [#allocation20], %s228
      %s231 = sshll.u32 [#allocation19], 4
      %s232 = int_to_ptr.vmem [resolvable:$true] %s231
      %234 = dma.hbm_to_vmem [thread:$0]  %s63, 16, %s232, [#allocation20]
    $region125: #{semcom_forward.1} parent=1 // pred_fallthru
      _
    // Predicated region
    $region126: #{semcom_forward.1} parent=1 // pred_check
      _
    $region127: #{semcom_forward.1} parent=1 // pred_check_branch
      %236 = sbr.rel (0) target = $region129
    $region128: #{semcom_forward.1} parent=1 // pred_region
      %s237 = sld [smem:[#allocation3]]
      %p238 = scmp.lt.s32.totalorder %s237, 2
      %s239 = scalar_select %p238, %s237, 2
      %s240 = smul.addr %s239, 6
      %s241 = smul.addr %s240, 4
      %s242 = scalar_lea.vmem %s65, %s241
      %s243 = sld [smem:[#allocation3]]
    $region129: #{semcom_forward.1} parent=1 // pred_fallthru
      _
    // Predicated region
    $region130: #{semcom_forward.1} parent=1 // pred_check
      _
    $region131: #{semcom_forward.1} parent=1 // pred_check_branch
      %245 = sbr.rel (0) target = $region133
    $region132: #{semcom_forward.1} parent=1 // pred_region
      %s246 = sld [smem:[#allocation3]]
      %p247 = scmp.lt.s32.totalorder %s246, 2
      %s248 = scalar_select %p247, %s246, 2
      %s249 = scalar_lea.vmem %s67, %s248
      %s250 = sld [smem:[#allocation3]]
    $region133: #{semcom_forward.1} parent=1 // pred_fallthru
      _
    // Predicated region
    $region134: #{semcom_forward.1} parent=1 // pred_check
      _
    $region135: #{semcom_forward.1} parent=1 // pred_check_branch
      %252 = sbr.rel (0) target = $region137
    $region136: #{semcom_forward.1} parent=1 // pred_region
      %253 = dma.done [#allocation5], 16
    $region137: #{semcom_forward.1} parent=1 // pred_fallthru
      _
    // Predicated region
    $region138: #{semcom_forward.1} parent=1 // pred_check
      _
    $region139: #{semcom_forward.1} parent=1 // pred_check_branch
      %255 = sbr.rel (0) target = $region141
    $region140: #{semcom_forward.1} parent=1 // pred_region
      %256 = dma.done [#allocation8], 16
    $region141: #{semcom_forward.1} parent=1 // pred_fallthru
      _
    // Predicated region
    $region142: #{semcom_forward.1} parent=1 // pred_check
      _
    $region143: #{semcom_forward.1} parent=1 // pred_check_branch
      %258 = sbr.rel (0) target = $region145
    $region144: #{semcom_forward.1} parent=1 // pred_region
      %259 = dma.done [#allocation8], 16
    $region145: #{semcom_forward.1} parent=1 // pred_fallthru
      _
    // Predicated region
    $region146: #{semcom_forward.1} parent=1 // pred_check
      _
    $region147: #{semcom_forward.1} parent=1 // pred_check_branch
      %261 = sbr.rel (0) target = $region149
    $region148: #{semcom_forward.1} parent=1 // pred_region
      %262 = dma.done [#allocation11], 16
    $region149: #{semcom_forward.1} parent=1 // pred_fallthru
      _
    // Predicated region
    $region150: #{semcom_forward.1} parent=1 // pred_check
      _
    $region151: #{semcom_forward.1} parent=1 // pred_check_branch
      %264 = sbr.rel (0) target = $region153
    $region152: #{semcom_forward.1} parent=1 // pred_region
      %265 = dma.done [#allocation11], 32
    $region153: #{semcom_forward.1} parent=1 // pred_fallthru
      _
    // Predicated region
    $region154: #{semcom_forward.1} parent=1 // pred_check
      _
    $region155: #{semcom_forward.1} parent=1 // pred_check_branch
      %267 = sbr.rel (0) target = $region157
    $region156: #{semcom_forward.1} parent=1 // pred_region
      %268 = dma.done [#allocation14], 16
    $region157: #{semcom_forward.1} parent=1 // pred_fallthru
      _
    // Predicated region
    $region158: #{semcom_forward.1} parent=1 // pred_check
      _
    $region159: #{semcom_forward.1} parent=1 // pred_check_branch
      %270 = sbr.rel (0) target = $region161
    $region160: #{semcom_forward.1} parent=1 // pred_region
      %271 = dma.done [#allocation14], 16
    $region161: #{semcom_forward.1} parent=1 // pred_fallthru
      _
    // Predicated region
    $region162: #{semcom_forward.1} parent=1 // pred_check
      _
    $region163: #{semcom_forward.1} parent=1 // pred_check_branch
      %273 = sbr.rel (0) target = $region165
    $region164: #{semcom_forward.1} parent=1 // pred_region
      %274 = dma.done [#allocation17], 16
    $region165: #{semcom_forward.1} parent=1 // pred_fallthru
      _
    // Predicated region
    $region166: #{semcom_forward.1} parent=1 // pred_check
      _
    $region167: #{semcom_forward.1} parent=1 // pred_check_branch
      %276 = sbr.rel (0) target = $region169
    $region168: #{semcom_forward.1} parent=1 // pred_region
      %277 = dma.done [#allocation17], 16
    $region169: #{semcom_forward.1} parent=1 // pred_fallthru
      _
    // Predicated region
    $region170: #{semcom_forward.1} parent=1 // pred_check
      _
    $region171: #{semcom_forward.1} parent=1 // pred_check_branch
      %279 = sbr.rel (0) target = $region173
    $region172: #{semcom_forward.1} parent=1 // pred_region
      %280 = dma.done [#allocation20], 16
    $region173: #{semcom_forward.1} parent=1 // pred_fallthru
      _
    %s281 = sld [smem:[#allocation3]]
    %p282 = scmp.lt.s32.totalorder %s281, 2
    %s283 = scalar_select %p282, %s281, 2
    %s284 = scalar_lea.vmem %s15, %s283
    %s285 = sld [smem:[#allocation3]]
    %p286 = scmp.lt.s32.totalorder %s285, 2
    %s287 = scalar_select %p286, %s285, 2
    %s288 = smul.addr %s287, 6
    %s289 = smul.addr %s288, 4
    %s290 = scalar_lea.vmem %s65, %s289
    %s291 = sld [smem:[#allocation3]]
    %p292 = scmp.lt.s32.totalorder %s291, 2
    %s293 = scalar_select %p292, %s291, 2
    %s294 = scalar_lea.vmem %s67, %s293
    %s295 = sld [smem:[#allocation3]]
    %p296 = scmp.lt.s32.totalorder %s295, 2
    %s297 = scalar_select %p296, %s295, 2
    %s298 = scalar_lea.vmem %s15, %s297
    %s299 = sld [smem:[#allocation3]]
    %s300 = sld [smem:[#allocation3]]
    %p301 = scmp.lt.s32.totalorder %s300, 2
    %s302 = scalar_select %p301, %s300, 2
    %s303 = smul.addr %s302, 6
    %s304 = smul.addr %s303, 4
    %s305 = scalar_lea.vmem %s65, %s304
    %s306 = sld [smem:[#allocation3]]
    %s307 = sld [smem:[#allocation3]]
    %p308 = scmp.lt.s32.totalorder %s307, 2
    %s309 = scalar_select %p308, %s307, 2
    %s310 = scalar_lea.vmem %s67, %s309
    %s311 = sld [smem:[#allocation3]]
    %v313 = vld [vmem:[%s3] sm:$0xff]
    %v314 = vld [vmem:[%s3 + $0x8] sm:$0xff]
    %v315 = vlaneseq
    %v316 = vand.u32 %v315, 127
    %317 = vset.pattern.permute.xlu0 0
    %318 = vperm.xlu0 %317, %v313
    %v319 = vpop.permute.xlu0 %318
    %320 = vset.pattern.permute.xlu0 0
    %321 = vperm.xlu0 %320, %v314
    %v322 = vpop.permute.xlu0 %321
    %vm323 = vcmp.eq.s32.totalorder %v316, %v319
    %vm324 = vcmp.eq.s32.totalorder %v316, %v322
    %v325 = vsel %vm323, 1.0, 0.0
    %v326 = vsel %vm324, 1.0, 0.0
    %v327 = vpack.c.bf16 %v326, %v325
    %v328 = vld [vmem:[%s9] sm:$0xf]
    %v329 = vld [vmem:[%s9 + $0x4] sm:$0xf]
    %v330 = vld [vmem:[%s9 + $0x8] sm:$0xf]
    %v331 = vld [vmem:[%s9 + $0xc] sm:$0xf]
    %v332 = vld [vmem:[%s9 + $0x10] sm:$0xf]
    %v333 = vld [vmem:[%s9 + $0x14] sm:$0xf]
    %v334 = vld [vmem:[%s9 + $0x18] sm:$0xf]
    %v335 = vld [vmem:[%s9 + $0x1c] sm:$0xf]
    %v344 = vunpack.c.l.b16 %v328
    %v345 = vunpack.c.l.b16 %v329
    %v346 = vunpack.c.l.b16 %v330
    %v347 = vunpack.c.l.b16 %v331
    %v348 = vunpack.c.l.b16 %v332
    %v349 = vunpack.c.l.b16 %v333
    %v350 = vunpack.c.l.b16 %v334
    %v351 = vunpack.c.l.b16 %v335
    %v352 = vpack.c.b16 %v345, %v344
    %v353 = vpack.c.b16 %v347, %v346
    %v354 = vpack.c.b16 %v349, %v348
    %v355 = vpack.c.b16 %v351, %v350
    %vm360 = vcmask 523264
    %v362 = vsel %vm360, %v327, 0
    %364 = vmatprep.subr.bf16.mxu0 0
    %365 = vmatpush1.bf16.msra.mxu0 0
    %366 = vmatprep.subr.bf16.mxu0 0
    %367 = vmatpush1.bf16.msra.mxu0 0
    %368 = vmatprep.subr.bf16.mxu0 0
    %369 = vmatpush1.bf16.msra.mxu0 0
    %370 = vmatprep.subr.bf16.mxu0 0
    %371 = vmatpush1.bf16.msra.mxu0 0
    %372 = vmatprep.subr.bf16.mxu0 0
    %373 = vmatpush1.bf16.msra.mxu0 %v355
    %374 = vmatprep.subr.bf16.mxu0 0
    %375 = vmatpush1.bf16.msra.mxu0 %v354
    %376 = vmatprep.subr.bf16.mxu0 0
    %377 = vmatpush1.bf16.msra.mxu0 %v353
    %378 = vmatprep.subr.bf16.mxu0 0
    %379 = vmatpush1.bf16.msra.mxu0 %v352
    %380 = vmatprep.subr.bf16.mxu0 0
    %381 = vmatpush2.bf16.msra.mxu0 0
    %382 = vmatprep.subr.bf16.mxu0 0
    %383 = vmatpush2.bf16.msra.mxu0 0
    %384 = vmatprep.subr.bf16.mxu0 0
    %385 = vmatpush2.bf16.msra.mxu0 0
    %386 = vmatprep.subr.bf16.mxu0 0
    %387 = vmatpush2.bf16.msra.mxu0 0
    %388 = vmatprep.subr.bf16.mxu0 0
    %389 = vmatpush2.bf16.msra.mxu0 0
    %390 = vmatprep.subr.bf16.mxu0 0
    %391 = vmatpush2.bf16.msra.mxu0 0
    %392 = vmatprep.subr.bf16.mxu0 0
    %393 = vmatpush2.bf16.msra.mxu0 0
    %394 = vmatprep.subr.bf16.mxu0 0
    %395 = vmatpush2.bf16.msra.mxu0 0
    %396 = vmatprep.mubr.bf16.mxu0 0
    %397 = vmatmul.mubr.bf16.gmra.mxu0 %v362
    %v398 = vpop.f32.mrf.mxu0
    %v399 = vadd.f32 0.0, %v398
    %v400 = vpop.f32.mrf.mxu0
    %v401 = vpop.f32.mrf.mxu0
    %v402 = vadd.f32 0.0, %v401
    %v403 = vpop.f32.mrf.mxu0
    %404 = vdwg.mxu0
    %v405 = vpack.c.bf16 %v402, %v399
    %v406 = vld [vmem:[%s11] sm:$0xf]
    %v407 = vld [vmem:[%s11 + $0x4] sm:$0xf]
    %v408 = vld [vmem:[%s11 + $0x8] sm:$0xf]
    %v409 = vld [vmem:[%s11 + $0xc] sm:$0xf]
    %v410 = vld [vmem:[#allocation4] sm:$0x1]
    %v412 = vlaneseq
    %v413 = vshrl.u32 %v412, 7
    %v414 = vsub.s32 0, %v413
    %v415 = vrot.slane %v410, %v414
    %v421 = vunpack.c.l.b16 %v406
    %v422 = vunpack.c.l.b16 %v407
    %v423 = vunpack.c.l.b16 %v408
    %v424 = vunpack.c.l.b16 %v409
    %v425 = vpack.c.b16 %v422, %v421
    %v426 = vpack.c.b16 %v424, %v423
    %vm429 = vcmask 261120
    %v431 = vsel %vm429, %v405, 0
    %433 = vmatprep.subr.bf16.mxu0 0
    %434 = vmatpush1.bf16.msra.mxu0 0
    %435 = vmatprep.subr.bf16.mxu0 0
    %436 = vmatpush1.bf16.msra.mxu0 0
    %437 = vmatprep.subr.bf16.mxu0 0
    %438 = vmatpush1.bf16.msra.mxu0 0
    %439 = vmatprep.subr.bf16.mxu0 0
    %440 = vmatpush1.bf16.msra.mxu0 0
    %441 = vmatprep.subr.bf16.mxu0 0
    %442 = vmatpush1.bf16.msra.mxu0 0
    %443 = vmatprep.subr.bf16.mxu0 0
    %444 = vmatpush1.bf16.msra.mxu0 0
    %445 = vmatprep.subr.bf16.mxu0 0
    %446 = vmatpush1.bf16.msra.mxu0 %v426
    %447 = vmatprep.subr.bf16.mxu0 0
    %448 = vmatpush1.bf16.msra.mxu0 %v425
    %449 = vmatprep.subr.bf16.mxu0 0
    %450 = vmatpush2.bf16.msra.mxu0 0
    %451 = vmatprep.subr.bf16.mxu0 0
    %452 = vmatpush2.bf16.msra.mxu0 0
    %453 = vmatprep.subr.bf16.mxu0 0
    %454 = vmatpush2.bf16.msra.mxu0 0
    %455 = vmatprep.subr.bf16.mxu0 0
    %456 = vmatpush2.bf16.msra.mxu0 0
    %457 = vmatprep.subr.bf16.mxu0 0
    %458 = vmatpush2.bf16.msra.mxu0 0
    %459 = vmatprep.subr.bf16.mxu0 0
    %460 = vmatpush2.bf16.msra.mxu0 0
    %461 = vmatprep.subr.bf16.mxu0 0
    %462 = vmatpush2.bf16.msra.mxu0 0
    %463 = vmatprep.subr.bf16.mxu0 0
    %464 = vmatpush2.bf16.msra.mxu0 0
    %465 = vmatprep.mubr.bf16.mxu0 0
    %466 = vmatmul.mubr.bf16.gmra.mxu0 %v431
    %v467 = vpop.f32.mrf.mxu0
    %v468 = vadd.f32 %v415, %v467
    %v469 = vpop.f32.mrf.mxu0
    %v470 = vpop.f32.mrf.mxu0
    %v471 = vadd.f32 %v415, %v470
    %v472 = vpop.f32.mrf.mxu0
    %473 = vdwg.mxu0
    %v474 = vld [vmem:[%s298] sm:$0x1]
    %v476 = vlaneseq
    %v477 = vshrl.u32 %v476, 7
    %v478 = vsub.s32 0, %v477
    %v479 = vrot.slane %v474, %v478
    %480 = vrot.lane.b32.xlu0 %v479, 32
    %v481 = vpop.permute.xlu0 %480
    %v483 = vsel %vm429, %v468, %v481
    %v484 = vsel %vm429, %v471, %v481
    %v485 = vld [vmem:[%s5] sm:$0x3]
    %v486 = vsub.f32 %v485, 1.0
    %v487 = vmul.f32 %v486, 1e+09
    %v488 = vpack.c.bf16 %v484, %v483
    %v489 = vld [vmem:[%s17] sm:$0xff]
    %v490 = vld [vmem:[%s17 + $0x8] sm:$0xff]
    %v491 = vld [vmem:[%s17 + $0x10] sm:$0xff]
    %v492 = vld [vmem:[%s17 + $0x18] sm:$0xff]
    %v493 = vld [vmem:[%s17 + $0x20] sm:$0xff]
    %v494 = vld [vmem:[%s17 + $0x28] sm:$0xff]
    %v495 = vld [vmem:[%s19] sm:$0x3]
    %v497 = vlaneseq
    %v498 = vshrl.u32 %v497, 7
    %v499 = vsub.s32 0, %v498
    %v500 = vrot.slane %v495, %v499
    %v501 = vlaneseq
    %v502 = vshrl.u32 %v501, 7
    %v503 = vsub.s32 1, %v502
    %v504 = vrot.slane %v495, %v503
    %v513 = vunpack.c.l.b16 %v489
    %v514 = vunpack.c.h.b16 %v489
    %v515 = vunpack.c.l.b16 %v490
    %v516 = vunpack.c.h.b16 %v490
    %v517 = vunpack.c.l.b16 %v491
    %v518 = vunpack.c.h.b16 %v491
    %v519 = vunpack.c.l.b16 %v492
    %v520 = vunpack.c.h.b16 %v492
    %v521 = vunpack.c.l.b16 %v493
    %v522 = vunpack.c.h.b16 %v493
    %v523 = vunpack.c.l.b16 %v494
    %v524 = vunpack.c.h.b16 %v494
    %v525 = vpack.c.b16 %v515, %v513
    %v526 = vpack.c.b16 %v516, %v514
    %v527 = vpack.c.b16 %v519, %v517
    %v528 = vpack.c.b16 %v520, %v518
    %v529 = vpack.c.b16 %v523, %v521
    %v530 = vpack.c.b16 %v524, %v522
    %vm537 = vcmask 392192
    %v539 = vsel %vm537, %v488, 0
    %541 = vmatprep.subr.bf16.mxu0 0
    %542 = vmatpush1.bf16.msra.mxu0 0
    %543 = vmatprep.subr.bf16.mxu0 0
    %544 = vmatpush1.bf16.msra.mxu0 0
    %545 = vmatprep.subr.bf16.mxu0 0
    %546 = vmatpush1.bf16.msra.mxu0 0
    %547 = vmatprep.subr.bf16.mxu0 0
    %548 = vmatpush1.bf16.msra.mxu0 0
    %549 = vmatprep.subr.bf16.mxu0 0
    %550 = vmatpush1.bf16.msra.mxu0 0
    %551 = vmatprep.subr.bf16.mxu0 %v530
    %552 = vmatpush1.bf16.msra.mxu0 %v529
    %553 = vmatprep.subr.bf16.mxu0 %v528
    %554 = vmatpush1.bf16.msra.mxu0 %v527
    %555 = vmatprep.subr.bf16.mxu0 %v526
    %556 = vmatpush1.bf16.msra.mxu0 %v525
    %557 = vmatprep.subr.bf16.mxu0 0
    %558 = vmatpush2.bf16.msra.mxu0 0
    %559 = vmatprep.subr.bf16.mxu0 0
    %560 = vmatpush2.bf16.msra.mxu0 0
    %561 = vmatprep.subr.bf16.mxu0 0
    %562 = vmatpush2.bf16.msra.mxu0 0
    %563 = vmatprep.subr.bf16.mxu0 0
    %564 = vmatpush2.bf16.msra.mxu0 0
    %565 = vmatprep.subr.bf16.mxu0 0
    %566 = vmatpush2.bf16.msra.mxu0 0
    %567 = vmatprep.subr.bf16.mxu0 0
    %568 = vmatpush2.bf16.msra.mxu0 0
    %569 = vmatprep.subr.bf16.mxu0 0
    %570 = vmatpush2.bf16.msra.mxu0 0
    %571 = vmatprep.subr.bf16.mxu0 0
    %572 = vmatpush2.bf16.msra.mxu0 0
    %573 = vmatprep.mubr.bf16.mxu0 0
    %574 = vmatmul.mubr.bf16.gmra.mxu0 %v539
    %v575 = vpop.f32.mrf.mxu0
    %v576 = vadd.f32 %v500, %v575
    %v577 = vpop.f32.mrf.mxu0
    %v578 = vadd.f32 %v504, %v577
    %v579 = vpop.f32.mrf.mxu0
    %v580 = vadd.f32 %v500, %v579
    %v581 = vpop.f32.mrf.mxu0
    %v582 = vadd.f32 %v504, %v581
    %583 = vdwg.mxu0
    %v584 = vpack.c.bf16 %v576, %v576
    %v585 = vpack.c.bf16 %v580, %v580
    %587 = vrot.lane.b32.xlu0 %v584, 80
    %v588 = vpop.permute.xlu0 %587
    %vm589 = vcmask 97280
    %v591 = vsel %vm589, %v584, 0
    %v594 = vsel %vm589, %v588, 0
    %596 = vmatprep.subr.bf16.mxu0 0
    %597 = vmatpush1.bf16.xpose.msra.mxu0 0
    %598 = vmatprep.subr.bf16.mxu0 0
    %599 = vmatpush1.bf16.xpose.msra.mxu0 0
    %600 = vmatprep.subr.bf16.mxu0 0
    %601 = vmatpush1.bf16.xpose.msra.mxu0 0
    %602 = vmatprep.subr.bf16.mxu0 0
    %603 = vmatpush1.bf16.xpose.msra.mxu0 0
    %604 = vmatprep.subr.bf16.mxu0 0
    %605 = vmatpush1.bf16.xpose.msra.mxu0 0
    %606 = vmatprep.subr.bf16.mxu0 0
    %607 = vmatpush1.bf16.xpose.msra.mxu0 0
    %608 = vmatprep.subr.bf16.mxu0 0
    %609 = vmatpush1.bf16.xpose.msra.mxu0 0
    %610 = vmatprep.subr.bf16.mxu0 0
    %611 = vmatpush1.bf16.xpose.msra.mxu0 %v594
    %612 = vmatprep.subr.bf16.mxu0 0
    %613 = vmatpush2.bf16.xpose.msra.mxu0 0
    %614 = vmatprep.subr.bf16.mxu0 0
    %615 = vmatpush2.bf16.xpose.msra.mxu0 0
    %616 = vmatprep.subr.bf16.mxu0 0
    %617 = vmatpush2.bf16.xpose.msra.mxu0 0
    %618 = vmatprep.subr.bf16.mxu0 0
    %619 = vmatpush2.bf16.xpose.msra.mxu0 0
    %620 = vmatprep.subr.bf16.mxu0 0
    %621 = vmatpush2.bf16.xpose.msra.mxu0 0
    %622 = vmatprep.subr.bf16.mxu0 0
    %623 = vmatpush2.bf16.xpose.msra.mxu0 0
    %624 = vmatprep.subr.bf16.mxu0 0
    %625 = vmatpush2.bf16.xpose.msra.mxu0 0
    %626 = vmatprep.subr.bf16.mxu0 0
    %627 = vmatpush2.bf16.xpose.msra.mxu0 0
    %628 = vmatprep.mubr.bf16.mxu0 0
    %629 = vmatmul.mubr.bf16.gmra.mxu0 %v591
    %v630 = vpop.f32.mrf.mxu0
    %v631 = vadd.f32 0.0, %v630
    %v632 = vpop.f32.mrf.mxu0
    %v633 = vpop.f32.mrf.mxu0
    %v634 = vpop.f32.mrf.mxu0
    %635 = vdwg.mxu0
    %637 = vrot.lane.b32.xlu0 %v585, 80
    %v638 = vpop.permute.xlu0 %637
    %v640 = vsel %vm589, %v585, 0
    %v643 = vsel %vm589, %v638, 0
    %645 = vmatprep.subr.bf16.mxu0 0
    %646 = vmatpush1.bf16.xpose.msra.mxu0 0
    %647 = vmatprep.subr.bf16.mxu0 0
    %648 = vmatpush1.bf16.xpose.msra.mxu0 0
    %649 = vmatprep.subr.bf16.mxu0 0
    %650 = vmatpush1.bf16.xpose.msra.mxu0 0
    %651 = vmatprep.subr.bf16.mxu0 0
    %652 = vmatpush1.bf16.xpose.msra.mxu0 0
    %653 = vmatprep.subr.bf16.mxu0 0
    %654 = vmatpush1.bf16.xpose.msra.mxu0 0
    %655 = vmatprep.subr.bf16.mxu0 0
    %656 = vmatpush1.bf16.xpose.msra.mxu0 0
    %657 = vmatprep.subr.bf16.mxu0 0
    %658 = vmatpush1.bf16.xpose.msra.mxu0 0
    %659 = vmatprep.subr.bf16.mxu0 0
    %660 = vmatpush1.bf16.xpose.msra.mxu0 %v643
    %661 = vmatprep.subr.bf16.mxu0 0
    %662 = vmatpush2.bf16.xpose.msra.mxu0 0
    %663 = vmatprep.subr.bf16.mxu0 0
    %664 = vmatpush2.bf16.xpose.msra.mxu0 0
    %665 = vmatprep.subr.bf16.mxu0 0
    %666 = vmatpush2.bf16.xpose.msra.mxu0 0
    %667 = vmatprep.subr.bf16.mxu0 0
    %668 = vmatpush2.bf16.xpose.msra.mxu0 0
    %669 = vmatprep.subr.bf16.mxu0 0
    %670 = vmatpush2.bf16.xpose.msra.mxu0 0
    %671 = vmatprep.subr.bf16.mxu0 0
    %672 = vmatpush2.bf16.xpose.msra.mxu0 0
    %673 = vmatprep.subr.bf16.mxu0 0
    %674 = vmatpush2.bf16.xpose.msra.mxu0 0
    %675 = vmatprep.subr.bf16.mxu0 0
    %676 = vmatpush2.bf16.xpose.msra.mxu0 0
    %677 = vmatprep.mubr.bf16.mxu0 0
    %678 = vmatmul.mubr.bf16.gmra.mxu0 %v640
    %v679 = vpop.f32.mrf.mxu0
    %v680 = vadd.f32 0.0, %v679
    %v681 = vpop.f32.mrf.mxu0
    %v682 = vpop.f32.mrf.mxu0
    %v683 = vpop.f32.mrf.mxu0
    %684 = vdwg.mxu0
    %v685 = vmul.f32 %v631, 0.28867513
    %v686 = vmul.f32 %v680, 0.28867513
    %v689 = vunpack.c.l.s4 1966171168
    %v690 = vunpack.c.0.s8 %v689
    %v691 = vlaneseq
    %v692 = vshrl.u32 %v691, 7
    %v693 = vsub.s32 %v690, %v692
    %v694 = vrot.slane %v487, %v693
    %v695 = vcombine.high %v694, %v694
    %v697 = vunpack.c.l.s4 1966171168
    %v698 = vunpack.c.0.s8 %v697
    %v699 = vlaneseq
    %v700 = vshrl.u32 %v699, 7
    %v701 = vsub.s32 %v698, %v700
    %v702 = vrot.slane %v694, %v701
    %v704 = vunpack.c.l.s4 1966171168
    %v705 = vunpack.c.0.s8 %v704
    %v706 = vlaneseq
    %v707 = vshrl.u32 %v706, 7
    %v708 = vsub.s32 %v705, %v707
    %v709 = vrot.slane %v695, %v708
    %v710 = vlaneseq
    %v711 = vshrl.u32 %v710, 7
    %v712 = vsub.s32 0, %v711
    %v713 = vrot.slane %v702, %v712
    %v714 = vlaneseq
    %v715 = vshrl.u32 %v714, 7
    %v716 = vsub.s32 0, %v715
    %v717 = vrot.slane %v709, %v716
    %v720 = vadd.f32 %v685, %v713
    %v721 = vadd.f32 %v686, %v717
    %vm722 = vcmask 64512
    %v723 = vsel %vm722, %v720, -inf
    %724 = vmax.xlane.f32.xlu0 %v723
    %v725 = vpop.xlane.xlu0 %724
    %v726 = vsel %vm722, %v721, -inf
    %727 = vmax.xlane.f32.xlu0 %v726
    %v728 = vpop.xlane.xlu0 %727
    %v729 = vsub.f32 %v720, %v725
    %v730 = vsub.f32 %v721, %v728
    %v731 = vmul.f32 %v729, 1.442695
    %v732 = vpow.pop %v731
    %v733 = vmul.f32 %v730, 1.442695
    %v734 = vpow.pop %v733
    %v735 = vsel %vm722, %v732, 0.0
    %736 = vadd.xlane.f32.xlu0 %v735
    %v737 = vpop.xlane.xlu0 %736
    %v738 = vsel %vm722, %v734, 0.0
    %739 = vadd.xlane.f32.xlu0 %v738
    %v740 = vpop.xlane.xlu0 %739
    %v741 = vrcp.pop %v737
    %v742 = vrcp.pop %v740
    %v743 = vmul.f32 %v732, %v741
    %v744 = vmul.f32 %v734, %v742
    %v745 = vpack.c.bf16 %v743, %v743
    %v746 = vpack.c.bf16 %v744, %v744
    %747 = vrot.lane.b32.xlu0 %v584, 32
    %v748 = vpop.permute.xlu0 %747
    %v750 = vsel %vm722, %v745, 0
    %vm752 = vcmask 1043456
    %v754 = vsel %vm752, %v748, 0
    %756 = vmatprep.subr.bf16.mxu0 0
    %757 = vmatpush1.bf16.msra.mxu0 0
    %758 = vmatprep.subr.bf16.mxu0 0
    %759 = vmatpush1.bf16.msra.mxu0 0
    %760 = vmatprep.subr.bf16.mxu0 0
    %761 = vmatpush1.bf16.msra.mxu0 0
    %762 = vmatprep.subr.bf16.mxu0 0
    %763 = vmatpush1.bf16.msra.mxu0 0
    %764 = vmatprep.subr.bf16.mxu0 0
    %765 = vmatpush1.bf16.msra.mxu0 0
    %766 = vmatprep.subr.bf16.mxu0 0
    %767 = vmatpush1.bf16.msra.mxu0 0
    %768 = vmatprep.subr.bf16.mxu0 0
    %769 = vmatpush1.bf16.msra.mxu0 0
    %770 = vmatprep.subr.bf16.mxu0 0
    %771 = vmatpush1.bf16.msra.mxu0 %v754
    %772 = vmatprep.subr.bf16.mxu0 0
    %773 = vmatpush2.bf16.msra.mxu0 0
    %774 = vmatprep.subr.bf16.mxu0 0
    %775 = vmatpush2.bf16.msra.mxu0 0
    %776 = vmatprep.subr.bf16.mxu0 0
    %777 = vmatpush2.bf16.msra.mxu0 0
    %778 = vmatprep.subr.bf16.mxu0 0
    %779 = vmatpush2.bf16.msra.mxu0 0
    %780 = vmatprep.subr.bf16.mxu0 0
    %781 = vmatpush2.bf16.msra.mxu0 0
    %782 = vmatprep.subr.bf16.mxu0 0
    %783 = vmatpush2.bf16.msra.mxu0 0
    %784 = vmatprep.subr.bf16.mxu0 0
    %785 = vmatpush2.bf16.msra.mxu0 0
    %786 = vmatprep.subr.bf16.mxu0 0
    %787 = vmatpush2.bf16.msra.mxu0 0
    %788 = vmatprep.mubr.bf16.mxu0 0
    %789 = vmatmul.mubr.bf16.gmra.mxu0 %v750
    %v790 = vpop.f32.mrf.mxu0
    %v791 = vadd.f32 0.0, %v790
    %v792 = vpop.f32.mrf.mxu0
    %v793 = vpop.f32.mrf.mxu0
    %v794 = vpop.f32.mrf.mxu0
    %795 = vdwg.mxu0
    %796 = vrot.lane.b32.xlu0 %v585, 32
    %v797 = vpop.permute.xlu0 %796
    %v799 = vsel %vm722, %v746, 0
    %v802 = vsel %vm752, %v797, 0
    %804 = vmatprep.subr.bf16.mxu0 0
    %805 = vmatpush1.bf16.msra.mxu0 0
    %806 = vmatprep.subr.bf16.mxu0 0
    %807 = vmatpush1.bf16.msra.mxu0 0
    %808 = vmatprep.subr.bf16.mxu0 0
    %809 = vmatpush1.bf16.msra.mxu0 0
    %810 = vmatprep.subr.bf16.mxu0 0
    %811 = vmatpush1.bf16.msra.mxu0 0
    %812 = vmatprep.subr.bf16.mxu0 0
    %813 = vmatpush1.bf16.msra.mxu0 0
    %814 = vmatprep.subr.bf16.mxu0 0
    %815 = vmatpush1.bf16.msra.mxu0 0
    %816 = vmatprep.subr.bf16.mxu0 0
    %817 = vmatpush1.bf16.msra.mxu0 0
    %818 = vmatprep.subr.bf16.mxu0 0
    %819 = vmatpush1.bf16.msra.mxu0 %v802
    %820 = vmatprep.subr.bf16.mxu0 0
    %821 = vmatpush2.bf16.msra.mxu0 0
    %822 = vmatprep.subr.bf16.mxu0 0
    %823 = vmatpush2.bf16.msra.mxu0 0
    %824 = vmatprep.subr.bf16.mxu0 0
    %825 = vmatpush2.bf16.msra.mxu0 0
    %826 = vmatprep.subr.bf16.mxu0 0
    %827 = vmatpush2.bf16.msra.mxu0 0
    %828 = vmatprep.subr.bf16.mxu0 0
    %829 = vmatpush2.bf16.msra.mxu0 0
    %830 = vmatprep.subr.bf16.mxu0 0
    %831 = vmatpush2.bf16.msra.mxu0 0
    %832 = vmatprep.subr.bf16.mxu0 0
    %833 = vmatpush2.bf16.msra.mxu0 0
    %834 = vmatprep.subr.bf16.mxu0 0
    %835 = vmatpush2.bf16.msra.mxu0 0
    %836 = vmatprep.mubr.bf16.mxu0 0
    %837 = vmatmul.mubr.bf16.gmra.mxu0 %v799
    %v838 = vpop.f32.mrf.mxu0
    %v839 = vadd.f32 0.0, %v838
    %v840 = vpop.f32.mrf.mxu0
    %v841 = vpop.f32.mrf.mxu0
    %v842 = vpop.f32.mrf.mxu0
    %843 = vdwg.mxu0
    %844 = vrot.lane.b32.xlu0 %v584, 116
    %v845 = vpop.permute.xlu0 %844
    %846 = vrot.lane.b32.xlu0 %v584, 68
    %v847 = vpop.permute.xlu0 %846
    %v849 = vsel %vm589, %v845, 0
    %v852 = vsel %vm589, %v847, 0
    %854 = vmatprep.subr.bf16.mxu0 0
    %855 = vmatpush1.bf16.xpose.msra.mxu0 0
    %856 = vmatprep.subr.bf16.mxu0 0
    %857 = vmatpush1.bf16.xpose.msra.mxu0 0
    %858 = vmatprep.subr.bf16.mxu0 0
    %859 = vmatpush1.bf16.xpose.msra.mxu0 0
    %860 = vmatprep.subr.bf16.mxu0 0
    %861 = vmatpush1.bf16.xpose.msra.mxu0 0
    %862 = vmatprep.subr.bf16.mxu0 0
    %863 = vmatpush1.bf16.xpose.msra.mxu0 0
    %864 = vmatprep.subr.bf16.mxu0 0
    %865 = vmatpush1.bf16.xpose.msra.mxu0 0
    %866 = vmatprep.subr.bf16.mxu0 0
    %867 = vmatpush1.bf16.xpose.msra.mxu0 0
    %868 = vmatprep.subr.bf16.mxu0 0
    %869 = vmatpush1.bf16.xpose.msra.mxu0 %v852
    %870 = vmatprep.subr.bf16.mxu0 0
    %871 = vmatpush2.bf16.xpose.msra.mxu0 0
    %872 = vmatprep.subr.bf16.mxu0 0
    %873 = vmatpush2.bf16.xpose.msra.mxu0 0
    %874 = vmatprep.subr.bf16.mxu0 0
    %875 = vmatpush2.bf16.xpose.msra.mxu0 0
    %876 = vmatprep.subr.bf16.mxu0 0
    %877 = vmatpush2.bf16.xpose.msra.mxu0 0
    %878 = vmatprep.subr.bf16.mxu0 0
    %879 = vmatpush2.bf16.xpose.msra.mxu0 0
    %880 = vmatprep.subr.bf16.mxu0 0
    %881 = vmatpush2.bf16.xpose.msra.mxu0 0
    %882 = vmatprep.subr.bf16.mxu0 0
    %883 = vmatpush2.bf16.xpose.msra.mxu0 0
    %884 = vmatprep.subr.bf16.mxu0 0
    %885 = vmatpush2.bf16.xpose.msra.mxu0 0
    %886 = vmatprep.mubr.bf16.mxu0 0
    %887 = vmatmul.mubr.bf16.gmra.mxu0 %v849
    %v888 = vpop.f32.mrf.mxu0
    %v889 = vadd.f32 0.0, %v888
    %v890 = vpop.f32.mrf.mxu0
    %v891 = vpop.f32.mrf.mxu0
    %v892 = vpop.f32.mrf.mxu0
    %893 = vdwg.mxu0
    %894 = vrot.lane.b32.xlu0 %v585, 116
    %v895 = vpop.permute.xlu0 %894
    %896 = vrot.lane.b32.xlu0 %v585, 68
    %v897 = vpop.permute.xlu0 %896
    %v899 = vsel %vm589, %v895, 0
    %v902 = vsel %vm589, %v897, 0
    %904 = vmatprep.subr.bf16.mxu0 0
    %905 = vmatpush1.bf16.xpose.msra.mxu0 0
    %906 = vmatprep.subr.bf16.mxu0 0
    %907 = vmatpush1.bf16.xpose.msra.mxu0 0
    %908 = vmatprep.subr.bf16.mxu0 0
    %909 = vmatpush1.bf16.xpose.msra.mxu0 0
    %910 = vmatprep.subr.bf16.mxu0 0
    %911 = vmatpush1.bf16.xpose.msra.mxu0 0
    %912 = vmatprep.subr.bf16.mxu0 0
    %913 = vmatpush1.bf16.xpose.msra.mxu0 0
    %914 = vmatprep.subr.bf16.mxu0 0
    %915 = vmatpush1.bf16.xpose.msra.mxu0 0
    %916 = vmatprep.subr.bf16.mxu0 0
    %917 = vmatpush1.bf16.xpose.msra.mxu0 0
    %918 = vmatprep.subr.bf16.mxu0 0
    %919 = vmatpush1.bf16.xpose.msra.mxu0 %v902
    %920 = vmatprep.subr.bf16.mxu0 0
    %921 = vmatpush2.bf16.xpose.msra.mxu0 0
    %922 = vmatprep.subr.bf16.mxu0 0
    %923 = vmatpush2.bf16.xpose.msra.mxu0 0
    %924 = vmatprep.subr.bf16.mxu0 0
    %925 = vmatpush2.bf16.xpose.msra.mxu0 0
    %926 = vmatprep.subr.bf16.mxu0 0
    %927 = vmatpush2.bf16.xpose.msra.mxu0 0
    %928 = vmatprep.subr.bf16.mxu0 0
    %929 = vmatpush2.bf16.xpose.msra.mxu0 0
    %930 = vmatprep.subr.bf16.mxu0 0
    %931 = vmatpush2.bf16.xpose.msra.mxu0 0
    %932 = vmatprep.subr.bf16.mxu0 0
    %933 = vmatpush2.bf16.xpose.msra.mxu0 0
    %934 = vmatprep.subr.bf16.mxu0 0
    %935 = vmatpush2.bf16.xpose.msra.mxu0 0
    %936 = vmatprep.mubr.bf16.mxu0 0
    %937 = vmatmul.mubr.bf16.gmra.mxu0 %v899
    %v938 = vpop.f32.mrf.mxu0
    %v939 = vadd.f32 0.0, %v938
    %v940 = vpop.f32.mrf.mxu0
    %v941 = vpop.f32.mrf.mxu0
    %v942 = vpop.f32.mrf.mxu0
    %943 = vdwg.mxu0
    %v944 = vmul.f32 %v889, 0.28867513
    %v945 = vmul.f32 %v939, 0.28867513
    %v946 = vadd.f32 %v944, %v713
    %v947 = vadd.f32 %v945, %v717
    %v948 = vsel %vm722, %v946, -inf
    %949 = vmax.xlane.f32.xlu0 %v948
    %v950 = vpop.xlane.xlu0 %949
    %v951 = vsel %vm722, %v947, -inf
    %952 = vmax.xlane.f32.xlu0 %v951
    %v953 = vpop.xlane.xlu0 %952
    %v954 = vsub.f32 %v946, %v950
    %v955 = vsub.f32 %v947, %v953
    %v956 = vmul.f32 %v954, 1.442695
    %v957 = vpow.pop %v956
    %v958 = vmul.f32 %v955, 1.442695
    %v959 = vpow.pop %v958
    %v960 = vsel %vm722, %v957, 0.0
    %961 = vadd.xlane.f32.xlu0 %v960
    %v962 = vpop.xlane.xlu0 %961
    %v963 = vsel %vm722, %v959, 0.0
    %964 = vadd.xlane.f32.xlu0 %v963
    %v965 = vpop.xlane.xlu0 %964
    %v966 = vrcp.pop %v962
    %v967 = vrcp.pop %v965
    %v968 = vmul.f32 %v957, %v966
    %v969 = vmul.f32 %v959, %v967
    %v970 = vpack.c.bf16 %v968, %v968
    %v971 = vpack.c.bf16 %v969, %v969
    %972 = vrot.lane.b32.xlu0 %v584, 20
    %v973 = vpop.permute.xlu0 %972
    %v975 = vsel %vm722, %v970, 0
    %v978 = vsel %vm752, %v973, 0
    %980 = vmatprep.subr.bf16.mxu0 0
    %981 = vmatpush1.bf16.msra.mxu0 0
    %982 = vmatprep.subr.bf16.mxu0 0
    %983 = vmatpush1.bf16.msra.mxu0 0
    %984 = vmatprep.subr.bf16.mxu0 0
    %985 = vmatpush1.bf16.msra.mxu0 0
    %986 = vmatprep.subr.bf16.mxu0 0
    %987 = vmatpush1.bf16.msra.mxu0 0
    %988 = vmatprep.subr.bf16.mxu0 0
    %989 = vmatpush1.bf16.msra.mxu0 0
    %990 = vmatprep.subr.bf16.mxu0 0
    %991 = vmatpush1.bf16.msra.mxu0 0
    %992 = vmatprep.subr.bf16.mxu0 0
    %993 = vmatpush1.bf16.msra.mxu0 0
    %994 = vmatprep.subr.bf16.mxu0 0
    %995 = vmatpush1.bf16.msra.mxu0 %v978
    %996 = vmatprep.subr.bf16.mxu0 0
    %997 = vmatpush2.bf16.msra.mxu0 0
    %998 = vmatprep.subr.bf16.mxu0 0
    %999 = vmatpush2.bf16.msra.mxu0 0
    %1000 = vmatprep.subr.bf16.mxu0 0
    %1001 = vmatpush2.bf16.msra.mxu0 0
    %1002 = vmatprep.subr.bf16.mxu0 0
    %1003 = vmatpush2.bf16.msra.mxu0 0
    %1004 = vmatprep.subr.bf16.mxu0 0
    %1005 = vmatpush2.bf16.msra.mxu0 0
    %1006 = vmatprep.subr.bf16.mxu0 0
    %1007 = vmatpush2.bf16.msra.mxu0 0
    %1008 = vmatprep.subr.bf16.mxu0 0
    %1009 = vmatpush2.bf16.msra.mxu0 0
    %1010 = vmatprep.subr.bf16.mxu0 0
    %1011 = vmatpush2.bf16.msra.mxu0 0
    %1012 = vmatprep.mubr.bf16.mxu0 0
    %1013 = vmatmul.mubr.bf16.gmra.mxu0 %v975
    %v1014 = vpop.f32.mrf.mxu0
    %v1015 = vadd.f32 0.0, %v1014
    %v1016 = vpop.f32.mrf.mxu0
    %v1017 = vpop.f32.mrf.mxu0
    %v1018 = vpop.f32.mrf.mxu0
    %1019 = vdwg.mxu0
    %1020 = vrot.lane.b32.xlu0 %v585, 20
    %v1021 = vpop.permute.xlu0 %1020
    %v1023 = vsel %vm722, %v971, 0
    %v1026 = vsel %vm752, %v1021, 0
    %1028 = vmatprep.subr.bf16.mxu0 0
    %1029 = vmatpush1.bf16.msra.mxu0 0
    %1030 = vmatprep.subr.bf16.mxu0 0
    %1031 = vmatpush1.bf16.msra.mxu0 0
    %1032 = vmatprep.subr.bf16.mxu0 0
    %1033 = vmatpush1.bf16.msra.mxu0 0
    %1034 = vmatprep.subr.bf16.mxu0 0
    %1035 = vmatpush1.bf16.msra.mxu0 0
    %1036 = vmatprep.subr.bf16.mxu0 0
    %1037 = vmatpush1.bf16.msra.mxu0 0
    %1038 = vmatprep.subr.bf16.mxu0 0
    %1039 = vmatpush1.bf16.msra.mxu0 0
    %1040 = vmatprep.subr.bf16.mxu0 0
    %1041 = vmatpush1.bf16.msra.mxu0 0
    %1042 = vmatprep.subr.bf16.mxu0 0
    %1043 = vmatpush1.bf16.msra.mxu0 %v1026
    %1044 = vmatprep.subr.bf16.mxu0 0
    %1045 = vmatpush2.bf16.msra.mxu0 0
    %1046 = vmatprep.subr.bf16.mxu0 0
    %1047 = vmatpush2.bf16.msra.mxu0 0
    %1048 = vmatprep.subr.bf16.mxu0 0
    %1049 = vmatpush2.bf16.msra.mxu0 0
    %1050 = vmatprep.subr.bf16.mxu0 0
    %1051 = vmatpush2.bf16.msra.mxu0 0
    %1052 = vmatprep.subr.bf16.mxu0 0
    %1053 = vmatpush2.bf16.msra.mxu0 0
    %1054 = vmatprep.subr.bf16.mxu0 0
    %1055 = vmatpush2.bf16.msra.mxu0 0
    %1056 = vmatprep.subr.bf16.mxu0 0
    %1057 = vmatpush2.bf16.msra.mxu0 0
    %1058 = vmatprep.subr.bf16.mxu0 0
    %1059 = vmatpush2.bf16.msra.mxu0 0
    %1060 = vmatprep.mubr.bf16.mxu0 0
    %1061 = vmatmul.mubr.bf16.gmra.mxu0 %v1023
    %v1062 = vpop.f32.mrf.mxu0
    %v1063 = vadd.f32 0.0, %v1062
    %v1064 = vpop.f32.mrf.mxu0
    %v1065 = vpop.f32.mrf.mxu0
    %v1066 = vpop.f32.mrf.mxu0
    %1067 = vdwg.mxu0
    %1068 = vrot.lane.b32.xlu0 %v584, 104
    %v1069 = vpop.permute.xlu0 %1068
    %1070 = vrot.lane.b32.xlu0 %v584, 56
    %v1071 = vpop.permute.xlu0 %1070
    %v1073 = vsel %vm589, %v1069, 0
    %v1076 = vsel %vm589, %v1071, 0
    %1078 = vmatprep.subr.bf16.mxu0 0
    %1079 = vmatpush1.bf16.xpose.msra.mxu0 0
    %1080 = vmatprep.subr.bf16.mxu0 0
    %1081 = vmatpush1.bf16.xpose.msra.mxu0 0
    %1082 = vmatprep.subr.bf16.mxu0 0
    %1083 = vmatpush1.bf16.xpose.msra.mxu0 0
    %1084 = vmatprep.subr.bf16.mxu0 0
    %1085 = vmatpush1.bf16.xpose.msra.mxu0 0
    %1086 = vmatprep.subr.bf16.mxu0 0
    %1087 = vmatpush1.bf16.xpose.msra.mxu0 0
    %1088 = vmatprep.subr.bf16.mxu0 0
    %1089 = vmatpush1.bf16.xpose.msra.mxu0 0
    %1090 = vmatprep.subr.bf16.mxu0 0
    %1091 = vmatpush1.bf16.xpose.msra.mxu0 0
    %1092 = vmatprep.subr.bf16.mxu0 0
    %1093 = vmatpush1.bf16.xpose.msra.mxu0 %v1076
    %1094 = vmatprep.subr.bf16.mxu0 0
    %1095 = vmatpush2.bf16.xpose.msra.mxu0 0
    %1096 = vmatprep.subr.bf16.mxu0 0
    %1097 = vmatpush2.bf16.xpose.msra.mxu0 0
    %1098 = vmatprep.subr.bf16.mxu0 0
    %1099 = vmatpush2.bf16.xpose.msra.mxu0 0
    %1100 = vmatprep.subr.bf16.mxu0 0
    %1101 = vmatpush2.bf16.xpose.msra.mxu0 0
    %1102 = vmatprep.subr.bf16.mxu0 0
    %1103 = vmatpush2.bf16.xpose.msra.mxu0 0
    %1104 = vmatprep.subr.bf16.mxu0 0
    %1105 = vmatpush2.bf16.xpose.msra.mxu0 0
    %1106 = vmatprep.subr.bf16.mxu0 0
    %1107 = vmatpush2.bf16.xpose.msra.mxu0 0
    %1108 = vmatprep.subr.bf16.mxu0 0
    %1109 = vmatpush2.bf16.xpose.msra.mxu0 0
    %1110 = vmatprep.mubr.bf16.mxu0 0
    %1111 = vmatmul.mubr.bf16.gmra.mxu0 %v1073
    %v1112 = vpop.f32.mrf.mxu0
    %v1113 = vadd.f32 0.0, %v1112
    %v1114 = vpop.f32.mrf.mxu0
    %v1115 = vpop.f32.mrf.mxu0
    %v1116 = vpop.f32.mrf.mxu0
    %1117 = vdwg.mxu0
    %1118 = vrot.lane.b32.xlu0 %v585, 104
    %v1119 = vpop.permute.xlu0 %1118
    %1120 = vrot.lane.b32.xlu0 %v585, 56
    %v1121 = vpop.permute.xlu0 %1120
    %v1123 = vsel %vm589, %v1119, 0
    %v1126 = vsel %vm589, %v1121, 0
    %1128 = vmatprep.subr.bf16.mxu0 0
    %1129 = vmatpush1.bf16.xpose.msra.mxu0 0
    %1130 = vmatprep.subr.bf16.mxu0 0
    %1131 = vmatpush1.bf16.xpose.msra.mxu0 0
    %1132 = vmatprep.subr.bf16.mxu0 0
    %1133 = vmatpush1.bf16.xpose.msra.mxu0 0
    %1134 = vmatprep.subr.bf16.mxu0 0
    %1135 = vmatpush1.bf16.xpose.msra.mxu0 0
    %1136 = vmatprep.subr.bf16.mxu0 0
    %1137 = vmatpush1.bf16.xpose.msra.mxu0 0
    %1138 = vmatprep.subr.bf16.mxu0 0
    %1139 = vmatpush1.bf16.xpose.msra.mxu0 0
    %1140 = vmatprep.subr.bf16.mxu0 0
    %1141 = vmatpush1.bf16.xpose.msra.mxu0 0
    %1142 = vmatprep.subr.bf16.mxu0 0
    %1143 = vmatpush1.bf16.xpose.msra.mxu0 %v1126
    %1144 = vmatprep.subr.bf16.mxu0 0
    %1145 = vmatpush2.bf16.xpose.msra.mxu0 0
    %1146 = vmatprep.subr.bf16.mxu0 0
    %1147 = vmatpush2.bf16.xpose.msra.mxu0 0
    %1148 = vmatprep.subr.bf16.mxu0 0
    %1149 = vmatpush2.bf16.xpose.msra.mxu0 0
    %1150 = vmatprep.subr.bf16.mxu0 0
    %1151 = vmatpush2.bf16.xpose.msra.mxu0 0
    %1152 = vmatprep.subr.bf16.mxu0 0
    %1153 = vmatpush2.bf16.xpose.msra.mxu0 0
    %1154 = vmatprep.subr.bf16.mxu0 0
    %1155 = vmatpush2.bf16.xpose.msra.mxu0 0
    %1156 = vmatprep.subr.bf16.mxu0 0
    %1157 = vmatpush2.bf16.xpose.msra.mxu0 0
    %1158 = vmatprep.subr.bf16.mxu0 0
    %1159 = vmatpush2.bf16.xpose.msra.mxu0 0
    %1160 = vmatprep.mubr.bf16.mxu0 0
    %1161 = vmatmul.mubr.bf16.gmra.mxu0 %v1123
    %v1162 = vpop.f32.mrf.mxu0
    %v1163 = vadd.f32 0.0, %v1162
    %v1164 = vpop.f32.mrf.mxu0
    %v1165 = vpop.f32.mrf.mxu0
    %v1166 = vpop.f32.mrf.mxu0
    %1167 = vdwg.mxu0
    %v1168 = vmul.f32 %v1113, 0.28867513
    %v1169 = vmul.f32 %v1163, 0.28867513
    %v1170 = vadd.f32 %v1168, %v713
    %v1171 = vadd.f32 %v1169, %v717
    %v1172 = vsel %vm722, %v1170, -inf
    %1173 = vmax.xlane.f32.xlu0 %v1172
    %v1174 = vpop.xlane.xlu0 %1173
    %v1175 = vsel %vm722, %v1171, -inf
    %1176 = vmax.xlane.f32.xlu0 %v1175
    %v1177 = vpop.xlane.xlu0 %1176
    %v1178 = vsub.f32 %v1170, %v1174
    %v1179 = vsub.f32 %v1171, %v1177
    %v1180 = vmul.f32 %v1178, 1.442695
    %v1181 = vpow.pop %v1180
    %v1182 = vmul.f32 %v1179, 1.442695
    %v1183 = vpow.pop %v1182
    %v1184 = vsel %vm722, %v1181, 0.0
    %1185 = vadd.xlane.f32.xlu0 %v1184
    %v1186 = vpop.xlane.xlu0 %1185
    %v1187 = vsel %vm722, %v1183, 0.0
    %1188 = vadd.xlane.f32.xlu0 %v1187
    %v1189 = vpop.xlane.xlu0 %1188
    %v1190 = vrcp.pop %v1186
    %v1191 = vrcp.pop %v1189
    %v1192 = vmul.f32 %v1181, %v1190
    %v1193 = vmul.f32 %v1183, %v1191
    %v1194 = vpack.c.bf16 %v1192, %v1192
    %v1195 = vpack.c.bf16 %v1193, %v1193
    %v1196 = vpack.c.bf16 %v578, %v578
    %v1197 = vpack.c.bf16 %v582, %v582
    %1199 = vrot.lane.b32.xlu0 %v584, 8
    %v1200 = vpop.permute.xlu0 %1199
    %1201 = vrot.lane.b32.xlu0 %v1196, 8
    %v1202 = vpop.permute.xlu0 %1201
    %vm1203 = vcmask 64512
    %v1204 = vsel %vm1203, %v1200, %v1202
    %v1206 = vsel %vm722, %v1194, 0
    %v1209 = vsel %vm752, %v1204, 0
    %1211 = vmatprep.subr.bf16.mxu0 0
    %1212 = vmatpush1.bf16.msra.mxu0 0
    %1213 = vmatprep.subr.bf16.mxu0 0
    %1214 = vmatpush1.bf16.msra.mxu0 0
    %1215 = vmatprep.subr.bf16.mxu0 0
    %1216 = vmatpush1.bf16.msra.mxu0 0
    %1217 = vmatprep.subr.bf16.mxu0 0
    %1218 = vmatpush1.bf16.msra.mxu0 0
    %1219 = vmatprep.subr.bf16.mxu0 0
    %1220 = vmatpush1.bf16.msra.mxu0 0
    %1221 = vmatprep.subr.bf16.mxu0 0
    %1222 = vmatpush1.bf16.msra.mxu0 0
    %1223 = vmatprep.subr.bf16.mxu0 0
    %1224 = vmatpush1.bf16.msra.mxu0 0
    %1225 = vmatprep.subr.bf16.mxu0 0
    %1226 = vmatpush1.bf16.msra.mxu0 %v1209
    %1227 = vmatprep.subr.bf16.mxu0 0
    %1228 = vmatpush2.bf16.msra.mxu0 0
    %1229 = vmatprep.subr.bf16.mxu0 0
    %1230 = vmatpush2.bf16.msra.mxu0 0
    %1231 = vmatprep.subr.bf16.mxu0 0
    %1232 = vmatpush2.bf16.msra.mxu0 0
    %1233 = vmatprep.subr.bf16.mxu0 0
    %1234 = vmatpush2.bf16.msra.mxu0 0
    %1235 = vmatprep.subr.bf16.mxu0 0
    %1236 = vmatpush2.bf16.msra.mxu0 0
    %1237 = vmatprep.subr.bf16.mxu0 0
    %1238 = vmatpush2.bf16.msra.mxu0 0
    %1239 = vmatprep.subr.bf16.mxu0 0
    %1240 = vmatpush2.bf16.msra.mxu0 0
    %1241 = vmatprep.subr.bf16.mxu0 0
    %1242 = vmatpush2.bf16.msra.mxu0 0
    %1243 = vmatprep.mubr.bf16.mxu0 0
    %1244 = vmatmul.mubr.bf16.gmra.mxu0 %v1206
    %v1245 = vpop.f32.mrf.mxu0
    %v1246 = vadd.f32 0.0, %v1245
    %v1247 = vpop.f32.mrf.mxu0
    %v1248 = vpop.f32.mrf.mxu0
    %v1249 = vpop.f32.mrf.mxu0
    %1250 = vdwg.mxu0
    %1252 = vrot.lane.b32.xlu0 %v585, 8
    %v1253 = vpop.permute.xlu0 %1252
    %1254 = vrot.lane.b32.xlu0 %v1197, 8
    %v1255 = vpop.permute.xlu0 %1254
    %v1256 = vsel %vm1203, %v1253, %v1255
    %v1258 = vsel %vm722, %v1195, 0
    %v1261 = vsel %vm752, %v1256, 0
    %1263 = vmatprep.subr.bf16.mxu0 0
    %1264 = vmatpush1.bf16.msra.mxu0 0
    %1265 = vmatprep.subr.bf16.mxu0 0
    %1266 = vmatpush1.bf16.msra.mxu0 0
    %1267 = vmatprep.subr.bf16.mxu0 0
    %1268 = vmatpush1.bf16.msra.mxu0 0
    %1269 = vmatprep.subr.bf16.mxu0 0
    %1270 = vmatpush1.bf16.msra.mxu0 0
    %1271 = vmatprep.subr.bf16.mxu0 0
    %1272 = vmatpush1.bf16.msra.mxu0 0
    %1273 = vmatprep.subr.bf16.mxu0 0
    %1274 = vmatpush1.bf16.msra.mxu0 0
    %1275 = vmatprep.subr.bf16.mxu0 0
    %1276 = vmatpush1.bf16.msra.mxu0 0
    %1277 = vmatprep.subr.bf16.mxu0 0
    %1278 = vmatpush1.bf16.msra.mxu0 %v1261
    %1279 = vmatprep.subr.bf16.mxu0 0
    %1280 = vmatpush2.bf16.msra.mxu0 0
    %1281 = vmatprep.subr.bf16.mxu0 0
    %1282 = vmatpush2.bf16.msra.mxu0 0
    %1283 = vmatprep.subr.bf16.mxu0 0
    %1284 = vmatpush2.bf16.msra.mxu0 0
    %1285 = vmatprep.subr.bf16.mxu0 0
    %1286 = vmatpush2.bf16.msra.mxu0 0
    %1287 = vmatprep.subr.bf16.mxu0 0
    %1288 = vmatpush2.bf16.msra.mxu0 0
    %1289 = vmatprep.subr.bf16.mxu0 0
    %1290 = vmatpush2.bf16.msra.mxu0 0
    %1291 = vmatprep.subr.bf16.mxu0 0
    %1292 = vmatpush2.bf16.msra.mxu0 0
    %1293 = vmatprep.subr.bf16.mxu0 0
    %1294 = vmatpush2.bf16.msra.mxu0 0
    %1295 = vmatprep.mubr.bf16.mxu0 0
    %1296 = vmatmul.mubr.bf16.gmra.mxu0 %v1258
    %v1297 = vpop.f32.mrf.mxu0
    %v1298 = vadd.f32 0.0, %v1297
    %v1299 = vpop.f32.mrf.mxu0
    %v1300 = vpop.f32.mrf.mxu0
    %v1301 = vpop.f32.mrf.mxu0
    %1302 = vdwg.mxu0
    %1303 = vrot.lane.b32.xlu0 %v584, 92
    %v1304 = vpop.permute.xlu0 %1303
    %1305 = vrot.lane.b32.xlu0 %v584, 44
    %v1306 = vpop.permute.xlu0 %1305
    %v1308 = vsel %vm589, %v1304, 0
    %v1311 = vsel %vm589, %v1306, 0
    %1313 = vmatprep.subr.bf16.mxu0 0
    %1314 = vmatpush1.bf16.xpose.msra.mxu0 0
    %1315 = vmatprep.subr.bf16.mxu0 0
    %1316 = vmatpush1.bf16.xpose.msra.mxu0 0
    %1317 = vmatprep.subr.bf16.mxu0 0
    %1318 = vmatpush1.bf16.xpose.msra.mxu0 0
    %1319 = vmatprep.subr.bf16.mxu0 0
    %1320 = vmatpush1.bf16.xpose.msra.mxu0 0
    %1321 = vmatprep.subr.bf16.mxu0 0
    %1322 = vmatpush1.bf16.xpose.msra.mxu0 0
    %1323 = vmatprep.subr.bf16.mxu0 0
    %1324 = vmatpush1.bf16.xpose.msra.mxu0 0
    %1325 = vmatprep.subr.bf16.mxu0 0
    %1326 = vmatpush1.bf16.xpose.msra.mxu0 0
    %1327 = vmatprep.subr.bf16.mxu0 0
    %1328 = vmatpush1.bf16.xpose.msra.mxu0 %v1311
    %1329 = vmatprep.subr.bf16.mxu0 0
    %1330 = vmatpush2.bf16.xpose.msra.mxu0 0
    %1331 = vmatprep.subr.bf16.mxu0 0
    %1332 = vmatpush2.bf16.xpose.msra.mxu0 0
    %1333 = vmatprep.subr.bf16.mxu0 0
    %1334 = vmatpush2.bf16.xpose.msra.mxu0 0
    %1335 = vmatprep.subr.bf16.mxu0 0
    %1336 = vmatpush2.bf16.xpose.msra.mxu0 0
    %1337 = vmatprep.subr.bf16.mxu0 0
    %1338 = vmatpush2.bf16.xpose.msra.mxu0 0
    %1339 = vmatprep.subr.bf16.mxu0 0
    %1340 = vmatpush2.bf16.xpose.msra.mxu0 0
    %1341 = vmatprep.subr.bf16.mxu0 0
    %1342 = vmatpush2.bf16.xpose.msra.mxu0 0
    %1343 = vmatprep.subr.bf16.mxu0 0
    %1344 = vmatpush2.bf16.xpose.msra.mxu0 0
    %1345 = vmatprep.mubr.bf16.mxu0 0
    %1346 = vmatmul.mubr.bf16.gmra.mxu0 %v1308
    %v1347 = vpop.f32.mrf.mxu0
    %v1348 = vadd.f32 0.0, %v1347
    %v1349 = vpop.f32.mrf.mxu0
    %v1350 = vpop.f32.mrf.mxu0
    %v1351 = vpop.f32.mrf.mxu0
    %1352 = vdwg.mxu0
    %1353 = vrot.lane.b32.xlu0 %v585, 92
    %v1354 = vpop.permute.xlu0 %1353
    %1355 = vrot.lane.b32.xlu0 %v585, 44
    %v1356 = vpop.permute.xlu0 %1355
    %v1358 = vsel %vm589, %v1354, 0
    %v1361 = vsel %vm589, %v1356, 0
    %1363 = vmatprep.subr.bf16.mxu0 0
    %1364 = vmatpush1.bf16.xpose.msra.mxu0 0
    %1365 = vmatprep.subr.bf16.mxu0 0
    %1366 = vmatpush1.bf16.xpose.msra.mxu0 0
    %1367 = vmatprep.subr.bf16.mxu0 0
    %1368 = vmatpush1.bf16.xpose.msra.mxu0 0
    %1369 = vmatprep.subr.bf16.mxu0 0
    %1370 = vmatpush1.bf16.xpose.msra.mxu0 0
    %1371 = vmatprep.subr.bf16.mxu0 0
    %1372 = vmatpush1.bf16.xpose.msra.mxu0 0
    %1373 = vmatprep.subr.bf16.mxu0 0
    %1374 = vmatpush1.bf16.xpose.msra.mxu0 0
    %1375 = vmatprep.subr.bf16.mxu0 0
    %1376 = vmatpush1.bf16.xpose.msra.mxu0 0
    %1377 = vmatprep.subr.bf16.mxu0 0
    %1378 = vmatpush1.bf16.xpose.msra.mxu0 %v1361
    %1379 = vmatprep.subr.bf16.mxu0 0
    %1380 = vmatpush2.bf16.xpose.msra.mxu0 0
    %1381 = vmatprep.subr.bf16.mxu0 0
    %1382 = vmatpush2.bf16.xpose.msra.mxu0 0
    %1383 = vmatprep.subr.bf16.mxu0 0
    %1384 = vmatpush2.bf16.xpose.msra.mxu0 0
    %1385 = vmatprep.subr.bf16.mxu0 0
    %1386 = vmatpush2.bf16.xpose.msra.mxu0 0
    %1387 = vmatprep.subr.bf16.mxu0 0
    %1388 = vmatpush2.bf16.xpose.msra.mxu0 0
    %1389 = vmatprep.subr.bf16.mxu0 0
    %1390 = vmatpush2.bf16.xpose.msra.mxu0 0
    %1391 = vmatprep.subr.bf16.mxu0 0
    %1392 = vmatpush2.bf16.xpose.msra.mxu0 0
    %1393 = vmatprep.subr.bf16.mxu0 0
    %1394 = vmatpush2.bf16.xpose.msra.mxu0 0
    %1395 = vmatprep.mubr.bf16.mxu0 0
    %1396 = vmatmul.mubr.bf16.gmra.mxu0 %v1358
    %v1397 = vpop.f32.mrf.mxu0
    %v1398 = vadd.f32 0.0, %v1397
    %v1399 = vpop.f32.mrf.mxu0
    %v1400 = vpop.f32.mrf.mxu0
    %v1401 = vpop.f32.mrf.mxu0
    %1402 = vdwg.mxu0
    %v1403 = vmul.f32 %v1348, 0.28867513
    %v1404 = vmul.f32 %v1398, 0.28867513
    %v1405 = vadd.f32 %v1403, %v713
    %v1406 = vadd.f32 %v1404, %v717
    %v1407 = vsel %vm722, %v1405, -inf
    %1408 = vmax.xlane.f32.xlu0 %v1407
    %v1409 = vpop.xlane.xlu0 %1408
    %v1410 = vsel %vm722, %v1406, -inf
    %1411 = vmax.xlane.f32.xlu0 %v1410
    %v1412 = vpop.xlane.xlu0 %1411
    %v1413 = vsub.f32 %v1405, %v1409
    %v1414 = vsub.f32 %v1406, %v1412
    %v1415 = vmul.f32 %v1413, 1.442695
    %v1416 = vpow.pop %v1415
    %v1417 = vmul.f32 %v1414, 1.442695
    %v1418 = vpow.pop %v1417
    %v1419 = vsel %vm722, %v1416, 0.0
    %1420 = vadd.xlane.f32.xlu0 %v1419
    %v1421 = vpop.xlane.xlu0 %1420
    %v1422 = vsel %vm722, %v1418, 0.0
    %1423 = vadd.xlane.f32.xlu0 %v1422
    %v1424 = vpop.xlane.xlu0 %1423
    %v1425 = vrcp.pop %v1421
    %v1426 = vrcp.pop %v1424
    %v1427 = vmul.f32 %v1416, %v1425
    %v1428 = vmul.f32 %v1418, %v1426
    %v1429 = vpack.c.bf16 %v1427, %v1427
    %v1430 = vpack.c.bf16 %v1428, %v1428
    %1431 = vrot.lane.b32.xlu0 %v1196, 124
    %v1432 = vpop.permute.xlu0 %1431
    %v1434 = vsel %vm722, %v1429, 0
    %v1437 = vsel %vm752, %v1432, 0
    %1439 = vmatprep.subr.bf16.mxu0 0
    %1440 = vmatpush1.bf16.msra.mxu0 0
    %1441 = vmatprep.subr.bf16.mxu0 0
    %1442 = vmatpush1.bf16.msra.mxu0 0
    %1443 = vmatprep.subr.bf16.mxu0 0
    %1444 = vmatpush1.bf16.msra.mxu0 0
    %1445 = vmatprep.subr.bf16.mxu0 0
    %1446 = vmatpush1.bf16.msra.mxu0 0
    %1447 = vmatprep.subr.bf16.mxu0 0
    %1448 = vmatpush1.bf16.msra.mxu0 0
    %1449 = vmatprep.subr.bf16.mxu0 0
    %1450 = vmatpush1.bf16.msra.mxu0 0
    %1451 = vmatprep.subr.bf16.mxu0 0
    %1452 = vmatpush1.bf16.msra.mxu0 0
    %1453 = vmatprep.subr.bf16.mxu0 0
    %1454 = vmatpush1.bf16.msra.mxu0 %v1437
    %1455 = vmatprep.subr.bf16.mxu0 0
    %1456 = vmatpush2.bf16.msra.mxu0 0
    %1457 = vmatprep.subr.bf16.mxu0 0
    %1458 = vmatpush2.bf16.msra.mxu0 0
    %1459 = vmatprep.subr.bf16.mxu0 0
    %1460 = vmatpush2.bf16.msra.mxu0 0
    %1461 = vmatprep.subr.bf16.mxu0 0
    %1462 = vmatpush2.bf16.msra.mxu0 0
    %1463 = vmatprep.subr.bf16.mxu0 0
    %1464 = vmatpush2.bf16.msra.mxu0 0
    %1465 = vmatprep.subr.bf16.mxu0 0
    %1466 = vmatpush2.bf16.msra.mxu0 0
    %1467 = vmatprep.subr.bf16.mxu0 0
    %1468 = vmatpush2.bf16.msra.mxu0 0
    %1469 = vmatprep.subr.bf16.mxu0 0
    %1470 = vmatpush2.bf16.msra.mxu0 0
    %1471 = vmatprep.mubr.bf16.mxu0 0
    %1472 = vmatmul.mubr.bf16.gmra.mxu0 %v1434
    %v1473 = vpop.f32.mrf.mxu0
    %v1474 = vadd.f32 0.0, %v1473
    %v1475 = vpop.f32.mrf.mxu0
    %v1476 = vpop.f32.mrf.mxu0
    %v1477 = vpop.f32.mrf.mxu0
    %1478 = vdwg.mxu0
    %1479 = vrot.lane.b32.xlu0 %v1197, 124
    %v1480 = vpop.permute.xlu0 %1479
    %v1482 = vsel %vm722, %v1430, 0
    %v1485 = vsel %vm752, %v1480, 0
    %1487 = vmatprep.subr.bf16.mxu0 0
    %1488 = vmatpush1.bf16.msra.mxu0 0
    %1489 = vmatprep.subr.bf16.mxu0 0
    %1490 = vmatpush1.bf16.msra.mxu0 0
    %1491 = vmatprep.subr.bf16.mxu0 0
    %1492 = vmatpush1.bf16.msra.mxu0 0
    %1493 = vmatprep.subr.bf16.mxu0 0
    %1494 = vmatpush1.bf16.msra.mxu0 0
    %1495 = vmatprep.subr.bf16.mxu0 0
    %1496 = vmatpush1.bf16.msra.mxu0 0
    %1497 = vmatprep.subr.bf16.mxu0 0
    %1498 = vmatpush1.bf16.msra.mxu0 0
    %1499 = vmatprep.subr.bf16.mxu0 0
    %1500 = vmatpush1.bf16.msra.mxu0 0
    %1501 = vmatprep.subr.bf16.mxu0 0
    %1502 = vmatpush1.bf16.msra.mxu0 %v1485
    %1503 = vmatprep.subr.bf16.mxu0 0
    %1504 = vmatpush2.bf16.msra.mxu0 0
    %1505 = vmatprep.subr.bf16.mxu0 0
    %1506 = vmatpush2.bf16.msra.mxu0 0
    %1507 = vmatprep.subr.bf16.mxu0 0
    %1508 = vmatpush2.bf16.msra.mxu0 0
    %1509 = vmatprep.subr.bf16.mxu0 0
    %1510 = vmatpush2.bf16.msra.mxu0 0
    %1511 = vmatprep.subr.bf16.mxu0 0
    %1512 = vmatpush2.bf16.msra.mxu0 0
    %1513 = vmatprep.subr.bf16.mxu0 0
    %1514 = vmatpush2.bf16.msra.mxu0 0
    %1515 = vmatprep.subr.bf16.mxu0 0
    %1516 = vmatpush2.bf16.msra.mxu0 0
    %1517 = vmatprep.subr.bf16.mxu0 0
    %1518 = vmatpush2.bf16.msra.mxu0 0
    %1519 = vmatprep.mubr.bf16.mxu0 0
    %1520 = vmatmul.mubr.bf16.gmra.mxu0 %v1482
    %v1521 = vpop.f32.mrf.mxu0
    %v1522 = vadd.f32 0.0, %v1521
    %v1523 = vpop.f32.mrf.mxu0
    %v1524 = vpop.f32.mrf.mxu0
    %v1525 = vpop.f32.mrf.mxu0
    %1526 = vdwg.mxu0
    %1529 = vrot.lane.b32.xlu0 %v1015, 12
    %v1530 = vpop.permute.xlu0 %1529
    %1531 = vrot.lane.b32.xlu0 %v1063, 12
    %v1532 = vpop.permute.xlu0 %1531
    %1537 = vrot.lane.b32.xlu0 %v1246, 24
    %v1538 = vpop.permute.xlu0 %1537
    %1539 = vrot.lane.b32.xlu0 %v1298, 24
    %v1540 = vpop.permute.xlu0 %1539
    %1545 = vrot.lane.b32.xlu0 %v1474, 36
    %v1546 = vpop.permute.xlu0 %1545
    %1547 = vrot.lane.b32.xlu0 %v1522, 36
    %v1548 = vpop.permute.xlu0 %1547
    %v1551 = vsel %vm589, %v791, %v1530
    %v1552 = vsel %vm589, %v839, %v1532
    %vm1553 = vcmask 195584
    %v1554 = vsel %vm1553, %v1551, %v1538
    %v1555 = vsel %vm1553, %v1552, %v1540
    %vm1556 = vcmask 293888
    %v1557 = vsel %vm1556, %v1554, %v1546
    %v1558 = vsel %vm1556, %v1555, %v1548
    %v1559 = vpack.c.bf16 %v1558, %v1557
    %v1560 = vld [vmem:[%s21] sm:$0xf]
    %v1561 = vld [vmem:[%s21 + $0x4] sm:$0xf]
    %v1562 = vld [vmem:[%s21 + $0x8] sm:$0xf]
    %v1563 = vld [vmem:[%s21 + $0xc] sm:$0xf]
    %v1564 = vld [vmem:[%s21 + $0x10] sm:$0xf]
    %v1565 = vld [vmem:[%s21 + $0x14] sm:$0xf]
    %v1566 = vld [vmem:[#allocation7] sm:$0x1]
    %v1568 = vlaneseq
    %v1569 = vshrl.u32 %v1568, 7
    %v1570 = vsub.s32 0, %v1569
    %v1571 = vrot.slane %v1566, %v1570
    %v1579 = vunpack.c.l.b16 %v1560
    %v1580 = vunpack.c.l.b16 %v1561
    %v1581 = vunpack.c.l.b16 %v1562
    %v1582 = vunpack.c.l.b16 %v1563
    %v1583 = vunpack.c.l.b16 %v1564
    %v1584 = vunpack.c.l.b16 %v1565
    %v1585 = vpack.c.b16 %v1580, %v1579
    %v1586 = vpack.c.b16 %v1582, %v1581
    %v1587 = vpack.c.b16 %v1584, %v1583
    %v1592 = vsel %vm537, %v1559, 0
    %1594 = vmatprep.subr.bf16.mxu0 0
    %1595 = vmatpush1.bf16.msra.mxu0 0
    %1596 = vmatprep.subr.bf16.mxu0 0
    %1597 = vmatpush1.bf16.msra.mxu0 0
    %1598 = vmatprep.subr.bf16.mxu0 0
    %1599 = vmatpush1.bf16.msra.mxu0 0
    %1600 = vmatprep.subr.bf16.mxu0 0
    %1601 = vmatpush1.bf16.msra.mxu0 0
    %1602 = vmatprep.subr.bf16.mxu0 0
    %1603 = vmatpush1.bf16.msra.mxu0 0
    %1604 = vmatprep.subr.bf16.mxu0 0
    %1605 = vmatpush1.bf16.msra.mxu0 %v1587
    %1606 = vmatprep.subr.bf16.mxu0 0
    %1607 = vmatpush1.bf16.msra.mxu0 %v1586
    %1608 = vmatprep.subr.bf16.mxu0 0
    %1609 = vmatpush1.bf16.msra.mxu0 %v1585
    %1610 = vmatprep.subr.bf16.mxu0 0
    %1611 = vmatpush2.bf16.msra.mxu0 0
    %1612 = vmatprep.subr.bf16.mxu0 0
    %1613 = vmatpush2.bf16.msra.mxu0 0
    %1614 = vmatprep.subr.bf16.mxu0 0
    %1615 = vmatpush2.bf16.msra.mxu0 0
    %1616 = vmatprep.subr.bf16.mxu0 0
    %1617 = vmatpush2.bf16.msra.mxu0 0
    %1618 = vmatprep.subr.bf16.mxu0 0
    %1619 = vmatpush2.bf16.msra.mxu0 0
    %1620 = vmatprep.subr.bf16.mxu0 0
    %1621 = vmatpush2.bf16.msra.mxu0 0
    %1622 = vmatprep.subr.bf16.mxu0 0
    %1623 = vmatpush2.bf16.msra.mxu0 0
    %1624 = vmatprep.subr.bf16.mxu0 0
    %1625 = vmatpush2.bf16.msra.mxu0 0
    %1626 = vmatprep.mubr.bf16.mxu0 0
    %1627 = vmatmul.mubr.bf16.gmra.mxu0 %v1592
    %v1628 = vpop.f32.mrf.mxu0
    %v1629 = vadd.f32 %v1571, %v1628
    %v1630 = vpop.f32.mrf.mxu0
    %v1631 = vpop.f32.mrf.mxu0
    %v1632 = vadd.f32 %v1571, %v1631
    %v1633 = vpop.f32.mrf.mxu0
    %1634 = vdwg.mxu0
    %v1635 = vld [vmem:[#allocation9] sm:$0x1]
    %v1636 = vld [vmem:[#allocation10] sm:$0x1]
    %v1637 = vadd.f32 %v483, %v1629
    %v1638 = vadd.f32 %v484, %v1632
    %v1639 = vsel %vm537, %v1637, 0.0
    %1640 = vadd.xlane.f32.xlu0 %v1639
    %v1641 = vpop.xlane.xlu0 %1640
    %v1642 = vsel %vm537, %v1638, 0.0
    %1643 = vadd.xlane.f32.xlu0 %v1642
    %v1644 = vpop.xlane.xlu0 %1643
    %v1645 = vrcp.pop 48.0
    %v1646 = vmul.f32 %v1641, %v1645
    %v1647 = vmul.f32 %v1644, %v1645
    %v1648 = vsub.f32 %v1637, %v1646
    %v1649 = vsub.f32 %v1638, %v1647
    %v1650 = vmul.f32 %v1648, %v1648
    %v1651 = vmul.f32 %v1649, %v1649
    %v1652 = vsel %vm537, %v1650, 0.0
    %1653 = vadd.xlane.f32.xlu0 %v1652
    %v1654 = vpop.xlane.xlu0 %1653
    %v1655 = vsel %vm537, %v1651, 0.0
    %1656 = vadd.xlane.f32.xlu0 %v1655
    %v1657 = vpop.xlane.xlu0 %1656
    %v1658 = vmul.f32 %v1654, %v1645
    %v1659 = vmul.f32 %v1657, %v1645
    %v1660 = vadd.f32 %v1658, 1e-05
    %v1661 = vadd.f32 %v1659, 1e-05
    %v1662 = vrsqrt.pop %v1660
    %v1663 = vrsqrt.pop %v1661
    %v1664 = vmul.f32 %v1648, %v1662
    %v1665 = vmul.f32 %v1649, %v1663
    %v1667 = vlaneseq
    %v1668 = vshrl.u32 %v1667, 7
    %v1669 = vsub.s32 0, %v1668
    %v1670 = vrot.slane %v1635, %v1669
    %v1672 = vmul.f32 %v1664, %v1670
    %v1673 = vmul.f32 %v1665, %v1670
    %v1675 = vlaneseq
    %v1676 = vshrl.u32 %v1675, 7
    %v1677 = vsub.s32 0, %v1676
    %v1678 = vrot.slane %v1636, %v1677
    %v1680 = vadd.f32 %v1672, %v1678
    %v1681 = vadd.f32 %v1673, %v1678
    %v1682 = vpack.c.bf16 %v1681, %v1680
    %v1683 = vld [vmem:[%s29] sm:$0xff]
    %v1684 = vld [vmem:[%s29 + $0x8] sm:$0xff]
    %v1685 = vld [vmem:[%s29 + $0x10] sm:$0xff]
    %v1686 = vld [vmem:[%s29 + $0x18] sm:$0xff]
    %v1687 = vld [vmem:[%s29 + $0x20] sm:$0xff]
    %v1688 = vld [vmem:[%s29 + $0x28] sm:$0xff]
    %v1689 = vld [vmem:[#allocation12] sm:$0x3]
    %v1691 = vlaneseq
    %v1692 = vshrl.u32 %v1691, 7
    %v1693 = vsub.s32 0, %v1692
    %v1694 = vrot.slane %v1689, %v1693
    %v1695 = vlaneseq
    %v1696 = vshrl.u32 %v1695, 7
    %v1697 = vsub.s32 1, %v1696
    %v1698 = vrot.slane %v1689, %v1697
    %v1707 = vunpack.c.l.b16 %v1683
    %v1708 = vunpack.c.h.b16 %v1683
    %v1709 = vunpack.c.l.b16 %v1684
    %v1710 = vunpack.c.h.b16 %v1684
    %v1711 = vunpack.c.l.b16 %v1685
    %v1712 = vunpack.c.h.b16 %v1685
    %v1713 = vunpack.c.l.b16 %v1686
    %v1714 = vunpack.c.h.b16 %v1686
    %v1715 = vunpack.c.l.b16 %v1687
    %v1716 = vunpack.c.h.b16 %v1687
    %v1717 = vunpack.c.l.b16 %v1688
    %v1718 = vunpack.c.h.b16 %v1688
    %v1719 = vpack.c.b16 %v1709, %v1707
    %v1720 = vpack.c.b16 %v1710, %v1708
    %v1721 = vpack.c.b16 %v1713, %v1711
    %v1722 = vpack.c.b16 %v1714, %v1712
    %v1723 = vpack.c.b16 %v1717, %v1715
    %v1724 = vpack.c.b16 %v1718, %v1716
    %v1732 = vsel %vm537, %v1682, 0
    %1734 = vmatprep.subr.bf16.mxu0 0
    %1735 = vmatpush1.bf16.msra.mxu0 0
    %1736 = vmatprep.subr.bf16.mxu0 0
    %1737 = vmatpush1.bf16.msra.mxu0 0
    %1738 = vmatprep.subr.bf16.mxu0 0
    %1739 = vmatpush1.bf16.msra.mxu0 0
    %1740 = vmatprep.subr.bf16.mxu0 0
    %1741 = vmatpush1.bf16.msra.mxu0 0
    %1742 = vmatprep.subr.bf16.mxu0 0
    %1743 = vmatpush1.bf16.msra.mxu0 0
    %1744 = vmatprep.subr.bf16.mxu0 %v1724
    %1745 = vmatpush1.bf16.msra.mxu0 %v1723
    %1746 = vmatprep.subr.bf16.mxu0 %v1722
    %1747 = vmatpush1.bf16.msra.mxu0 %v1721
    %1748 = vmatprep.subr.bf16.mxu0 %v1720
    %1749 = vmatpush1.bf16.msra.mxu0 %v1719
    %1750 = vmatprep.subr.bf16.mxu0 0
    %1751 = vmatpush2.bf16.msra.mxu0 0
    %1752 = vmatprep.subr.bf16.mxu0 0
    %1753 = vmatpush2.bf16.msra.mxu0 0
    %1754 = vmatprep.subr.bf16.mxu0 0
    %1755 = vmatpush2.bf16.msra.mxu0 0
    %1756 = vmatprep.subr.bf16.mxu0 0
    %1757 = vmatpush2.bf16.msra.mxu0 0
    %1758 = vmatprep.subr.bf16.mxu0 0
    %1759 = vmatpush2.bf16.msra.mxu0 0
    %1760 = vmatprep.subr.bf16.mxu0 0
    %1761 = vmatpush2.bf16.msra.mxu0 0
    %1762 = vmatprep.subr.bf16.mxu0 0
    %1763 = vmatpush2.bf16.msra.mxu0 0
    %1764 = vmatprep.subr.bf16.mxu0 0
    %1765 = vmatpush2.bf16.msra.mxu0 0
    %1766 = vmatprep.mubr.bf16.mxu0 0
    %1767 = vmatmul.mubr.bf16.gmra.mxu0 %v1732
    %v1768 = vpop.f32.mrf.mxu0
    %v1769 = vadd.f32 %v1694, %v1768
    %v1770 = vpop.f32.mrf.mxu0
    %v1771 = vadd.f32 %v1698, %v1770
    %v1772 = vpop.f32.mrf.mxu0
    %v1773 = vadd.f32 %v1694, %v1772
    %v1774 = vpop.f32.mrf.mxu0
    %v1775 = vadd.f32 %v1698, %v1774
    %1776 = vdwg.mxu0
    %v1777 = vmax.f32 %v1769, 0.0
    %v1778 = vmax.f32 %v1771, 0.0
    %v1779 = vmax.f32 %v1773, 0.0
    %v1780 = vmax.f32 %v1775, 0.0
    %v1781 = vpack.c.bf16 %v1779, %v1777
    %v1782 = vpack.c.bf16 %v1780, %v1778
    %v1783 = vld [vmem:[%s33] sm:$0xf]
    %v1784 = vld [vmem:[%s33 + $0x4] sm:$0xf]
    %v1785 = vld [vmem:[%s33 + $0x8] sm:$0xf]
    %v1786 = vld [vmem:[%s33 + $0xc] sm:$0xf]
    %v1787 = vld [vmem:[%s33 + $0x10] sm:$0xf]
    %v1788 = vld [vmem:[%s33 + $0x14] sm:$0xf]
    %v1789 = vld [vmem:[%s33 + $0x18] sm:$0xf]
    %v1790 = vld [vmem:[%s33 + $0x1c] sm:$0xf]
    %v1791 = vld [vmem:[%s33 + $0x20] sm:$0xf]
    %v1792 = vld [vmem:[%s33 + $0x24] sm:$0xf]
    %v1793 = vld [vmem:[%s33 + $0x28] sm:$0xf]
    %v1794 = vld [vmem:[%s33 + $0x2c] sm:$0xf]
    %v1795 = vld [vmem:[%s33 + $0x30] sm:$0xf]
    %v1796 = vld [vmem:[%s33 + $0x34] sm:$0xf]
    %v1797 = vld [vmem:[%s33 + $0x38] sm:$0xf]
    %v1798 = vld [vmem:[%s33 + $0x3c] sm:$0xf]
    %v1799 = vld [vmem:[%s33 + $0x40] sm:$0xf]
    %v1800 = vld [vmem:[%s33 + $0x44] sm:$0xf]
    %v1801 = vld [vmem:[%s33 + $0x48] sm:$0xf]
    %v1802 = vld [vmem:[%s33 + $0x4c] sm:$0xf]
    %v1803 = vld [vmem:[%s33 + $0x50] sm:$0xf]
    %v1804 = vld [vmem:[%s33 + $0x54] sm:$0xf]
    %v1805 = vld [vmem:[%s33 + $0x58] sm:$0xf]
    %v1806 = vld [vmem:[%s33 + $0x5c] sm:$0xf]
    %v1807 = vld [vmem:[#allocation13] sm:$0x1]
    %v1809 = vlaneseq
    %v1810 = vshrl.u32 %v1809, 7
    %v1811 = vsub.s32 0, %v1810
    %v1812 = vrot.slane %v1807, %v1811
    %v1838 = vunpack.c.l.b16 %v1783
    %v1839 = vunpack.c.l.b16 %v1784
    %v1840 = vunpack.c.l.b16 %v1785
    %v1841 = vunpack.c.l.b16 %v1786
    %v1842 = vunpack.c.l.b16 %v1787
    %v1843 = vunpack.c.l.b16 %v1788
    %v1844 = vunpack.c.l.b16 %v1789
    %v1845 = vunpack.c.l.b16 %v1790
    %v1846 = vunpack.c.l.b16 %v1791
    %v1847 = vunpack.c.l.b16 %v1792
    %v1848 = vunpack.c.l.b16 %v1793
    %v1849 = vunpack.c.l.b16 %v1794
    %v1850 = vunpack.c.l.b16 %v1795
    %v1851 = vunpack.c.l.b16 %v1796
    %v1852 = vunpack.c.l.b16 %v1797
    %v1853 = vunpack.c.l.b16 %v1798
    %v1854 = vunpack.c.l.b16 %v1799
    %v1855 = vunpack.c.l.b16 %v1800
    %v1856 = vunpack.c.l.b16 %v1801
    %v1857 = vunpack.c.l.b16 %v1802
    %v1858 = vunpack.c.l.b16 %v1803
    %v1859 = vunpack.c.l.b16 %v1804
    %v1860 = vunpack.c.l.b16 %v1805
    %v1861 = vunpack.c.l.b16 %v1806
    %v1862 = vpack.c.b16 %v1839, %v1838
    %v1863 = vpack.c.b16 %v1841, %v1840
    %v1864 = vpack.c.b16 %v1843, %v1842
    %v1865 = vpack.c.b16 %v1845, %v1844
    %v1866 = vpack.c.b16 %v1847, %v1846
    %v1867 = vpack.c.b16 %v1849, %v1848
    %v1868 = vpack.c.b16 %v1851, %v1850
    %v1869 = vpack.c.b16 %v1853, %v1852
    %v1870 = vpack.c.b16 %v1855, %v1854
    %v1871 = vpack.c.b16 %v1857, %v1856
    %v1872 = vpack.c.b16 %v1859, %v1858
    %v1873 = vpack.c.b16 %v1861, %v1860
    %v1887 = vsel %vm360, %v1782, 0
    %1889 = vmatprep.subr.bf16.mxu0 0
    %1890 = vmatpush1.bf16.msra.mxu0 %v1869
    %1891 = vmatprep.subr.bf16.mxu0 0
    %1892 = vmatpush1.bf16.msra.mxu0 %v1868
    %1893 = vmatprep.subr.bf16.mxu0 0
    %1894 = vmatpush1.bf16.msra.mxu0 %v1867
    %1895 = vmatprep.subr.bf16.mxu0 0
    %1896 = vmatpush1.bf16.msra.mxu0 %v1866
    %1897 = vmatprep.subr.bf16.mxu0 0
    %1898 = vmatpush1.bf16.msra.mxu0 %v1865
    %1899 = vmatprep.subr.bf16.mxu0 0
    %1900 = vmatpush1.bf16.msra.mxu0 %v1864
    %1901 = vmatprep.subr.bf16.mxu0 0
    %1902 = vmatpush1.bf16.msra.mxu0 %v1863
    %1903 = vmatprep.subr.bf16.mxu0 0
    %1904 = vmatpush1.bf16.msra.mxu0 %v1862
    %1905 = vmatprep.subr.bf16.mxu0 0
    %1906 = vmatpush2.bf16.msra.mxu0 0
    %1907 = vmatprep.subr.bf16.mxu0 0
    %1908 = vmatpush2.bf16.msra.mxu0 0
    %1909 = vmatprep.subr.bf16.mxu0 0
    %1910 = vmatpush2.bf16.msra.mxu0 0
    %1911 = vmatprep.subr.bf16.mxu0 0
    %1912 = vmatpush2.bf16.msra.mxu0 0
    %1913 = vmatprep.subr.bf16.mxu0 0
    %1914 = vmatpush2.bf16.msra.mxu0 %v1873
    %1915 = vmatprep.subr.bf16.mxu0 0
    %1916 = vmatpush2.bf16.msra.mxu0 %v1872
    %1917 = vmatprep.subr.bf16.mxu0 0
    %1918 = vmatpush2.bf16.msra.mxu0 %v1871
    %1919 = vmatprep.subr.bf16.mxu0 0
    %1920 = vmatpush2.bf16.msra.mxu0 %v1870
    %1921 = vmatprep.mubr.bf16.mxu0 %v1887
    %1922 = vmatmul.mubr.bf16.gmra.mxu0 %v1781
    %v1923 = vpop.f32.mrf.mxu0
    %v1924 = vadd.f32 %v1812, %v1923
    %v1925 = vpop.f32.mrf.mxu0
    %v1926 = vpop.f32.mrf.mxu0
    %v1927 = vadd.f32 %v1812, %v1926
    %v1928 = vpop.f32.mrf.mxu0
    %1929 = vdwg.mxu0
    %v1930 = vld [vmem:[#allocation15] sm:$0x1]
    %v1931 = vld [vmem:[#allocation16] sm:$0x1]
    %v1932 = vadd.f32 %v1680, %v1924
    %v1933 = vadd.f32 %v1681, %v1927
    %v1934 = vsel %vm537, %v1932, 0.0
    %1935 = vadd.xlane.f32.xlu0 %v1934
    %v1936 = vpop.xlane.xlu0 %1935
    %v1937 = vsel %vm537, %v1933, 0.0
    %1938 = vadd.xlane.f32.xlu0 %v1937
    %v1939 = vpop.xlane.xlu0 %1938
    %v1940 = vmul.f32 %v1936, %v1645
    %v1941 = vmul.f32 %v1939, %v1645
    %v1942 = vsub.f32 %v1932, %v1940
    %v1943 = vsub.f32 %v1933, %v1941
    %v1944 = vmul.f32 %v1942, %v1942
    %v1945 = vmul.f32 %v1943, %v1943
    %v1946 = vsel %vm537, %v1944, 0.0
    %1947 = vadd.xlane.f32.xlu0 %v1946
    %v1948 = vpop.xlane.xlu0 %1947
    %v1949 = vsel %vm537, %v1945, 0.0
    %1950 = vadd.xlane.f32.xlu0 %v1949
    %v1951 = vpop.xlane.xlu0 %1950
    %v1952 = vmul.f32 %v1948, %v1645
    %v1953 = vmul.f32 %v1951, %v1645
    %v1954 = vadd.f32 %v1952, 1e-05
    %v1955 = vadd.f32 %v1953, 1e-05
    %v1956 = vrsqrt.pop %v1954
    %v1957 = vrsqrt.pop %v1955
    %v1958 = vmul.f32 %v1942, %v1956
    %v1959 = vmul.f32 %v1943, %v1957
    %v1961 = vlaneseq
    %v1962 = vshrl.u32 %v1961, 7
    %v1963 = vsub.s32 0, %v1962
    %v1964 = vrot.slane %v1930, %v1963
    %v1966 = vmul.f32 %v1958, %v1964
    %v1967 = vmul.f32 %v1959, %v1964
    %v1969 = vlaneseq
    %v1970 = vshrl.u32 %v1969, 7
    %v1971 = vsub.s32 0, %v1970
    %v1972 = vrot.slane %v1931, %v1971
    %v1974 = vadd.f32 %v1966, %v1972
    %v1975 = vadd.f32 %v1967, %v1972
    %1976 = vst.msk [vmem:[#allocation21] sm:$0xff] %vm537, %v1974
    %1977 = vst.msk [vmem:[#allocation21 + $0x8] sm:$0xff] %vm537, %v1975
    %v1978 = vmul.f32 %v1974, %v1974
    %v1979 = vmul.f32 %v1975, %v1975
    %v1980 = vsel %vm537, %v1978, 0.0
    %1981 = vadd.xlane.f32.xlu0 %v1980
    %v1982 = vpop.xlane.xlu0 %1981
    %v1983 = vsel %vm537, %v1979, 0.0
    %1984 = vadd.xlane.f32.xlu0 %v1983
    %v1985 = vpop.xlane.xlu0 %1984
    %v1986 = vrot.slane %v1982, 4
    %v1987 = vadd.f32 %v1982, %v1986
    %v1988 = vrot.slane %v1987, 2
    %v1989 = vadd.f32 %v1987, %v1988
    %v1990 = vrot.slane %v1989, 1
    %v1991 = vadd.f32 %v1989, %v1990
    %v1992 = vrot.slane %v1985, 4
    %v1993 = vadd.f32 %v1985, %v1992
    %v1994 = vrot.slane %v1993, 2
    %v1995 = vadd.f32 %v1993, %v1994
    %v1996 = vrot.slane %v1995, 1
    %v1997 = vadd.f32 %v1995, %v1996
    %v1998 = vrcp.pop 384.0
    %v1999 = vmul.f32 %v1991, %v1998
    %v2000 = vmul.f32 %v1997, %v1998
    %v2001 = vrsqrt.pop %v1999
    %v2002 = vmul.f32 %v1999, %v2001
    %vm2003 = vcmp.eq.f32.partialorder %v1999, inf
    %v2004 = vsel %vm2003, %v1999, %v2002
    %vm2005 = vcmp.eq.f32.partialorder %v1999, 0.0
    %v2006 = vand.u32 %v1999, 2147483648
    %v2007 = vsel %vm2005, %v2006, %v2004
    %v2008 = vrsqrt.pop %v2000
    %v2009 = vmul.f32 %v2000, %v2008
    %vm2010 = vcmp.eq.f32.partialorder %v2000, inf
    %v2011 = vsel %vm2010, %v2000, %v2009
    %vm2012 = vcmp.eq.f32.partialorder %v2000, 0.0
    %v2013 = vand.u32 %v2000, 2147483648
    %v2014 = vsel %vm2012, %v2013, %v2011
    %v2015 = vld [vmem:[%s7] sm:$0xff]
    %v2016 = vld [vmem:[%s7 + $0x8] sm:$0xff]
    %v2017 = vmul.f32 %v2007, %v2015
    %v2018 = vmul.f32 %v2014, %v2016
    %v2019 = vadd.f32 %v1974, %v2017
    %v2020 = vadd.f32 %v1975, %v2018
    %v2021 = vpack.c.bf16 %v2020, %v2019
    %v2022 = vld [vmem:[%s41] sm:$0xff]
    %v2023 = vld [vmem:[%s41 + $0x8] sm:$0xff]
    %v2024 = vld [vmem:[%s41 + $0x10] sm:$0xff]
    %v2025 = vld [vmem:[%s41 + $0x18] sm:$0xff]
    %v2026 = vld [vmem:[%s41 + $0x20] sm:$0xff]
    %v2027 = vld [vmem:[%s41 + $0x28] sm:$0xff]
    %v2028 = vld [vmem:[%s43] sm:$0x3]
    %v2030 = vlaneseq
    %v2031 = vshrl.u32 %v2030, 7
    %v2032 = vsub.s32 0, %v2031
    %v2033 = vrot.slane %v2028, %v2032
    %v2034 = vlaneseq
    %v2035 = vshrl.u32 %v2034, 7
    %v2036 = vsub.s32 1, %v2035
    %v2037 = vrot.slane %v2028, %v2036
    %v2046 = vunpack.c.l.b16 %v2022
    %v2047 = vunpack.c.h.b16 %v2022
    %v2048 = vunpack.c.l.b16 %v2023
    %v2049 = vunpack.c.h.b16 %v2023
    %v2050 = vunpack.c.l.b16 %v2024
    %v2051 = vunpack.c.h.b16 %v2024
    %v2052 = vunpack.c.l.b16 %v2025
    %v2053 = vunpack.c.h.b16 %v2025
    %v2054 = vunpack.c.l.b16 %v2026
    %v2055 = vunpack.c.h.b16 %v2026
    %v2056 = vunpack.c.l.b16 %v2027
    %v2057 = vunpack.c.h.b16 %v2027
    %v2058 = vpack.c.b16 %v2048, %v2046
    %v2059 = vpack.c.b16 %v2049, %v2047
    %v2060 = vpack.c.b16 %v2052, %v2050
    %v2061 = vpack.c.b16 %v2053, %v2051
    %v2062 = vpack.c.b16 %v2056, %v2054
    %v2063 = vpack.c.b16 %v2057, %v2055
    %v2071 = vsel %vm537, %v2021, 0
    %2073 = vmatprep.subr.bf16.mxu0 0
    %2074 = vmatpush1.bf16.msra.mxu0 0
    %2075 = vmatprep.subr.bf16.mxu0 0
    %2076 = vmatpush1.bf16.msra.mxu0 0
    %2077 = vmatprep.subr.bf16.mxu0 0
    %2078 = vmatpush1.bf16.msra.mxu0 0
    %2079 = vmatprep.subr.bf16.mxu0 0
    %2080 = vmatpush1.bf16.msra.mxu0 0
    %2081 = vmatprep.subr.bf16.mxu0 0
    %2082 = vmatpush1.bf16.msra.mxu0 0
    %2083 = vmatprep.subr.bf16.mxu0 %v2063
    %2084 = vmatpush1.bf16.msra.mxu0 %v2062
    %2085 = vmatprep.subr.bf16.mxu0 %v2061
    %2086 = vmatpush1.bf16.msra.mxu0 %v2060
    %2087 = vmatprep.subr.bf16.mxu0 %v2059
    %2088 = vmatpush1.bf16.msra.mxu0 %v2058
    %2089 = vmatprep.subr.bf16.mxu0 0
    %2090 = vmatpush2.bf16.msra.mxu0 0
    %2091 = vmatprep.subr.bf16.mxu0 0
    %2092 = vmatpush2.bf16.msra.mxu0 0
    %2093 = vmatprep.subr.bf16.mxu0 0
    %2094 = vmatpush2.bf16.msra.mxu0 0
    %2095 = vmatprep.subr.bf16.mxu0 0
    %2096 = vmatpush2.bf16.msra.mxu0 0
    %2097 = vmatprep.subr.bf16.mxu0 0
    %2098 = vmatpush2.bf16.msra.mxu0 0
    %2099 = vmatprep.subr.bf16.mxu0 0
    %2100 = vmatpush2.bf16.msra.mxu0 0
    %2101 = vmatprep.subr.bf16.mxu0 0
    %2102 = vmatpush2.bf16.msra.mxu0 0
    %2103 = vmatprep.subr.bf16.mxu0 0
    %2104 = vmatpush2.bf16.msra.mxu0 0
    %2105 = vmatprep.mubr.bf16.mxu0 0
    %2106 = vmatmul.mubr.bf16.gmra.mxu0 %v2071
    %v2107 = vpop.f32.mrf.mxu0
    %v2108 = vadd.f32 %v2033, %v2107
    %v2109 = vpop.f32.mrf.mxu0
    %v2110 = vadd.f32 %v2037, %v2109
    %v2111 = vpop.f32.mrf.mxu0
    %v2112 = vadd.f32 %v2033, %v2111
    %v2113 = vpop.f32.mrf.mxu0
    %v2114 = vadd.f32 %v2037, %v2113
    %2115 = vdwg.mxu0
    %v2116 = vpack.c.bf16 %v2108, %v2108
    %v2117 = vpack.c.bf16 %v2112, %v2112
    %2119 = vrot.lane.b32.xlu0 %v2116, 80
    %v2120 = vpop.permute.xlu0 %2119
    %v2122 = vsel %vm589, %v2116, 0
    %v2125 = vsel %vm589, %v2120, 0
    %2127 = vmatprep.subr.bf16.mxu0 0
    %2128 = vmatpush1.bf16.xpose.msra.mxu0 0
    %2129 = vmatprep.subr.bf16.mxu0 0
    %2130 = vmatpush1.bf16.xpose.msra.mxu0 0
    %2131 = vmatprep.subr.bf16.mxu0 0
    %2132 = vmatpush1.bf16.xpose.msra.mxu0 0
    %2133 = vmatprep.subr.bf16.mxu0 0
    %2134 = vmatpush1.bf16.xpose.msra.mxu0 0
    %2135 = vmatprep.subr.bf16.mxu0 0
    %2136 = vmatpush1.bf16.xpose.msra.mxu0 0
    %2137 = vmatprep.subr.bf16.mxu0 0
    %2138 = vmatpush1.bf16.xpose.msra.mxu0 0
    %2139 = vmatprep.subr.bf16.mxu0 0
    %2140 = vmatpush1.bf16.xpose.msra.mxu0 0
    %2141 = vmatprep.subr.bf16.mxu0 0
    %2142 = vmatpush1.bf16.xpose.msra.mxu0 %v2125
    %2143 = vmatprep.subr.bf16.mxu0 0
    %2144 = vmatpush2.bf16.xpose.msra.mxu0 0
    %2145 = vmatprep.subr.bf16.mxu0 0
    %2146 = vmatpush2.bf16.xpose.msra.mxu0 0
    %2147 = vmatprep.subr.bf16.mxu0 0
    %2148 = vmatpush2.bf16.xpose.msra.mxu0 0
    %2149 = vmatprep.subr.bf16.mxu0 0
    %2150 = vmatpush2.bf16.xpose.msra.mxu0 0
    %2151 = vmatprep.subr.bf16.mxu0 0
    %2152 = vmatpush2.bf16.xpose.msra.mxu0 0
    %2153 = vmatprep.subr.bf16.mxu0 0
    %2154 = vmatpush2.bf16.xpose.msra.mxu0 0
    %2155 = vmatprep.subr.bf16.mxu0 0
    %2156 = vmatpush2.bf16.xpose.msra.mxu0 0
    %2157 = vmatprep.subr.bf16.mxu0 0
    %2158 = vmatpush2.bf16.xpose.msra.mxu0 0
    %2159 = vmatprep.mubr.bf16.mxu0 0
    %2160 = vmatmul.mubr.bf16.gmra.mxu0 %v2122
    %v2161 = vpop.f32.mrf.mxu0
    %v2162 = vadd.f32 0.0, %v2161
    %v2163 = vpop.f32.mrf.mxu0
    %v2164 = vpop.f32.mrf.mxu0
    %v2165 = vpop.f32.mrf.mxu0
    %2166 = vdwg.mxu0
    %2168 = vrot.lane.b32.xlu0 %v2117, 80
    %v2169 = vpop.permute.xlu0 %2168
    %v2171 = vsel %vm589, %v2117, 0
    %v2174 = vsel %vm589, %v2169, 0
    %2176 = vmatprep.subr.bf16.mxu0 0
    %2177 = vmatpush1.bf16.xpose.msra.mxu0 0
    %2178 = vmatprep.subr.bf16.mxu0 0
    %2179 = vmatpush1.bf16.xpose.msra.mxu0 0
    %2180 = vmatprep.subr.bf16.mxu0 0
    %2181 = vmatpush1.bf16.xpose.msra.mxu0 0
    %2182 = vmatprep.subr.bf16.mxu0 0
    %2183 = vmatpush1.bf16.xpose.msra.mxu0 0
    %2184 = vmatprep.subr.bf16.mxu0 0
    %2185 = vmatpush1.bf16.xpose.msra.mxu0 0
    %2186 = vmatprep.subr.bf16.mxu0 0
    %2187 = vmatpush1.bf16.xpose.msra.mxu0 0
    %2188 = vmatprep.subr.bf16.mxu0 0
    %2189 = vmatpush1.bf16.xpose.msra.mxu0 0
    %2190 = vmatprep.subr.bf16.mxu0 0
    %2191 = vmatpush1.bf16.xpose.msra.mxu0 %v2174
    %2192 = vmatprep.subr.bf16.mxu0 0
    %2193 = vmatpush2.bf16.xpose.msra.mxu0 0
    %2194 = vmatprep.subr.bf16.mxu0 0
    %2195 = vmatpush2.bf16.xpose.msra.mxu0 0
    %2196 = vmatprep.subr.bf16.mxu0 0
    %2197 = vmatpush2.bf16.xpose.msra.mxu0 0
    %2198 = vmatprep.subr.bf16.mxu0 0
    %2199 = vmatpush2.bf16.xpose.msra.mxu0 0
    %2200 = vmatprep.subr.bf16.mxu0 0
    %2201 = vmatpush2.bf16.xpose.msra.mxu0 0
    %2202 = vmatprep.subr.bf16.mxu0 0
    %2203 = vmatpush2.bf16.xpose.msra.mxu0 0
    %2204 = vmatprep.subr.bf16.mxu0 0
    %2205 = vmatpush2.bf16.xpose.msra.mxu0 0
    %2206 = vmatprep.subr.bf16.mxu0 0
    %2207 = vmatpush2.bf16.xpose.msra.mxu0 0
    %2208 = vmatprep.mubr.bf16.mxu0 0
    %2209 = vmatmul.mubr.bf16.gmra.mxu0 %v2171
    %v2210 = vpop.f32.mrf.mxu0
    %v2211 = vadd.f32 0.0, %v2210
    %v2212 = vpop.f32.mrf.mxu0
    %v2213 = vpop.f32.mrf.mxu0
    %v2214 = vpop.f32.mrf.mxu0
    %2215 = vdwg.mxu0
    %v2216 = vmul.f32 %v2162, 0.28867513
    %v2217 = vmul.f32 %v2211, 0.28867513
    %v2218 = vadd.f32 %v2216, %v713
    %v2219 = vadd.f32 %v2217, %v717
    %v2220 = vsel %vm722, %v2218, -inf
    %2221 = vmax.xlane.f32.xlu0 %v2220
    %v2222 = vpop.xlane.xlu0 %2221
    %v2223 = vsel %vm722, %v2219, -inf
    %2224 = vmax.xlane.f32.xlu0 %v2223
    %v2225 = vpop.xlane.xlu0 %2224
    %v2226 = vsub.f32 %v2218, %v2222
    %v2227 = vsub.f32 %v2219, %v2225
    %v2228 = vmul.f32 %v2226, 1.442695
    %v2229 = vpow.pop %v2228
    %v2230 = vmul.f32 %v2227, 1.442695
    %v2231 = vpow.pop %v2230
    %v2232 = vsel %vm722, %v2229, 0.0
    %2233 = vadd.xlane.f32.xlu0 %v2232
    %v2234 = vpop.xlane.xlu0 %2233
    %v2235 = vsel %vm722, %v2231, 0.0
    %2236 = vadd.xlane.f32.xlu0 %v2235
    %v2237 = vpop.xlane.xlu0 %2236
    %v2238 = vrcp.pop %v2234
    %v2239 = vrcp.pop %v2237
    %v2240 = vmul.f32 %v2229, %v2238
    %v2241 = vmul.f32 %v2231, %v2239
    %v2242 = vpack.c.bf16 %v2240, %v2240
    %v2243 = vpack.c.bf16 %v2241, %v2241
    %2244 = vrot.lane.b32.xlu0 %v2116, 32
    %v2245 = vpop.permute.xlu0 %2244
    %v2247 = vsel %vm722, %v2242, 0
    %v2250 = vsel %vm752, %v2245, 0
    %2252 = vmatprep.subr.bf16.mxu0 0
    %2253 = vmatpush1.bf16.msra.mxu0 0
    %2254 = vmatprep.subr.bf16.mxu0 0
    %2255 = vmatpush1.bf16.msra.mxu0 0
    %2256 = vmatprep.subr.bf16.mxu0 0
    %2257 = vmatpush1.bf16.msra.mxu0 0
    %2258 = vmatprep.subr.bf16.mxu0 0
    %2259 = vmatpush1.bf16.msra.mxu0 0
    %2260 = vmatprep.subr.bf16.mxu0 0
    %2261 = vmatpush1.bf16.msra.mxu0 0
    %2262 = vmatprep.subr.bf16.mxu0 0
    %2263 = vmatpush1.bf16.msra.mxu0 0
    %2264 = vmatprep.subr.bf16.mxu0 0
    %2265 = vmatpush1.bf16.msra.mxu0 0
    %2266 = vmatprep.subr.bf16.mxu0 0
    %2267 = vmatpush1.bf16.msra.mxu0 %v2250
    %2268 = vmatprep.subr.bf16.mxu0 0
    %2269 = vmatpush2.bf16.msra.mxu0 0
    %2270 = vmatprep.subr.bf16.mxu0 0
    %2271 = vmatpush2.bf16.msra.mxu0 0
    %2272 = vmatprep.subr.bf16.mxu0 0
    %2273 = vmatpush2.bf16.msra.mxu0 0
    %2274 = vmatprep.subr.bf16.mxu0 0
    %2275 = vmatpush2.bf16.msra.mxu0 0
    %2276 = vmatprep.subr.bf16.mxu0 0
    %2277 = vmatpush2.bf16.msra.mxu0 0
    %2278 = vmatprep.subr.bf16.mxu0 0
    %2279 = vmatpush2.bf16.msra.mxu0 0
    %2280 = vmatprep.subr.bf16.mxu0 0
    %2281 = vmatpush2.bf16.msra.mxu0 0
    %2282 = vmatprep.subr.bf16.mxu0 0
    %2283 = vmatpush2.bf16.msra.mxu0 0
    %2284 = vmatprep.mubr.bf16.mxu0 0
    %2285 = vmatmul.mubr.bf16.gmra.mxu0 %v2247
    %v2286 = vpop.f32.mrf.mxu0
    %v2287 = vadd.f32 0.0, %v2286
    %v2288 = vpop.f32.mrf.mxu0
    %v2289 = vpop.f32.mrf.mxu0
    %v2290 = vpop.f32.mrf.mxu0
    %2291 = vdwg.mxu0
    %2292 = vrot.lane.b32.xlu0 %v2117, 32
    %v2293 = vpop.permute.xlu0 %2292
    %v2295 = vsel %vm722, %v2243, 0
    %v2298 = vsel %vm752, %v2293, 0
    %2300 = vmatprep.subr.bf16.mxu0 0
    %2301 = vmatpush1.bf16.msra.mxu0 0
    %2302 = vmatprep.subr.bf16.mxu0 0
    %2303 = vmatpush1.bf16.msra.mxu0 0
    %2304 = vmatprep.subr.bf16.mxu0 0
    %2305 = vmatpush1.bf16.msra.mxu0 0
    %2306 = vmatprep.subr.bf16.mxu0 0
    %2307 = vmatpush1.bf16.msra.mxu0 0
    %2308 = vmatprep.subr.bf16.mxu0 0
    %2309 = vmatpush1.bf16.msra.mxu0 0
    %2310 = vmatprep.subr.bf16.mxu0 0
    %2311 = vmatpush1.bf16.msra.mxu0 0
    %2312 = vmatprep.subr.bf16.mxu0 0
    %2313 = vmatpush1.bf16.msra.mxu0 0
    %2314 = vmatprep.subr.bf16.mxu0 0
    %2315 = vmatpush1.bf16.msra.mxu0 %v2298
    %2316 = vmatprep.subr.bf16.mxu0 0
    %2317 = vmatpush2.bf16.msra.mxu0 0
    %2318 = vmatprep.subr.bf16.mxu0 0
    %2319 = vmatpush2.bf16.msra.mxu0 0
    %2320 = vmatprep.subr.bf16.mxu0 0
    %2321 = vmatpush2.bf16.msra.mxu0 0
    %2322 = vmatprep.subr.bf16.mxu0 0
    %2323 = vmatpush2.bf16.msra.mxu0 0
    %2324 = vmatprep.subr.bf16.mxu0 0
    %2325 = vmatpush2.bf16.msra.mxu0 0
    %2326 = vmatprep.subr.bf16.mxu0 0
    %2327 = vmatpush2.bf16.msra.mxu0 0
    %2328 = vmatprep.subr.bf16.mxu0 0
    %2329 = vmatpush2.bf16.msra.mxu0 0
    %2330 = vmatprep.subr.bf16.mxu0 0
    %2331 = vmatpush2.bf16.msra.mxu0 0
    %2332 = vmatprep.mubr.bf16.mxu0 0
    %2333 = vmatmul.mubr.bf16.gmra.mxu0 %v2295
    %v2334 = vpop.f32.mrf.mxu0
    %v2335 = vadd.f32 0.0, %v2334
    %v2336 = vpop.f32.mrf.mxu0
    %v2337 = vpop.f32.mrf.mxu0
    %v2338 = vpop.f32.mrf.mxu0
    %2339 = vdwg.mxu0
    %2340 = vrot.lane.b32.xlu0 %v2116, 116
    %v2341 = vpop.permute.xlu0 %2340
    %2342 = vrot.lane.b32.xlu0 %v2116, 68
    %v2343 = vpop.permute.xlu0 %2342
    %v2345 = vsel %vm589, %v2341, 0
    %v2348 = vsel %vm589, %v2343, 0
    %2350 = vmatprep.subr.bf16.mxu0 0
    %2351 = vmatpush1.bf16.xpose.msra.mxu0 0
    %2352 = vmatprep.subr.bf16.mxu0 0
    %2353 = vmatpush1.bf16.xpose.msra.mxu0 0
    %2354 = vmatprep.subr.bf16.mxu0 0
    %2355 = vmatpush1.bf16.xpose.msra.mxu0 0
    %2356 = vmatprep.subr.bf16.mxu0 0
    %2357 = vmatpush1.bf16.xpose.msra.mxu0 0
    %2358 = vmatprep.subr.bf16.mxu0 0
    %2359 = vmatpush1.bf16.xpose.msra.mxu0 0
    %2360 = vmatprep.subr.bf16.mxu0 0
    %2361 = vmatpush1.bf16.xpose.msra.mxu0 0
    %2362 = vmatprep.subr.bf16.mxu0 0
    %2363 = vmatpush1.bf16.xpose.msra.mxu0 0
    %2364 = vmatprep.subr.bf16.mxu0 0
    %2365 = vmatpush1.bf16.xpose.msra.mxu0 %v2348
    %2366 = vmatprep.subr.bf16.mxu0 0
    %2367 = vmatpush2.bf16.xpose.msra.mxu0 0
    %2368 = vmatprep.subr.bf16.mxu0 0
    %2369 = vmatpush2.bf16.xpose.msra.mxu0 0
    %2370 = vmatprep.subr.bf16.mxu0 0
    %2371 = vmatpush2.bf16.xpose.msra.mxu0 0
    %2372 = vmatprep.subr.bf16.mxu0 0
    %2373 = vmatpush2.bf16.xpose.msra.mxu0 0
    %2374 = vmatprep.subr.bf16.mxu0 0
    %2375 = vmatpush2.bf16.xpose.msra.mxu0 0
    %2376 = vmatprep.subr.bf16.mxu0 0
    %2377 = vmatpush2.bf16.xpose.msra.mxu0 0
    %2378 = vmatprep.subr.bf16.mxu0 0
    %2379 = vmatpush2.bf16.xpose.msra.mxu0 0
    %2380 = vmatprep.subr.bf16.mxu0 0
    %2381 = vmatpush2.bf16.xpose.msra.mxu0 0
    %2382 = vmatprep.mubr.bf16.mxu0 0
    %2383 = vmatmul.mubr.bf16.gmra.mxu0 %v2345
    %v2384 = vpop.f32.mrf.mxu0
    %v2385 = vadd.f32 0.0, %v2384
    %v2386 = vpop.f32.mrf.mxu0
    %v2387 = vpop.f32.mrf.mxu0
    %v2388 = vpop.f32.mrf.mxu0
    %2389 = vdwg.mxu0
    %2390 = vrot.lane.b32.xlu0 %v2117, 116
    %v2391 = vpop.permute.xlu0 %2390
    %2392 = vrot.lane.b32.xlu0 %v2117, 68
    %v2393 = vpop.permute.xlu0 %2392
    %v2395 = vsel %vm589, %v2391, 0
    %v2398 = vsel %vm589, %v2393, 0
    %2400 = vmatprep.subr.bf16.mxu0 0
    %2401 = vmatpush1.bf16.xpose.msra.mxu0 0
    %2402 = vmatprep.subr.bf16.mxu0 0
    %2403 = vmatpush1.bf16.xpose.msra.mxu0 0
    %2404 = vmatprep.subr.bf16.mxu0 0
    %2405 = vmatpush1.bf16.xpose.msra.mxu0 0
    %2406 = vmatprep.subr.bf16.mxu0 0
    %2407 = vmatpush1.bf16.xpose.msra.mxu0 0
    %2408 = vmatprep.subr.bf16.mxu0 0
    %2409 = vmatpush1.bf16.xpose.msra.mxu0 0
    %2410 = vmatprep.subr.bf16.mxu0 0
    %2411 = vmatpush1.bf16.xpose.msra.mxu0 0
    %2412 = vmatprep.subr.bf16.mxu0 0
    %2413 = vmatpush1.bf16.xpose.msra.mxu0 0
    %2414 = vmatprep.subr.bf16.mxu0 0
    %2415 = vmatpush1.bf16.xpose.msra.mxu0 %v2398
    %2416 = vmatprep.subr.bf16.mxu0 0
    %2417 = vmatpush2.bf16.xpose.msra.mxu0 0
    %2418 = vmatprep.subr.bf16.mxu0 0
    %2419 = vmatpush2.bf16.xpose.msra.mxu0 0
    %2420 = vmatprep.subr.bf16.mxu0 0
    %2421 = vmatpush2.bf16.xpose.msra.mxu0 0
    %2422 = vmatprep.subr.bf16.mxu0 0
    %2423 = vmatpush2.bf16.xpose.msra.mxu0 0
    %2424 = vmatprep.subr.bf16.mxu0 0
    %2425 = vmatpush2.bf16.xpose.msra.mxu0 0
    %2426 = vmatprep.subr.bf16.mxu0 0
    %2427 = vmatpush2.bf16.xpose.msra.mxu0 0
    %2428 = vmatprep.subr.bf16.mxu0 0
    %2429 = vmatpush2.bf16.xpose.msra.mxu0 0
    %2430 = vmatprep.subr.bf16.mxu0 0
    %2431 = vmatpush2.bf16.xpose.msra.mxu0 0
    %2432 = vmatprep.mubr.bf16.mxu0 0
    %2433 = vmatmul.mubr.bf16.gmra.mxu0 %v2395
    %v2434 = vpop.f32.mrf.mxu0
    %v2435 = vadd.f32 0.0, %v2434
    %v2436 = vpop.f32.mrf.mxu0
    %v2437 = vpop.f32.mrf.mxu0
    %v2438 = vpop.f32.mrf.mxu0
    %2439 = vdwg.mxu0
    %v2440 = vmul.f32 %v2385, 0.28867513
    %v2441 = vmul.f32 %v2435, 0.28867513
    %v2442 = vadd.f32 %v2440, %v713
    %v2443 = vadd.f32 %v2441, %v717
    %v2444 = vsel %vm722, %v2442, -inf
    %2445 = vmax.xlane.f32.xlu0 %v2444
    %v2446 = vpop.xlane.xlu0 %2445
    %v2447 = vsel %vm722, %v2443, -inf
    %2448 = vmax.xlane.f32.xlu0 %v2447
    %v2449 = vpop.xlane.xlu0 %2448
    %v2450 = vsub.f32 %v2442, %v2446
    %v2451 = vsub.f32 %v2443, %v2449
    %v2452 = vmul.f32 %v2450, 1.442695
    %v2453 = vpow.pop %v2452
    %v2454 = vmul.f32 %v2451, 1.442695
    %v2455 = vpow.pop %v2454
    %v2456 = vsel %vm722, %v2453, 0.0
    %2457 = vadd.xlane.f32.xlu0 %v2456
    %v2458 = vpop.xlane.xlu0 %2457
    %v2459 = vsel %vm722, %v2455, 0.0
    %2460 = vadd.xlane.f32.xlu0 %v2459
    %v2461 = vpop.xlane.xlu0 %2460
    %v2462 = vrcp.pop %v2458
    %v2463 = vrcp.pop %v2461
    %v2464 = vmul.f32 %v2453, %v2462
    %v2465 = vmul.f32 %v2455, %v2463
    %v2466 = vpack.c.bf16 %v2464, %v2464
    %v2467 = vpack.c.bf16 %v2465, %v2465
    %2468 = vrot.lane.b32.xlu0 %v2116, 20
    %v2469 = vpop.permute.xlu0 %2468
    %v2471 = vsel %vm722, %v2466, 0
    %v2474 = vsel %vm752, %v2469, 0
    %2476 = vmatprep.subr.bf16.mxu0 0
    %2477 = vmatpush1.bf16.msra.mxu0 0
    %2478 = vmatprep.subr.bf16.mxu0 0
    %2479 = vmatpush1.bf16.msra.mxu0 0
    %2480 = vmatprep.subr.bf16.mxu0 0
    %2481 = vmatpush1.bf16.msra.mxu0 0
    %2482 = vmatprep.subr.bf16.mxu0 0
    %2483 = vmatpush1.bf16.msra.mxu0 0
    %2484 = vmatprep.subr.bf16.mxu0 0
    %2485 = vmatpush1.bf16.msra.mxu0 0
    %2486 = vmatprep.subr.bf16.mxu0 0
    %2487 = vmatpush1.bf16.msra.mxu0 0
    %2488 = vmatprep.subr.bf16.mxu0 0
    %2489 = vmatpush1.bf16.msra.mxu0 0
    %2490 = vmatprep.subr.bf16.mxu0 0
    %2491 = vmatpush1.bf16.msra.mxu0 %v2474
    %2492 = vmatprep.subr.bf16.mxu0 0
    %2493 = vmatpush2.bf16.msra.mxu0 0
    %2494 = vmatprep.subr.bf16.mxu0 0
    %2495 = vmatpush2.bf16.msra.mxu0 0
    %2496 = vmatprep.subr.bf16.mxu0 0
    %2497 = vmatpush2.bf16.msra.mxu0 0
    %2498 = vmatprep.subr.bf16.mxu0 0
    %2499 = vmatpush2.bf16.msra.mxu0 0
    %2500 = vmatprep.subr.bf16.mxu0 0
    %2501 = vmatpush2.bf16.msra.mxu0 0
    %2502 = vmatprep.subr.bf16.mxu0 0
    %2503 = vmatpush2.bf16.msra.mxu0 0
    %2504 = vmatprep.subr.bf16.mxu0 0
    %2505 = vmatpush2.bf16.msra.mxu0 0
    %2506 = vmatprep.subr.bf16.mxu0 0
    %2507 = vmatpush2.bf16.msra.mxu0 0
    %2508 = vmatprep.mubr.bf16.mxu0 0
    %2509 = vmatmul.mubr.bf16.gmra.mxu0 %v2471
    %v2510 = vpop.f32.mrf.mxu0
    %v2511 = vadd.f32 0.0, %v2510
    %v2512 = vpop.f32.mrf.mxu0
    %v2513 = vpop.f32.mrf.mxu0
    %v2514 = vpop.f32.mrf.mxu0
    %2515 = vdwg.mxu0
    %2516 = vrot.lane.b32.xlu0 %v2117, 20
    %v2517 = vpop.permute.xlu0 %2516
    %v2519 = vsel %vm722, %v2467, 0
    %v2522 = vsel %vm752, %v2517, 0
    %2524 = vmatprep.subr.bf16.mxu0 0
    %2525 = vmatpush1.bf16.msra.mxu0 0
    %2526 = vmatprep.subr.bf16.mxu0 0
    %2527 = vmatpush1.bf16.msra.mxu0 0
    %2528 = vmatprep.subr.bf16.mxu0 0
    %2529 = vmatpush1.bf16.msra.mxu0 0
    %2530 = vmatprep.subr.bf16.mxu0 0
    %2531 = vmatpush1.bf16.msra.mxu0 0
    %2532 = vmatprep.subr.bf16.mxu0 0
    %2533 = vmatpush1.bf16.msra.mxu0 0
    %2534 = vmatprep.subr.bf16.mxu0 0
    %2535 = vmatpush1.bf16.msra.mxu0 0
    %2536 = vmatprep.subr.bf16.mxu0 0
    %2537 = vmatpush1.bf16.msra.mxu0 0
    %2538 = vmatprep.subr.bf16.mxu0 0
    %2539 = vmatpush1.bf16.msra.mxu0 %v2522
    %2540 = vmatprep.subr.bf16.mxu0 0
    %2541 = vmatpush2.bf16.msra.mxu0 0
    %2542 = vmatprep.subr.bf16.mxu0 0
    %2543 = vmatpush2.bf16.msra.mxu0 0
    %2544 = vmatprep.subr.bf16.mxu0 0
    %2545 = vmatpush2.bf16.msra.mxu0 0
    %2546 = vmatprep.subr.bf16.mxu0 0
    %2547 = vmatpush2.bf16.msra.mxu0 0
    %2548 = vmatprep.subr.bf16.mxu0 0
    %2549 = vmatpush2.bf16.msra.mxu0 0
    %2550 = vmatprep.subr.bf16.mxu0 0
    %2551 = vmatpush2.bf16.msra.mxu0 0
    %2552 = vmatprep.subr.bf16.mxu0 0
    %2553 = vmatpush2.bf16.msra.mxu0 0
    %2554 = vmatprep.subr.bf16.mxu0 0
    %2555 = vmatpush2.bf16.msra.mxu0 0
    %2556 = vmatprep.mubr.bf16.mxu0 0
    %2557 = vmatmul.mubr.bf16.gmra.mxu0 %v2519
    %v2558 = vpop.f32.mrf.mxu0
    %v2559 = vadd.f32 0.0, %v2558
    %v2560 = vpop.f32.mrf.mxu0
    %v2561 = vpop.f32.mrf.mxu0
    %v2562 = vpop.f32.mrf.mxu0
    %2563 = vdwg.mxu0
    %2564 = vrot.lane.b32.xlu0 %v2116, 104
    %v2565 = vpop.permute.xlu0 %2564
    %2566 = vrot.lane.b32.xlu0 %v2116, 56
    %v2567 = vpop.permute.xlu0 %2566
    %v2569 = vsel %vm589, %v2565, 0
    %v2572 = vsel %vm589, %v2567, 0
    %2574 = vmatprep.subr.bf16.mxu0 0
    %2575 = vmatpush1.bf16.xpose.msra.mxu0 0
    %2576 = vmatprep.subr.bf16.mxu0 0
    %2577 = vmatpush1.bf16.xpose.msra.mxu0 0
    %2578 = vmatprep.subr.bf16.mxu0 0
    %2579 = vmatpush1.bf16.xpose.msra.mxu0 0
    %2580 = vmatprep.subr.bf16.mxu0 0
    %2581 = vmatpush1.bf16.xpose.msra.mxu0 0
    %2582 = vmatprep.subr.bf16.mxu0 0
    %2583 = vmatpush1.bf16.xpose.msra.mxu0 0
    %2584 = vmatprep.subr.bf16.mxu0 0
    %2585 = vmatpush1.bf16.xpose.msra.mxu0 0
    %2586 = vmatprep.subr.bf16.mxu0 0
    %2587 = vmatpush1.bf16.xpose.msra.mxu0 0
    %2588 = vmatprep.subr.bf16.mxu0 0
    %2589 = vmatpush1.bf16.xpose.msra.mxu0 %v2572
    %2590 = vmatprep.subr.bf16.mxu0 0
    %2591 = vmatpush2.bf16.xpose.msra.mxu0 0
    %2592 = vmatprep.subr.bf16.mxu0 0
    %2593 = vmatpush2.bf16.xpose.msra.mxu0 0
    %2594 = vmatprep.subr.bf16.mxu0 0
    %2595 = vmatpush2.bf16.xpose.msra.mxu0 0
    %2596 = vmatprep.subr.bf16.mxu0 0
    %2597 = vmatpush2.bf16.xpose.msra.mxu0 0
    %2598 = vmatprep.subr.bf16.mxu0 0
    %2599 = vmatpush2.bf16.xpose.msra.mxu0 0
    %2600 = vmatprep.subr.bf16.mxu0 0
    %2601 = vmatpush2.bf16.xpose.msra.mxu0 0
    %2602 = vmatprep.subr.bf16.mxu0 0
    %2603 = vmatpush2.bf16.xpose.msra.mxu0 0
    %2604 = vmatprep.subr.bf16.mxu0 0
    %2605 = vmatpush2.bf16.xpose.msra.mxu0 0
    %2606 = vmatprep.mubr.bf16.mxu0 0
    %2607 = vmatmul.mubr.bf16.gmra.mxu0 %v2569
    %v2608 = vpop.f32.mrf.mxu0
    %v2609 = vadd.f32 0.0, %v2608
    %v2610 = vpop.f32.mrf.mxu0
    %v2611 = vpop.f32.mrf.mxu0
    %v2612 = vpop.f32.mrf.mxu0
    %2613 = vdwg.mxu0
    %2614 = vrot.lane.b32.xlu0 %v2117, 104
    %v2615 = vpop.permute.xlu0 %2614
    %2616 = vrot.lane.b32.xlu0 %v2117, 56
    %v2617 = vpop.permute.xlu0 %2616
    %v2619 = vsel %vm589, %v2615, 0
    %v2622 = vsel %vm589, %v2617, 0
    %2624 = vmatprep.subr.bf16.mxu0 0
    %2625 = vmatpush1.bf16.xpose.msra.mxu0 0
    %2626 = vmatprep.subr.bf16.mxu0 0
    %2627 = vmatpush1.bf16.xpose.msra.mxu0 0
    %2628 = vmatprep.subr.bf16.mxu0 0
    %2629 = vmatpush1.bf16.xpose.msra.mxu0 0
    %2630 = vmatprep.subr.bf16.mxu0 0
    %2631 = vmatpush1.bf16.xpose.msra.mxu0 0
    %2632 = vmatprep.subr.bf16.mxu0 0
    %2633 = vmatpush1.bf16.xpose.msra.mxu0 0
    %2634 = vmatprep.subr.bf16.mxu0 0
    %2635 = vmatpush1.bf16.xpose.msra.mxu0 0
    %2636 = vmatprep.subr.bf16.mxu0 0
    %2637 = vmatpush1.bf16.xpose.msra.mxu0 0
    %2638 = vmatprep.subr.bf16.mxu0 0
    %2639 = vmatpush1.bf16.xpose.msra.mxu0 %v2622
    %2640 = vmatprep.subr.bf16.mxu0 0
    %2641 = vmatpush2.bf16.xpose.msra.mxu0 0
    %2642 = vmatprep.subr.bf16.mxu0 0
    %2643 = vmatpush2.bf16.xpose.msra.mxu0 0
    %2644 = vmatprep.subr.bf16.mxu0 0
    %2645 = vmatpush2.bf16.xpose.msra.mxu0 0
    %2646 = vmatprep.subr.bf16.mxu0 0
    %2647 = vmatpush2.bf16.xpose.msra.mxu0 0
    %2648 = vmatprep.subr.bf16.mxu0 0
    %2649 = vmatpush2.bf16.xpose.msra.mxu0 0
    %2650 = vmatprep.subr.bf16.mxu0 0
    %2651 = vmatpush2.bf16.xpose.msra.mxu0 0
    %2652 = vmatprep.subr.bf16.mxu0 0
    %2653 = vmatpush2.bf16.xpose.msra.mxu0 0
    %2654 = vmatprep.subr.bf16.mxu0 0
    %2655 = vmatpush2.bf16.xpose.msra.mxu0 0
    %2656 = vmatprep.mubr.bf16.mxu0 0
    %2657 = vmatmul.mubr.bf16.gmra.mxu0 %v2619
    %v2658 = vpop.f32.mrf.mxu0
    %v2659 = vadd.f32 0.0, %v2658
    %v2660 = vpop.f32.mrf.mxu0
    %v2661 = vpop.f32.mrf.mxu0
    %v2662 = vpop.f32.mrf.mxu0
    %2663 = vdwg.mxu0
    %v2664 = vmul.f32 %v2609, 0.28867513
    %v2665 = vmul.f32 %v2659, 0.28867513
    %v2666 = vadd.f32 %v2664, %v713
    %v2667 = vadd.f32 %v2665, %v717
    %v2668 = vsel %vm722, %v2666, -inf
    %2669 = vmax.xlane.f32.xlu0 %v2668
    %v2670 = vpop.xlane.xlu0 %2669
    %v2671 = vsel %vm722, %v2667, -inf
    %2672 = vmax.xlane.f32.xlu0 %v2671
    %v2673 = vpop.xlane.xlu0 %2672
    %v2674 = vsub.f32 %v2666, %v2670
    %v2675 = vsub.f32 %v2667, %v2673
    %v2676 = vmul.f32 %v2674, 1.442695
    %v2677 = vpow.pop %v2676
    %v2678 = vmul.f32 %v2675, 1.442695
    %v2679 = vpow.pop %v2678
    %v2680 = vsel %vm722, %v2677, 0.0
    %2681 = vadd.xlane.f32.xlu0 %v2680
    %v2682 = vpop.xlane.xlu0 %2681
    %v2683 = vsel %vm722, %v2679, 0.0
    %2684 = vadd.xlane.f32.xlu0 %v2683
    %v2685 = vpop.xlane.xlu0 %2684
    %v2686 = vrcp.pop %v2682
    %v2687 = vrcp.pop %v2685
    %v2688 = vmul.f32 %v2677, %v2686
    %v2689 = vmul.f32 %v2679, %v2687
    %v2690 = vpack.c.bf16 %v2688, %v2688
    %v2691 = vpack.c.bf16 %v2689, %v2689
    %v2692 = vpack.c.bf16 %v2110, %v2110
    %v2693 = vpack.c.bf16 %v2114, %v2114
    %2695 = vrot.lane.b32.xlu0 %v2116, 8
    %v2696 = vpop.permute.xlu0 %2695
    %2697 = vrot.lane.b32.xlu0 %v2692, 8
    %v2698 = vpop.permute.xlu0 %2697
    %v2699 = vsel %vm1203, %v2696, %v2698
    %v2701 = vsel %vm722, %v2690, 0
    %v2704 = vsel %vm752, %v2699, 0
    %2706 = vmatprep.subr.bf16.mxu0 0
    %2707 = vmatpush1.bf16.msra.mxu0 0
    %2708 = vmatprep.subr.bf16.mxu0 0
    %2709 = vmatpush1.bf16.msra.mxu0 0
    %2710 = vmatprep.subr.bf16.mxu0 0
    %2711 = vmatpush1.bf16.msra.mxu0 0
    %2712 = vmatprep.subr.bf16.mxu0 0
    %2713 = vmatpush1.bf16.msra.mxu0 0
    %2714 = vmatprep.subr.bf16.mxu0 0
    %2715 = vmatpush1.bf16.msra.mxu0 0
    %2716 = vmatprep.subr.bf16.mxu0 0
    %2717 = vmatpush1.bf16.msra.mxu0 0
    %2718 = vmatprep.subr.bf16.mxu0 0
    %2719 = vmatpush1.bf16.msra.mxu0 0
    %2720 = vmatprep.subr.bf16.mxu0 0
    %2721 = vmatpush1.bf16.msra.mxu0 %v2704
    %2722 = vmatprep.subr.bf16.mxu0 0
    %2723 = vmatpush2.bf16.msra.mxu0 0
    %2724 = vmatprep.subr.bf16.mxu0 0
    %2725 = vmatpush2.bf16.msra.mxu0 0
    %2726 = vmatprep.subr.bf16.mxu0 0
    %2727 = vmatpush2.bf16.msra.mxu0 0
    %2728 = vmatprep.subr.bf16.mxu0 0
    %2729 = vmatpush2.bf16.msra.mxu0 0
    %2730 = vmatprep.subr.bf16.mxu0 0
    %2731 = vmatpush2.bf16.msra.mxu0 0
    %2732 = vmatprep.subr.bf16.mxu0 0
    %2733 = vmatpush2.bf16.msra.mxu0 0
    %2734 = vmatprep.subr.bf16.mxu0 0
    %2735 = vmatpush2.bf16.msra.mxu0 0
    %2736 = vmatprep.subr.bf16.mxu0 0
    %2737 = vmatpush2.bf16.msra.mxu0 0
    %2738 = vmatprep.mubr.bf16.mxu0 0
    %2739 = vmatmul.mubr.bf16.gmra.mxu0 %v2701
    %v2740 = vpop.f32.mrf.mxu0
    %v2741 = vadd.f32 0.0, %v2740
    %v2742 = vpop.f32.mrf.mxu0
    %v2743 = vpop.f32.mrf.mxu0
    %v2744 = vpop.f32.mrf.mxu0
    %2745 = vdwg.mxu0
    %2747 = vrot.lane.b32.xlu0 %v2117, 8
    %v2748 = vpop.permute.xlu0 %2747
    %2749 = vrot.lane.b32.xlu0 %v2693, 8
    %v2750 = vpop.permute.xlu0 %2749
    %v2751 = vsel %vm1203, %v2748, %v2750
    %v2753 = vsel %vm722, %v2691, 0
    %v2756 = vsel %vm752, %v2751, 0
    %2758 = vmatprep.subr.bf16.mxu0 0
    %2759 = vmatpush1.bf16.msra.mxu0 0
    %2760 = vmatprep.subr.bf16.mxu0 0
    %2761 = vmatpush1.bf16.msra.mxu0 0
    %2762 = vmatprep.subr.bf16.mxu0 0
    %2763 = vmatpush1.bf16.msra.mxu0 0
    %2764 = vmatprep.subr.bf16.mxu0 0
    %2765 = vmatpush1.bf16.msra.mxu0 0
    %2766 = vmatprep.subr.bf16.mxu0 0
    %2767 = vmatpush1.bf16.msra.mxu0 0
    %2768 = vmatprep.subr.bf16.mxu0 0
    %2769 = vmatpush1.bf16.msra.mxu0 0
    %2770 = vmatprep.subr.bf16.mxu0 0
    %2771 = vmatpush1.bf16.msra.mxu0 0
    %2772 = vmatprep.subr.bf16.mxu0 0
    %2773 = vmatpush1.bf16.msra.mxu0 %v2756
    %2774 = vmatprep.subr.bf16.mxu0 0
    %2775 = vmatpush2.bf16.msra.mxu0 0
    %2776 = vmatprep.subr.bf16.mxu0 0
    %2777 = vmatpush2.bf16.msra.mxu0 0
    %2778 = vmatprep.subr.bf16.mxu0 0
    %2779 = vmatpush2.bf16.msra.mxu0 0
    %2780 = vmatprep.subr.bf16.mxu0 0
    %2781 = vmatpush2.bf16.msra.mxu0 0
    %2782 = vmatprep.subr.bf16.mxu0 0
    %2783 = vmatpush2.bf16.msra.mxu0 0
    %2784 = vmatprep.subr.bf16.mxu0 0
    %2785 = vmatpush2.bf16.msra.mxu0 0
    %2786 = vmatprep.subr.bf16.mxu0 0
    %2787 = vmatpush2.bf16.msra.mxu0 0
    %2788 = vmatprep.subr.bf16.mxu0 0
    %2789 = vmatpush2.bf16.msra.mxu0 0
    %2790 = vmatprep.mubr.bf16.mxu0 0
    %2791 = vmatmul.mubr.bf16.gmra.mxu0 %v2753
    %v2792 = vpop.f32.mrf.mxu0
    %v2793 = vadd.f32 0.0, %v2792
    %v2794 = vpop.f32.mrf.mxu0
    %v2795 = vpop.f32.mrf.mxu0
    %v2796 = vpop.f32.mrf.mxu0
    %2797 = vdwg.mxu0
    %2798 = vrot.lane.b32.xlu0 %v2116, 92
    %v2799 = vpop.permute.xlu0 %2798
    %2800 = vrot.lane.b32.xlu0 %v2116, 44
    %v2801 = vpop.permute.xlu0 %2800
    %v2803 = vsel %vm589, %v2799, 0
    %v2806 = vsel %vm589, %v2801, 0
    %2808 = vmatprep.subr.bf16.mxu0 0
    %2809 = vmatpush1.bf16.xpose.msra.mxu0 0
    %2810 = vmatprep.subr.bf16.mxu0 0
    %2811 = vmatpush1.bf16.xpose.msra.mxu0 0
    %2812 = vmatprep.subr.bf16.mxu0 0
    %2813 = vmatpush1.bf16.xpose.msra.mxu0 0
    %2814 = vmatprep.subr.bf16.mxu0 0
    %2815 = vmatpush1.bf16.xpose.msra.mxu0 0
    %2816 = vmatprep.subr.bf16.mxu0 0
    %2817 = vmatpush1.bf16.xpose.msra.mxu0 0
    %2818 = vmatprep.subr.bf16.mxu0 0
    %2819 = vmatpush1.bf16.xpose.msra.mxu0 0
    %2820 = vmatprep.subr.bf16.mxu0 0
    %2821 = vmatpush1.bf16.xpose.msra.mxu0 0
    %2822 = vmatprep.subr.bf16.mxu0 0
    %2823 = vmatpush1.bf16.xpose.msra.mxu0 %v2806
    %2824 = vmatprep.subr.bf16.mxu0 0
    %2825 = vmatpush2.bf16.xpose.msra.mxu0 0
    %2826 = vmatprep.subr.bf16.mxu0 0
    %2827 = vmatpush2.bf16.xpose.msra.mxu0 0
    %2828 = vmatprep.subr.bf16.mxu0 0
    %2829 = vmatpush2.bf16.xpose.msra.mxu0 0
    %2830 = vmatprep.subr.bf16.mxu0 0
    %2831 = vmatpush2.bf16.xpose.msra.mxu0 0
    %2832 = vmatprep.subr.bf16.mxu0 0
    %2833 = vmatpush2.bf16.xpose.msra.mxu0 0
    %2834 = vmatprep.subr.bf16.mxu0 0
    %2835 = vmatpush2.bf16.xpose.msra.mxu0 0
    %2836 = vmatprep.subr.bf16.mxu0 0
    %2837 = vmatpush2.bf16.xpose.msra.mxu0 0
    %2838 = vmatprep.subr.bf16.mxu0 0
    %2839 = vmatpush2.bf16.xpose.msra.mxu0 0
    %2840 = vmatprep.mubr.bf16.mxu0 0
    %2841 = vmatmul.mubr.bf16.gmra.mxu0 %v2803
    %v2842 = vpop.f32.mrf.mxu0
    %v2843 = vadd.f32 0.0, %v2842
    %v2844 = vpop.f32.mrf.mxu0
    %v2845 = vpop.f32.mrf.mxu0
    %v2846 = vpop.f32.mrf.mxu0
    %2847 = vdwg.mxu0
    %2848 = vrot.lane.b32.xlu0 %v2117, 92
    %v2849 = vpop.permute.xlu0 %2848
    %2850 = vrot.lane.b32.xlu0 %v2117, 44
    %v2851 = vpop.permute.xlu0 %2850
    %v2853 = vsel %vm589, %v2849, 0
    %v2856 = vsel %vm589, %v2851, 0
    %2858 = vmatprep.subr.bf16.mxu0 0
    %2859 = vmatpush1.bf16.xpose.msra.mxu0 0
    %2860 = vmatprep.subr.bf16.mxu0 0
    %2861 = vmatpush1.bf16.xpose.msra.mxu0 0
    %2862 = vmatprep.subr.bf16.mxu0 0
    %2863 = vmatpush1.bf16.xpose.msra.mxu0 0
    %2864 = vmatprep.subr.bf16.mxu0 0
    %2865 = vmatpush1.bf16.xpose.msra.mxu0 0
    %2866 = vmatprep.subr.bf16.mxu0 0
    %2867 = vmatpush1.bf16.xpose.msra.mxu0 0
    %2868 = vmatprep.subr.bf16.mxu0 0
    %2869 = vmatpush1.bf16.xpose.msra.mxu0 0
    %2870 = vmatprep.subr.bf16.mxu0 0
    %2871 = vmatpush1.bf16.xpose.msra.mxu0 0
    %2872 = vmatprep.subr.bf16.mxu0 0
    %2873 = vmatpush1.bf16.xpose.msra.mxu0 %v2856
    %2874 = vmatprep.subr.bf16.mxu0 0
    %2875 = vmatpush2.bf16.xpose.msra.mxu0 0
    %2876 = vmatprep.subr.bf16.mxu0 0
    %2877 = vmatpush2.bf16.xpose.msra.mxu0 0
    %2878 = vmatprep.subr.bf16.mxu0 0
    %2879 = vmatpush2.bf16.xpose.msra.mxu0 0
    %2880 = vmatprep.subr.bf16.mxu0 0
    %2881 = vmatpush2.bf16.xpose.msra.mxu0 0
    %2882 = vmatprep.subr.bf16.mxu0 0
    %2883 = vmatpush2.bf16.xpose.msra.mxu0 0
    %2884 = vmatprep.subr.bf16.mxu0 0
    %2885 = vmatpush2.bf16.xpose.msra.mxu0 0
    %2886 = vmatprep.subr.bf16.mxu0 0
    %2887 = vmatpush2.bf16.xpose.msra.mxu0 0
    %2888 = vmatprep.subr.bf16.mxu0 0
    %2889 = vmatpush2.bf16.xpose.msra.mxu0 0
    %2890 = vmatprep.mubr.bf16.mxu0 0
    %2891 = vmatmul.mubr.bf16.gmra.mxu0 %v2853
    %v2892 = vpop.f32.mrf.mxu0
    %v2893 = vadd.f32 0.0, %v2892
    %v2894 = vpop.f32.mrf.mxu0
    %v2895 = vpop.f32.mrf.mxu0
    %v2896 = vpop.f32.mrf.mxu0
    %2897 = vdwg.mxu0
    %v2898 = vmul.f32 %v2843, 0.28867513
    %v2899 = vmul.f32 %v2893, 0.28867513
    %v2900 = vadd.f32 %v2898, %v713
    %v2901 = vadd.f32 %v2899, %v717
    %v2902 = vsel %vm722, %v2900, -inf
    %2903 = vmax.xlane.f32.xlu0 %v2902
    %v2904 = vpop.xlane.xlu0 %2903
    %v2905 = vsel %vm722, %v2901, -inf
    %2906 = vmax.xlane.f32.xlu0 %v2905
    %v2907 = vpop.xlane.xlu0 %2906
    %v2908 = vsub.f32 %v2900, %v2904
    %v2909 = vsub.f32 %v2901, %v2907
    %v2910 = vmul.f32 %v2908, 1.442695
    %v2911 = vpow.pop %v2910
    %v2912 = vmul.f32 %v2909, 1.442695
    %v2913 = vpow.pop %v2912
    %v2914 = vsel %vm722, %v2911, 0.0
    %2915 = vadd.xlane.f32.xlu0 %v2914
    %v2916 = vpop.xlane.xlu0 %2915
    %v2917 = vsel %vm722, %v2913, 0.0
    %2918 = vadd.xlane.f32.xlu0 %v2917
    %v2919 = vpop.xlane.xlu0 %2918
    %v2920 = vrcp.pop %v2916
    %v2921 = vrcp.pop %v2919
    %v2922 = vmul.f32 %v2911, %v2920
    %v2923 = vmul.f32 %v2913, %v2921
    %v2924 = vpack.c.bf16 %v2922, %v2922
    %v2925 = vpack.c.bf16 %v2923, %v2923
    %2926 = vrot.lane.b32.xlu0 %v2692, 124
    %v2927 = vpop.permute.xlu0 %2926
    %v2929 = vsel %vm722, %v2924, 0
    %v2932 = vsel %vm752, %v2927, 0
    %2934 = vmatprep.subr.bf16.mxu0 0
    %2935 = vmatpush1.bf16.msra.mxu0 0
    %2936 = vmatprep.subr.bf16.mxu0 0
    %2937 = vmatpush1.bf16.msra.mxu0 0
    %2938 = vmatprep.subr.bf16.mxu0 0
    %2939 = vmatpush1.bf16.msra.mxu0 0
    %2940 = vmatprep.subr.bf16.mxu0 0
    %2941 = vmatpush1.bf16.msra.mxu0 0
    %2942 = vmatprep.subr.bf16.mxu0 0
    %2943 = vmatpush1.bf16.msra.mxu0 0
    %2944 = vmatprep.subr.bf16.mxu0 0
    %2945 = vmatpush1.bf16.msra.mxu0 0
    %2946 = vmatprep.subr.bf16.mxu0 0
    %2947 = vmatpush1.bf16.msra.mxu0 0
    %2948 = vmatprep.subr.bf16.mxu0 0
    %2949 = vmatpush1.bf16.msra.mxu0 %v2932
    %2950 = vmatprep.subr.bf16.mxu0 0
    %2951 = vmatpush2.bf16.msra.mxu0 0
    %2952 = vmatprep.subr.bf16.mxu0 0
    %2953 = vmatpush2.bf16.msra.mxu0 0
    %2954 = vmatprep.subr.bf16.mxu0 0
    %2955 = vmatpush2.bf16.msra.mxu0 0
    %2956 = vmatprep.subr.bf16.mxu0 0
    %2957 = vmatpush2.bf16.msra.mxu0 0
    %2958 = vmatprep.subr.bf16.mxu0 0
    %2959 = vmatpush2.bf16.msra.mxu0 0
    %2960 = vmatprep.subr.bf16.mxu0 0
    %2961 = vmatpush2.bf16.msra.mxu0 0
    %2962 = vmatprep.subr.bf16.mxu0 0
    %2963 = vmatpush2.bf16.msra.mxu0 0
    %2964 = vmatprep.subr.bf16.mxu0 0
    %2965 = vmatpush2.bf16.msra.mxu0 0
    %2966 = vmatprep.mubr.bf16.mxu0 0
    %2967 = vmatmul.mubr.bf16.gmra.mxu0 %v2929
    %v2968 = vpop.f32.mrf.mxu0
    %v2969 = vadd.f32 0.0, %v2968
    %v2970 = vpop.f32.mrf.mxu0
    %v2971 = vpop.f32.mrf.mxu0
    %v2972 = vpop.f32.mrf.mxu0
    %2973 = vdwg.mxu0
    %2974 = vrot.lane.b32.xlu0 %v2693, 124
    %v2975 = vpop.permute.xlu0 %2974
    %v2977 = vsel %vm722, %v2925, 0
    %v2980 = vsel %vm752, %v2975, 0
    %2982 = vmatprep.subr.bf16.mxu0 0
    %2983 = vmatpush1.bf16.msra.mxu0 0
    %2984 = vmatprep.subr.bf16.mxu0 0
    %2985 = vmatpush1.bf16.msra.mxu0 0
    %2986 = vmatprep.subr.bf16.mxu0 0
    %2987 = vmatpush1.bf16.msra.mxu0 0
    %2988 = vmatprep.subr.bf16.mxu0 0
    %2989 = vmatpush1.bf16.msra.mxu0 0
    %2990 = vmatprep.subr.bf16.mxu0 0
    %2991 = vmatpush1.bf16.msra.mxu0 0
    %2992 = vmatprep.subr.bf16.mxu0 0
    %2993 = vmatpush1.bf16.msra.mxu0 0
    %2994 = vmatprep.subr.bf16.mxu0 0
    %2995 = vmatpush1.bf16.msra.mxu0 0
    %2996 = vmatprep.subr.bf16.mxu0 0
    %2997 = vmatpush1.bf16.msra.mxu0 %v2980
    %2998 = vmatprep.subr.bf16.mxu0 0
    %2999 = vmatpush2.bf16.msra.mxu0 0
    %3000 = vmatprep.subr.bf16.mxu0 0
    %3001 = vmatpush2.bf16.msra.mxu0 0
    %3002 = vmatprep.subr.bf16.mxu0 0
    %3003 = vmatpush2.bf16.msra.mxu0 0
    %3004 = vmatprep.subr.bf16.mxu0 0
    %3005 = vmatpush2.bf16.msra.mxu0 0
    %3006 = vmatprep.subr.bf16.mxu0 0
    %3007 = vmatpush2.bf16.msra.mxu0 0
    %3008 = vmatprep.subr.bf16.mxu0 0
    %3009 = vmatpush2.bf16.msra.mxu0 0
    %3010 = vmatprep.subr.bf16.mxu0 0
    %3011 = vmatpush2.bf16.msra.mxu0 0
    %3012 = vmatprep.subr.bf16.mxu0 0
    %3013 = vmatpush2.bf16.msra.mxu0 0
    %3014 = vmatprep.mubr.bf16.mxu0 0
    %3015 = vmatmul.mubr.bf16.gmra.mxu0 %v2977
    %v3016 = vpop.f32.mrf.mxu0
    %v3017 = vadd.f32 0.0, %v3016
    %v3018 = vpop.f32.mrf.mxu0
    %v3019 = vpop.f32.mrf.mxu0
    %v3020 = vpop.f32.mrf.mxu0
    %3021 = vdwg.mxu0
    %3024 = vrot.lane.b32.xlu0 %v2511, 12
    %v3025 = vpop.permute.xlu0 %3024
    %3026 = vrot.lane.b32.xlu0 %v2559, 12
    %v3027 = vpop.permute.xlu0 %3026
    %3032 = vrot.lane.b32.xlu0 %v2741, 24
    %v3033 = vpop.permute.xlu0 %3032
    %3034 = vrot.lane.b32.xlu0 %v2793, 24
    %v3035 = vpop.permute.xlu0 %3034
    %3040 = vrot.lane.b32.xlu0 %v2969, 36
    %v3041 = vpop.permute.xlu0 %3040
    %3042 = vrot.lane.b32.xlu0 %v3017, 36
    %v3043 = vpop.permute.xlu0 %3042
    %v3046 = vsel %vm589, %v2287, %v3025
    %v3047 = vsel %vm589, %v2335, %v3027
    %v3048 = vsel %vm1553, %v3046, %v3033
    %v3049 = vsel %vm1553, %v3047, %v3035
    %v3050 = vsel %vm1556, %v3048, %v3041
    %v3051 = vsel %vm1556, %v3049, %v3043
    %v3052 = vpack.c.bf16 %v3051, %v3050
    %v3053 = vld [vmem:[%s45] sm:$0xf]
    %v3054 = vld [vmem:[%s45 + $0x4] sm:$0xf]
    %v3055 = vld [vmem:[%s45 + $0x8] sm:$0xf]
    %v3056 = vld [vmem:[%s45 + $0xc] sm:$0xf]
    %v3057 = vld [vmem:[%s45 + $0x10] sm:$0xf]
    %v3058 = vld [vmem:[%s45 + $0x14] sm:$0xf]
    %v3059 = vld [vmem:[%s47] sm:$0x1]
    %v3061 = vlaneseq
    %v3062 = vshrl.u32 %v3061, 7
    %v3063 = vsub.s32 0, %v3062
    %v3064 = vrot.slane %v3059, %v3063
    %v3072 = vunpack.c.l.b16 %v3053
    %v3073 = vunpack.c.l.b16 %v3054
    %v3074 = vunpack.c.l.b16 %v3055
    %v3075 = vunpack.c.l.b16 %v3056
    %v3076 = vunpack.c.l.b16 %v3057
    %v3077 = vunpack.c.l.b16 %v3058
    %v3078 = vpack.c.b16 %v3073, %v3072
    %v3079 = vpack.c.b16 %v3075, %v3074
    %v3080 = vpack.c.b16 %v3077, %v3076
    %v3085 = vsel %vm537, %v3052, 0
    %3087 = vmatprep.subr.bf16.mxu0 0
    %3088 = vmatpush1.bf16.msra.mxu0 0
    %3089 = vmatprep.subr.bf16.mxu0 0
    %3090 = vmatpush1.bf16.msra.mxu0 0
    %3091 = vmatprep.subr.bf16.mxu0 0
    %3092 = vmatpush1.bf16.msra.mxu0 0
    %3093 = vmatprep.subr.bf16.mxu0 0
    %3094 = vmatpush1.bf16.msra.mxu0 0
    %3095 = vmatprep.subr.bf16.mxu0 0
    %3096 = vmatpush1.bf16.msra.mxu0 0
    %3097 = vmatprep.subr.bf16.mxu0 0
    %3098 = vmatpush1.bf16.msra.mxu0 %v3080
    %3099 = vmatprep.subr.bf16.mxu0 0
    %3100 = vmatpush1.bf16.msra.mxu0 %v3079
    %3101 = vmatprep.subr.bf16.mxu0 0
    %3102 = vmatpush1.bf16.msra.mxu0 %v3078
    %3103 = vmatprep.subr.bf16.mxu0 0
    %3104 = vmatpush2.bf16.msra.mxu0 0
    %3105 = vmatprep.subr.bf16.mxu0 0
    %3106 = vmatpush2.bf16.msra.mxu0 0
    %3107 = vmatprep.subr.bf16.mxu0 0
    %3108 = vmatpush2.bf16.msra.mxu0 0
    %3109 = vmatprep.subr.bf16.mxu0 0
    %3110 = vmatpush2.bf16.msra.mxu0 0
    %3111 = vmatprep.subr.bf16.mxu0 0
    %3112 = vmatpush2.bf16.msra.mxu0 0
    %3113 = vmatprep.subr.bf16.mxu0 0
    %3114 = vmatpush2.bf16.msra.mxu0 0
    %3115 = vmatprep.subr.bf16.mxu0 0
    %3116 = vmatpush2.bf16.msra.mxu0 0
    %3117 = vmatprep.subr.bf16.mxu0 0
    %3118 = vmatpush2.bf16.msra.mxu0 0
    %3119 = vmatprep.mubr.bf16.mxu0 0
    %3120 = vmatmul.mubr.bf16.gmra.mxu0 %v3085
    %v3121 = vpop.f32.mrf.mxu0
    %v3122 = vadd.f32 %v3064, %v3121
    %v3123 = vpop.f32.mrf.mxu0
    %v3124 = vpop.f32.mrf.mxu0
    %v3125 = vadd.f32 %v3064, %v3124
    %v3126 = vpop.f32.mrf.mxu0
    %3127 = vdwg.mxu0
    %v3128 = vld [vmem:[%s49] sm:$0x1]
    %v3129 = vld [vmem:[%s51] sm:$0x1]
    %v3130 = vadd.f32 %v2019, %v3122
    %v3131 = vadd.f32 %v2020, %v3125
    %v3132 = vsel %vm537, %v3130, 0.0
    %3133 = vadd.xlane.f32.xlu0 %v3132
    %v3134 = vpop.xlane.xlu0 %3133
    %v3135 = vsel %vm537, %v3131, 0.0
    %3136 = vadd.xlane.f32.xlu0 %v3135
    %v3137 = vpop.xlane.xlu0 %3136
    %v3138 = vmul.f32 %v3134, %v1645
    %v3139 = vmul.f32 %v3137, %v1645
    %v3140 = vsub.f32 %v3130, %v3138
    %v3141 = vsub.f32 %v3131, %v3139
    %v3142 = vmul.f32 %v3140, %v3140
    %v3143 = vmul.f32 %v3141, %v3141
    %v3144 = vsel %vm537, %v3142, 0.0
    %3145 = vadd.xlane.f32.xlu0 %v3144
    %v3146 = vpop.xlane.xlu0 %3145
    %v3147 = vsel %vm537, %v3143, 0.0
    %3148 = vadd.xlane.f32.xlu0 %v3147
    %v3149 = vpop.xlane.xlu0 %3148
    %v3150 = vmul.f32 %v3146, %v1645
    %v3151 = vmul.f32 %v3149, %v1645
    %v3152 = vadd.f32 %v3150, 1e-05
    %v3153 = vadd.f32 %v3151, 1e-05
    %v3154 = vrsqrt.pop %v3152
    %v3155 = vrsqrt.pop %v3153
    %v3156 = vmul.f32 %v3140, %v3154
    %v3157 = vmul.f32 %v3141, %v3155
    %v3159 = vlaneseq
    %v3160 = vshrl.u32 %v3159, 7
    %v3161 = vsub.s32 0, %v3160
    %v3162 = vrot.slane %v3128, %v3161
    %v3164 = vmul.f32 %v3156, %v3162
    %v3165 = vmul.f32 %v3157, %v3162
    %v3167 = vlaneseq
    %v3168 = vshrl.u32 %v3167, 7
    %v3169 = vsub.s32 0, %v3168
    %v3170 = vrot.slane %v3129, %v3169
    %v3172 = vadd.f32 %v3164, %v3170
    %v3173 = vadd.f32 %v3165, %v3170
    %v3174 = vpack.c.bf16 %v3173, %v3172
    %v3175 = vld [vmem:[%s53] sm:$0xff]
    %v3176 = vld [vmem:[%s53 + $0x8] sm:$0xff]
    %v3177 = vld [vmem:[%s53 + $0x10] sm:$0xff]
    %v3178 = vld [vmem:[%s53 + $0x18] sm:$0xff]
    %v3179 = vld [vmem:[%s53 + $0x20] sm:$0xff]
    %v3180 = vld [vmem:[%s53 + $0x28] sm:$0xff]
    %v3181 = vld [vmem:[%s55] sm:$0x3]
    %v3183 = vlaneseq
    %v3184 = vshrl.u32 %v3183, 7
    %v3185 = vsub.s32 0, %v3184
    %v3186 = vrot.slane %v3181, %v3185
    %v3187 = vlaneseq
    %v3188 = vshrl.u32 %v3187, 7
    %v3189 = vsub.s32 1, %v3188
    %v3190 = vrot.slane %v3181, %v3189
    %v3199 = vunpack.c.l.b16 %v3175
    %v3200 = vunpack.c.h.b16 %v3175
    %v3201 = vunpack.c.l.b16 %v3176
    %v3202 = vunpack.c.h.b16 %v3176
    %v3203 = vunpack.c.l.b16 %v3177
    %v3204 = vunpack.c.h.b16 %v3177
    %v3205 = vunpack.c.l.b16 %v3178
    %v3206 = vunpack.c.h.b16 %v3178
    %v3207 = vunpack.c.l.b16 %v3179
    %v3208 = vunpack.c.h.b16 %v3179
    %v3209 = vunpack.c.l.b16 %v3180
    %v3210 = vunpack.c.h.b16 %v3180
    %v3211 = vpack.c.b16 %v3201, %v3199
    %v3212 = vpack.c.b16 %v3202, %v3200
    %v3213 = vpack.c.b16 %v3205, %v3203
    %v3214 = vpack.c.b16 %v3206, %v3204
    %v3215 = vpack.c.b16 %v3209, %v3207
    %v3216 = vpack.c.b16 %v3210, %v3208
    %v3224 = vsel %vm537, %v3174, 0
    %3226 = vmatprep.subr.bf16.mxu0 0
    %3227 = vmatpush1.bf16.msra.mxu0 0
    %3228 = vmatprep.subr.bf16.mxu0 0
    %3229 = vmatpush1.bf16.msra.mxu0 0
    %3230 = vmatprep.subr.bf16.mxu0 0
    %3231 = vmatpush1.bf16.msra.mxu0 0
    %3232 = vmatprep.subr.bf16.mxu0 0
    %3233 = vmatpush1.bf16.msra.mxu0 0
    %3234 = vmatprep.subr.bf16.mxu0 0
    %3235 = vmatpush1.bf16.msra.mxu0 0
    %3236 = vmatprep.subr.bf16.mxu0 %v3216
    %3237 = vmatpush1.bf16.msra.mxu0 %v3215
    %3238 = vmatprep.subr.bf16.mxu0 %v3214
    %3239 = vmatpush1.bf16.msra.mxu0 %v3213
    %3240 = vmatprep.subr.bf16.mxu0 %v3212
    %3241 = vmatpush1.bf16.msra.mxu0 %v3211
    %3242 = vmatprep.subr.bf16.mxu0 0
    %3243 = vmatpush2.bf16.msra.mxu0 0
    %3244 = vmatprep.subr.bf16.mxu0 0
    %3245 = vmatpush2.bf16.msra.mxu0 0
    %3246 = vmatprep.subr.bf16.mxu0 0
    %3247 = vmatpush2.bf16.msra.mxu0 0
    %3248 = vmatprep.subr.bf16.mxu0 0
    %3249 = vmatpush2.bf16.msra.mxu0 0
    %3250 = vmatprep.subr.bf16.mxu0 0
    %3251 = vmatpush2.bf16.msra.mxu0 0
    %3252 = vmatprep.subr.bf16.mxu0 0
    %3253 = vmatpush2.bf16.msra.mxu0 0
    %3254 = vmatprep.subr.bf16.mxu0 0
    %3255 = vmatpush2.bf16.msra.mxu0 0
    %3256 = vmatprep.subr.bf16.mxu0 0
    %3257 = vmatpush2.bf16.msra.mxu0 0
    %3258 = vmatprep.mubr.bf16.mxu0 0
    %3259 = vmatmul.mubr.bf16.gmra.mxu0 %v3224
    %v3260 = vpop.f32.mrf.mxu0
    %v3261 = vadd.f32 %v3186, %v3260
    %v3262 = vpop.f32.mrf.mxu0
    %v3263 = vadd.f32 %v3190, %v3262
    %v3264 = vpop.f32.mrf.mxu0
    %v3265 = vadd.f32 %v3186, %v3264
    %v3266 = vpop.f32.mrf.mxu0
    %v3267 = vadd.f32 %v3190, %v3266
    %3268 = vdwg.mxu0
    %v3269 = vmax.f32 %v3261, 0.0
    %v3270 = vmax.f32 %v3263, 0.0
    %v3271 = vmax.f32 %v3265, 0.0
    %v3272 = vmax.f32 %v3267, 0.0
    %v3273 = vpack.c.bf16 %v3271, %v3269
    %v3274 = vpack.c.bf16 %v3272, %v3270
    %v3275 = vld [vmem:[%s57] sm:$0xf]
    %v3276 = vld [vmem:[%s57 + $0x4] sm:$0xf]
    %v3277 = vld [vmem:[%s57 + $0x8] sm:$0xf]
    %v3278 = vld [vmem:[%s57 + $0xc] sm:$0xf]
    %v3279 = vld [vmem:[%s57 + $0x10] sm:$0xf]
    %v3280 = vld [vmem:[%s57 + $0x14] sm:$0xf]
    %v3281 = vld [vmem:[%s57 + $0x18] sm:$0xf]
    %v3282 = vld [vmem:[%s57 + $0x1c] sm:$0xf]
    %v3283 = vld [vmem:[%s57 + $0x20] sm:$0xf]
    %v3284 = vld [vmem:[%s57 + $0x24] sm:$0xf]
    %v3285 = vld [vmem:[%s57 + $0x28] sm:$0xf]
    %v3286 = vld [vmem:[%s57 + $0x2c] sm:$0xf]
    %v3287 = vld [vmem:[%s57 + $0x30] sm:$0xf]
    %v3288 = vld [vmem:[%s57 + $0x34] sm:$0xf]
    %v3289 = vld [vmem:[%s57 + $0x38] sm:$0xf]
    %v3290 = vld [vmem:[%s57 + $0x3c] sm:$0xf]
    %v3291 = vld [vmem:[%s57 + $0x40] sm:$0xf]
    %v3292 = vld [vmem:[%s57 + $0x44] sm:$0xf]
    %v3293 = vld [vmem:[%s57 + $0x48] sm:$0xf]
    %v3294 = vld [vmem:[%s57 + $0x4c] sm:$0xf]
    %v3295 = vld [vmem:[%s57 + $0x50] sm:$0xf]
    %v3296 = vld [vmem:[%s57 + $0x54] sm:$0xf]
    %v3297 = vld [vmem:[%s57 + $0x58] sm:$0xf]
    %v3298 = vld [vmem:[%s57 + $0x5c] sm:$0xf]
    %v3299 = vld [vmem:[%s59] sm:$0x1]
    %v3301 = vlaneseq
    %v3302 = vshrl.u32 %v3301, 7
    %v3303 = vsub.s32 0, %v3302
    %v3304 = vrot.slane %v3299, %v3303
    %v3330 = vunpack.c.l.b16 %v3275
    %v3331 = vunpack.c.l.b16 %v3276
    %v3332 = vunpack.c.l.b16 %v3277
    %v3333 = vunpack.c.l.b16 %v3278
    %v3334 = vunpack.c.l.b16 %v3279
    %v3335 = vunpack.c.l.b16 %v3280
    %v3336 = vunpack.c.l.b16 %v3281
    %v3337 = vunpack.c.l.b16 %v3282
    %v3338 = vunpack.c.l.b16 %v3283
    %v3339 = vunpack.c.l.b16 %v3284
    %v3340 = vunpack.c.l.b16 %v3285
    %v3341 = vunpack.c.l.b16 %v3286
    %v3342 = vunpack.c.l.b16 %v3287
    %v3343 = vunpack.c.l.b16 %v3288
    %v3344 = vunpack.c.l.b16 %v3289
    %v3345 = vunpack.c.l.b16 %v3290
    %v3346 = vunpack.c.l.b16 %v3291
    %v3347 = vunpack.c.l.b16 %v3292
    %v3348 = vunpack.c.l.b16 %v3293
    %v3349 = vunpack.c.l.b16 %v3294
    %v3350 = vunpack.c.l.b16 %v3295
    %v3351 = vunpack.c.l.b16 %v3296
    %v3352 = vunpack.c.l.b16 %v3297
    %v3353 = vunpack.c.l.b16 %v3298
    %v3354 = vpack.c.b16 %v3331, %v3330
    %v3355 = vpack.c.b16 %v3333, %v3332
    %v3356 = vpack.c.b16 %v3335, %v3334
    %v3357 = vpack.c.b16 %v3337, %v3336
    %v3358 = vpack.c.b16 %v3339, %v3338
    %v3359 = vpack.c.b16 %v3341, %v3340
    %v3360 = vpack.c.b16 %v3343, %v3342
    %v3361 = vpack.c.b16 %v3345, %v3344
    %v3362 = vpack.c.b16 %v3347, %v3346
    %v3363 = vpack.c.b16 %v3349, %v3348
    %v3364 = vpack.c.b16 %v3351, %v3350
    %v3365 = vpack.c.b16 %v3353, %v3352
    %v3379 = vsel %vm360, %v3274, 0
    %3381 = vmatprep.subr.bf16.mxu0 0
    %3382 = vmatpush1.bf16.msra.mxu0 %v3361
    %3383 = vmatprep.subr.bf16.mxu0 0
    %3384 = vmatpush1.bf16.msra.mxu0 %v3360
    %3385 = vmatprep.subr.bf16.mxu0 0
    %3386 = vmatpush1.bf16.msra.mxu0 %v3359
    %3387 = vmatprep.subr.bf16.mxu0 0
    %3388 = vmatpush1.bf16.msra.mxu0 %v3358
    %3389 = vmatprep.subr.bf16.mxu0 0
    %3390 = vmatpush1.bf16.msra.mxu0 %v3357
    %3391 = vmatprep.subr.bf16.mxu0 0
    %3392 = vmatpush1.bf16.msra.mxu0 %v3356
    %3393 = vmatprep.subr.bf16.mxu0 0
    %3394 = vmatpush1.bf16.msra.mxu0 %v3355
    %3395 = vmatprep.subr.bf16.mxu0 0
    %3396 = vmatpush1.bf16.msra.mxu0 %v3354
    %3397 = vmatprep.subr.bf16.mxu0 0
    %3398 = vmatpush2.bf16.msra.mxu0 0
    %3399 = vmatprep.subr.bf16.mxu0 0
    %3400 = vmatpush2.bf16.msra.mxu0 0
    %3401 = vmatprep.subr.bf16.mxu0 0
    %3402 = vmatpush2.bf16.msra.mxu0 0
    %3403 = vmatprep.subr.bf16.mxu0 0
    %3404 = vmatpush2.bf16.msra.mxu0 0
    %3405 = vmatprep.subr.bf16.mxu0 0
    %3406 = vmatpush2.bf16.msra.mxu0 %v3365
    %3407 = vmatprep.subr.bf16.mxu0 0
    %3408 = vmatpush2.bf16.msra.mxu0 %v3364
    %3409 = vmatprep.subr.bf16.mxu0 0
    %3410 = vmatpush2.bf16.msra.mxu0 %v3363
    %3411 = vmatprep.subr.bf16.mxu0 0
    %3412 = vmatpush2.bf16.msra.mxu0 %v3362
    %3413 = vmatprep.mubr.bf16.mxu0 %v3379
    %3414 = vmatmul.mubr.bf16.gmra.mxu0 %v3273
    %v3415 = vpop.f32.mrf.mxu0
    %v3416 = vadd.f32 %v3304, %v3415
    %v3417 = vpop.f32.mrf.mxu0
    %v3418 = vpop.f32.mrf.mxu0
    %v3419 = vadd.f32 %v3304, %v3418
    %v3420 = vpop.f32.mrf.mxu0
    %3421 = vdwg.mxu0
    %v3422 = vld [vmem:[#allocation18] sm:$0x1]
    %v3423 = vld [vmem:[#allocation19] sm:$0x1]
    %v3424 = vadd.f32 %v3172, %v3416
    %v3425 = vadd.f32 %v3173, %v3419
    %v3426 = vsel %vm537, %v3424, 0.0
    %3427 = vadd.xlane.f32.xlu0 %v3426
    %v3428 = vpop.xlane.xlu0 %3427
    %v3429 = vsel %vm537, %v3425, 0.0
    %3430 = vadd.xlane.f32.xlu0 %v3429
    %v3431 = vpop.xlane.xlu0 %3430
    %v3432 = vmul.f32 %v3428, %v1645
    %v3433 = vmul.f32 %v3431, %v1645
    %v3434 = vsub.f32 %v3424, %v3432
    %v3435 = vsub.f32 %v3425, %v3433
    %v3436 = vmul.f32 %v3434, %v3434
    %v3437 = vmul.f32 %v3435, %v3435
    %v3438 = vsel %vm537, %v3436, 0.0
    %3439 = vadd.xlane.f32.xlu0 %v3438
    %v3440 = vpop.xlane.xlu0 %3439
    %v3441 = vsel %vm537, %v3437, 0.0
    %3442 = vadd.xlane.f32.xlu0 %v3441
    %v3443 = vpop.xlane.xlu0 %3442
    %v3444 = vmul.f32 %v3440, %v1645
    %v3445 = vmul.f32 %v3443, %v1645
    %v3446 = vadd.f32 %v3444, 1e-05
    %v3447 = vadd.f32 %v3445, 1e-05
    %v3448 = vrsqrt.pop %v3446
    %v3449 = vrsqrt.pop %v3447
    %v3450 = vmul.f32 %v3434, %v3448
    %v3451 = vmul.f32 %v3435, %v3449
    %v3453 = vlaneseq
    %v3454 = vshrl.u32 %v3453, 7
    %v3455 = vsub.s32 0, %v3454
    %v3456 = vrot.slane %v3422, %v3455
    %v3458 = vmul.f32 %v3450, %v3456
    %v3459 = vmul.f32 %v3451, %v3456
    %v3461 = vlaneseq
    %v3462 = vshrl.u32 %v3461, 7
    %v3463 = vsub.s32 0, %v3462
    %v3464 = vrot.slane %v3423, %v3463
    %v3466 = vadd.f32 %v3458, %v3464
    %v3467 = vadd.f32 %v3459, %v3464
    %3468 = vst.msk [vmem:[#allocation22] sm:$0xff] %vm537, %v3466
    %3469 = vst.msk [vmem:[#allocation22 + $0x8] sm:$0xff] %vm537, %v3467
    %v3470 = vpack.c.bf16 %v3467, %v3466
    %v3471 = vld [vmem:[%s305] sm:$0xf]
    %v3472 = vld [vmem:[%s305 + $0x4] sm:$0xf]
    %v3473 = vld [vmem:[%s305 + $0x8] sm:$0xf]
    %v3474 = vld [vmem:[%s305 + $0xc] sm:$0xf]
    %v3475 = vld [vmem:[%s305 + $0x10] sm:$0xf]
    %v3476 = vld [vmem:[%s305 + $0x14] sm:$0xf]
    %v3477 = vld [vmem:[%s310] sm:$0x1]
    %v3479 = vlaneseq
    %v3480 = vshrl.u32 %v3479, 7
    %v3481 = vsub.s32 0, %v3480
    %v3482 = vrot.slane %v3477, %v3481
    %v3490 = vunpack.c.l.b16 %v3471
    %v3491 = vunpack.c.l.b16 %v3472
    %v3492 = vunpack.c.l.b16 %v3473
    %v3493 = vunpack.c.l.b16 %v3474
    %v3494 = vunpack.c.l.b16 %v3475
    %v3495 = vunpack.c.l.b16 %v3476
    %v3496 = vpack.c.b16 %v3491, %v3490
    %v3497 = vpack.c.b16 %v3493, %v3492
    %v3498 = vpack.c.b16 %v3495, %v3494
    %v3503 = vsel %vm537, %v3470, 0
    %3505 = vmatprep.subr.bf16.mxu0 0
    %3506 = vmatpush1.bf16.msra.mxu0 0
    %3507 = vmatprep.subr.bf16.mxu0 0
    %3508 = vmatpush1.bf16.msra.mxu0 0
    %3509 = vmatprep.subr.bf16.mxu0 0
    %3510 = vmatpush1.bf16.msra.mxu0 0
    %3511 = vmatprep.subr.bf16.mxu0 0
    %3512 = vmatpush1.bf16.msra.mxu0 0
    %3513 = vmatprep.subr.bf16.mxu0 0
    %3514 = vmatpush1.bf16.msra.mxu0 0
    %3515 = vmatprep.subr.bf16.mxu0 0
    %3516 = vmatpush1.bf16.msra.mxu0 %v3498
    %3517 = vmatprep.subr.bf16.mxu0 0
    %3518 = vmatpush1.bf16.msra.mxu0 %v3497
    %3519 = vmatprep.subr.bf16.mxu0 0
    %3520 = vmatpush1.bf16.msra.mxu0 %v3496
    %3521 = vmatprep.subr.bf16.mxu0 0
    %3522 = vmatpush2.bf16.msra.mxu0 0
    %3523 = vmatprep.subr.bf16.mxu0 0
    %3524 = vmatpush2.bf16.msra.mxu0 0
    %3525 = vmatprep.subr.bf16.mxu0 0
    %3526 = vmatpush2.bf16.msra.mxu0 0
    %3527 = vmatprep.subr.bf16.mxu0 0
    %3528 = vmatpush2.bf16.msra.mxu0 0
    %3529 = vmatprep.subr.bf16.mxu0 0
    %3530 = vmatpush2.bf16.msra.mxu0 0
    %3531 = vmatprep.subr.bf16.mxu0 0
    %3532 = vmatpush2.bf16.msra.mxu0 0
    %3533 = vmatprep.subr.bf16.mxu0 0
    %3534 = vmatpush2.bf16.msra.mxu0 0
    %3535 = vmatprep.subr.bf16.mxu0 0
    %3536 = vmatpush2.bf16.msra.mxu0 0
    %3537 = vmatprep.mubr.bf16.mxu0 0
    %3538 = vmatmul.mubr.bf16.gmra.mxu0 %v3503
    %v3539 = vpop.f32.mrf.mxu0
    %v3540 = vadd.f32 %v3482, %v3539
    %v3541 = vpop.f32.mrf.mxu0
    %v3542 = vpop.f32.mrf.mxu0
    %v3543 = vadd.f32 %v3482, %v3542
    %v3544 = vpop.f32.mrf.mxu0
    %3545 = vdwg.mxu0
    %3546 = vst.msk [vmem:[#allocation24] sm:$0xff] %vm360, %v3540
    %3547 = vst.msk [vmem:[#allocation24 + $0x8] sm:$0xff] %vm360, %v3543
    // Predicated region
    $region174: #{semcom_forward.1} parent=1 // pred_check
      _
    $region175: #{semcom_forward.1} parent=1 // pred_check_branch
      %3549 = sbr.rel (0) target = $region177
    $region176: #{semcom_forward.1} parent=1 // pred_region
      %s3551 = ssub.s32 256, 256
      %3552 = vsyncadd [#allocation6], %s3551
      %s3553 = sshll.u32 [#allocation21], 4
      %s3554 = int_to_ptr.vmem [resolvable:$true] %s3553
      %3559 = dma.vmem_to_hbm [thread:$0]  %s3554, 256, %s69, [#allocation6], 128, 128, 8
    $region177: #{semcom_forward.1} parent=1 // pred_fallthru
      _
    // Predicated region
    $region178: #{semcom_forward.1} parent=1 // pred_check
      _
    $region179: #{semcom_forward.1} parent=1 // pred_check_branch
      %3561 = sbr.rel (0) target = $region181
    $region180: #{semcom_forward.1} parent=1 // pred_region
      %s3563 = ssub.s32 256, 256
      %3564 = vsyncadd [#allocation23], %s3563
      %s3565 = sshll.u32 [#allocation22], 4
      %s3566 = int_to_ptr.vmem [resolvable:$true] %s3565
      %3571 = dma.vmem_to_hbm [thread:$0]  %s3566, 256, %s71, [#allocation23], 128, 128, 8
    $region181: #{semcom_forward.1} parent=1 // pred_fallthru
      _
    // Predicated region
    $region182: #{semcom_forward.1} parent=1 // pred_check
      _
    $region183: #{semcom_forward.1} parent=1 // pred_check_branch
      %3573 = sbr.rel (0) target = $region185
    $region184: #{semcom_forward.1} parent=1 // pred_region
      %s3575 = ssub.s32 256, 256
      %3576 = vsyncadd [#allocation23], %s3575
      %s3577 = sshll.u32 [#allocation24], 4
      %s3578 = int_to_ptr.vmem [resolvable:$true] %s3577
      %3583 = dma.vmem_to_hbm [thread:$0]  %s3578, 256, %s73, [#allocation23], 128, 128, 8
    $region185: #{semcom_forward.1} parent=1 // pred_fallthru
      _
    // Predicated region
    $region186: #{semcom_forward.1} parent=1 // pred_check
      _
    $region187: #{semcom_forward.1} parent=1 // pred_check_branch
      %3585 = sbr.rel (0) target = $region189
    $region188: #{semcom_forward.1} parent=1 // pred_region
      %3586 = dma.done [#allocation6], 256
    $region189: #{semcom_forward.1} parent=1 // pred_fallthru
      _
    // Predicated region
    $region190: #{semcom_forward.1} parent=1 // pred_check
      _
    $region191: #{semcom_forward.1} parent=1 // pred_check_branch
      %3588 = sbr.rel (0) target = $region193
    $region192: #{semcom_forward.1} parent=1 // pred_region
      %3589 = dma.done [#allocation23], 256
    $region193: #{semcom_forward.1} parent=1 // pred_fallthru
      _
    // Predicated region
    $region194: #{semcom_forward.1} parent=1 // pred_check
      _
    $region195: #{semcom_forward.1} parent=1 // pred_check_branch
      %3591 = sbr.rel (0) target = $region197
    $region196: #{semcom_forward.1} parent=1 // pred_region
      %3592 = dma.done [#allocation23], 256
    $region197: #{semcom_forward.1} parent=1 // pred_fallthru
      _
    %3593 = vsyncpa [#allocation5], 1
    %3594 = vsyncpa [#allocation8], 1
    %3595 = vsyncpa [#allocation11], 1
    %3596 = vsyncpa [#allocation14], 1
    %3597 = vsyncpa [#allocation17], 1
    %3598 = vsyncpa [#allocation20], 1
    %3599 = vsyncpa [#allocation6], 1
    %3600 = vsyncpa [#allocation23], 1

</llo_original>
